<compile_context>
chip_gen: v6e
topology: v6e:2x2x1
jax: 0.10.0
libtpu: 0.0.40
codegen_flags: <defaults>
</compile_context>

<pallas_src>
import jax
import jax.numpy as jnp
from jax.experimental import pallas as pl
from jax.experimental.pallas import tpu as pltpu

_BN_EPS = 1e-5
_PLANES = 64          # block width (planes=64 in the PyTorch module)
_CA = 4               # max raw in-channels (3) + 1 constant "ones" channel (folded bias)
_K1 = 9 * _CA         # channel count of the im2col'd fused (1x1 + conv1) input


# ----------------------------------------------------------------------------
# Kernel: one (batch, row-tile) step — both streams, both conv layers, concat.
# ----------------------------------------------------------------------------
def _ccunet_fused_kernel(x_ref, w1_ref, w2_ref, bn_ref, o_ref, s2_ref):
    # x_ref : (2, 1, 1, (tile_h+2)*(W+2), 36) bf16  im2col'd + haloed input tiles
    # w1_ref: (2, 36, 64)                     bf16  fused 1x1+conv1 weights
    # w2_ref: (2, 3, 192, 64)                 bf16  conv2 weights, (kw, cin) merged
    # bn_ref: (2, 4, 64)                      f32   bn1_scale, bn1_shift, bn2_scale, bn2_shift
    # o_ref : (1, tile_h, W, 128)             f32   lane-dense concat(rgb, dis) output
    # s2_ref: (tile_h+2, W, 192)              bf16  column-im2col'd intermediate (VMEM)
    _, tile_h, W, _ = o_ref.shape
    rows = tile_h + 2
    wcols = W + 2
    t = pl.program_id(1)
    H = pl.num_programs(1) * tile_h

    # Intermediate rows/cols that fall outside the image are the second conv's
    # zero padding -> force them to exactly zero (not relu(bn1(0))).
    i_row = jax.lax.broadcasted_iota(jnp.int32, (rows, 1, 1), 0)
    g_row = t * tile_h - 1 + i_row
    row_mask = ((g_row >= 0) & (g_row < H)).astype(jnp.float32)
    i_col = jax.lax.broadcasted_iota(jnp.int32, (1, wcols, 1), 1)
    col_mask = ((i_col >= 1) & (i_col <= W)).astype(jnp.float32)
    pad_mask = row_mask * col_mask                         # (rows, wcols, 1)

    outs = []
    for s in range(2):                                     # unrolled: 0 = rgb, 1 = dis
        bns = bn_ref[s]                                    # (4, 64) f32

        # ---- layer 1: folded (1x1 conv + bias) + conv1 == ONE K=36 matmul ----
        a1 = jnp.dot(x_ref[s, 0, 0], w1_ref[s],
                     preferred_element_type=jnp.float32)   # (rows*wcols, 64) f32
        h = jnp.maximum(a1 * bns[0:1, :] + bns[1:2, :], 0.0)       # BN1 + ReLU (f32)
        hp = h.reshape(rows, wcols, _PLANES) * pad_mask            # zero halo / padding

        # ---- column-im2col of the intermediate -> bf16 VMEM scratch (K = 192)
        s2_ref[...] = jnp.concatenate(
            [hp[:, 0:W, :], hp[:, 1:W + 1, :], hp[:, 2:W + 2, :]],
            axis=-1).astype(s2_ref.dtype)

        # ---- layer 2: 3 row-tap matmuls with K = 3*64 = 192 ----
        acc = jnp.zeros((tile_h * W, _PLANES), jnp.float32)
        for kh in range(3):
            a_kh = s2_ref[kh:kh + tile_h].reshape(tile_h * W, 3 * _PLANES)
            acc = acc + jnp.dot(a_kh, w2_ref[s, kh],
                                preferred_element_type=jnp.float32)
        y = jnp.maximum(acc * bns[2:3, :] + bns[3:4, :], 0.0)      # BN2 + ReLU (f32)
        outs.append(y.reshape(tile_h, W, _PLANES))

    # One lane-dense 128-channel store; absorbs torch.cat over channels.
    o_ref[0] = jnp.concatenate(outs, axis=-1)


# ----------------------------------------------------------------------------
# Wrapper-side preparation (plain JAX / XLA; all cheap relative to the kernel)
# ----------------------------------------------------------------------------
def _pick_tile_h(H):
    # Cap the row tile so (in-tile + out-tile + scratch) stays a few MB, which
    # fits the scoped VMEM budget on v7x (64 MiB physical) as well as v5e/v6e.
    for cand in (32, 16, 8):
        if H % cand == 0 and H // cand >= 2:
            return cand
    return H


def _build_tiles(x_nhwc, tile_h):
    """Augment (+ones, zero-pad to _CA ch), 9-tap im2col, row-haloed tiles."""
    N, H, W, C = x_nhwc.shape
    parts = [x_nhwc, jnp.ones((N, H, W, 1), x_nhwc.dtype)]
    if C + 1 < _CA:
        parts.append(jnp.zeros((N, H, W, _CA - C - 1), x_nhwc.dtype))
    aug = jnp.concatenate(parts, axis=-1)                       # (N,H,W,CA)
    ap = jnp.pad(aug, ((0, 0), (1, 1), (1, 1), (0, 0)))         # conv1 'same' pad
    cols = jnp.concatenate(
        [ap[:, kh:kh + H, kw:kw + W, :] for kh in range(3) for kw in range(3)],
        axis=-1)                                                # (N,H,W,9*CA) im2col
    # Placeholder zero border (1 row / 1 col each side): those positions are
    # recomputed then masked to zero inside the kernel, they just have to exist.
    colsp = jnp.pad(cols, ((0, 0), (1, 1), (1, 1), (0, 0)))     # (N,H+2,W+2,9*CA)
    T = H // tile_h
    idx = jnp.arange(T)[:, None] * tile_h + jnp.arange(tile_h + 2)[None, :]
    tiles = jnp.take(colsp, idx, axis=1)                        # (N,T,tile_h+2,W+2,9*CA)
    return tiles.reshape(N, T, (tile_h + 2) * (W + 2), _K1).astype(jnp.bfloat16)


def _fold_bn(gamma, beta, mean, var):
    scale = gamma / jnp.sqrt(var + _BN_EPS)
    shift = beta - mean * scale
    return scale, shift


def _fold_stream(in_w, in_b, blk):
    """Fold 1x1(+bias) into conv1 (per-tap), merge conv2's (kw,cin) into K."""
    c1 = blk["conv1_w"]                                   # (3,3,64,64) HWIO
    Cr = in_w.shape[0]
    taps = []
    for kh in range(3):
        for kw in range(3):
            wk = c1[kh, kw]                               # (64,64)
            rows = [in_w @ wk, (in_b @ wk)[None, :]]      # raw chans + bias row
            if Cr + 1 < _CA:
                rows.append(jnp.zeros((_CA - Cr - 1, _PLANES), wk.dtype))
            taps.append(jnp.concatenate(rows, axis=0))    # (CA, 64)
    w1 = jnp.concatenate(taps, axis=0)                    # (9*CA, 64)
    w2 = blk["conv2_w"].reshape(3, 3 * _PLANES, _PLANES)  # (3, 192, 64)
    bn = jnp.stack([blk["bn1"][0], blk["bn1"][1],
                    blk["bn2"][0], blk["bn2"][1]], axis=0)  # (4, 64)
    return w1, w2, bn


def _prepare_fused_params(params):
    w1r, w2r, bnr = _fold_stream(params["in1_w"], params["in1_b"], params["rgb_block"])
    w1d, w2d, bnd = _fold_stream(params["in2_w"], params["in2_b"], params["dis_block"])
    return {
        "w1": jnp.stack([w1r, w1d], axis=0).astype(jnp.bfloat16),   # (2, 36, 64)
        "w2": jnp.stack([w2r, w2d], axis=0).astype(jnp.bfloat16),   # (2, 3, 192, 64)
        "bn": jnp.stack([bnr, bnd], axis=0).astype(jnp.float32),    # (2, 4, 64)
    }


# ----------------------------------------------------------------------------
# Parameter construction (deterministic, matches the PyTorch module shapes)
# ----------------------------------------------------------------------------
def _init_block_params(key, inplanes, planes):
    k = jax.random.split(key, 10)
    conv1_w = 0.05 * jax.random.normal(k[0], (3, 3, inplanes, planes), jnp.float32)
    conv2_w = 0.05 * jax.random.normal(k[1], (3, 3, planes, planes), jnp.float32)
    bn1 = _fold_bn(
        1.0 + 0.1 * jax.random.normal(k[2], (planes,), jnp.float32),
        0.1 * jax.random.normal(k[3], (planes,), jnp.float32),
        0.1 * jax.random.normal(k[4], (planes,), jnp.float32),
        jax.random.uniform(k[5], (planes,), jnp.float32, 0.5, 1.5),
    )
    bn2 = _fold_bn(
        1.0 + 0.1 * jax.random.normal(k[6], (planes,), jnp.float32),
        0.1 * jax.random.normal(k[7], (planes,), jnp.float32),
        0.1 * jax.random.normal(k[8], (planes,), jnp.float32),
        jax.random.uniform(k[9], (planes,), jnp.float32, 0.5, 1.5),
    )
    return {"conv1_w": conv1_w, "bn1": bn1, "conv2_w": conv2_w, "bn2": bn2}


def init_ccunet_params(key):
    k = jax.random.split(key, 6)
    return {
        "in1_w": 0.1 * jax.random.normal(k[0], (3, _PLANES), jnp.float32),
        "in1_b": 0.1 * jax.random.normal(k[1], (_PLANES,), jnp.float32),
        "in2_w": 0.1 * jax.random.normal(k[2], (2, _PLANES), jnp.float32),
        "in2_b": 0.1 * jax.random.normal(k[3], (_PLANES,), jnp.float32),
        "rgb_block": _init_block_params(k[4], _PLANES, _PLANES),
        "dis_block": _init_block_params(k[5], _PLANES, _PLANES),
    }


# ----------------------------------------------------------------------------
# Forward pass
# ----------------------------------------------------------------------------
def ccunet_forward(x_rgb_nchw, x_dis_nchw, params):
    x_rgb = jnp.transpose(x_rgb_nchw, (0, 2, 3, 1))   # NCHW -> NHWC
    x_dis = jnp.transpose(x_dis_nchw, (0, 2, 3, 1))
    N, H, W, _ = x_rgb.shape
    tile_h = _pick_tile_h(H)
    T = H // tile_h
    p_in = (tile_h + 2) * (W + 2)

    fused = _prepare_fused_params(params)
    x_tiles = jnp.stack(
        [_build_tiles(x_rgb, tile_h), _build_tiles(x_dis, tile_h)], axis=0)

    out_nhwc = pl.pallas_call(
        _ccunet_fused_kernel,
        out_shape=jax.ShapeDtypeStruct((N, H, W, 2 * _PLANES), jnp.float32),
        grid=(N, T),
        in_specs=[
            pl.BlockSpec((2, 1, 1, p_in, _K1), lambda n, t: (0, n, t, 0, 0)),
            pl.BlockSpec((2, _K1, _PLANES), lambda n, t: (0, 0, 0)),
            pl.BlockSpec((2, 3, 3 * _PLANES, _PLANES), lambda n, t: (0, 0, 0, 0)),
            pl.BlockSpec((2, 4, _PLANES), lambda n, t: (0, 0, 0)),
        ],
        out_specs=pl.BlockSpec((1, tile_h, W, 2 * _PLANES),
                               lambda n, t: (n, t, 0, 0)),
        scratch_shapes=[pltpu.VMEM((tile_h + 2, W, 3 * _PLANES), jnp.bfloat16)],
        compiler_params=pltpu.CompilerParams(
            dimension_semantics=("parallel", "parallel")),
    )(x_tiles, fused["w1"], fused["w2"], fused["bn"])

    # TODO(synk): self.network = smp.UnetPlusPlus(...) not reproduced; return its input.
    return jnp.transpose(out_nhwc, (0, 3, 1, 2))      # NHWC -> NCHW (N, 128, H, W)


# ----------------------------------------------------------------------------
# Pure-JAX f32 reference (PyTorch eval-mode semantics) for validation
# ----------------------------------------------------------------------------
def _reference_forward(x_rgb_nchw, x_dis_nchw, params):
    def conv3x3(x, w):                                   # 'same' zero pad, no bias
        N, H, W, _ = x.shape
        xp = jnp.pad(x, ((0, 0), (1, 1), (1, 1), (0, 0)))
        return sum(jnp.einsum('nhwc,cd->nhwd',
                              xp[:, kh:kh + H, kw:kw + W, :], w[kh, kw])
                   for kh in range(3) for kw in range(3))

    def block(z, blk):
        h = jnp.maximum(conv3x3(z, blk["conv1_w"]) * blk["bn1"][0] + blk["bn1"][1], 0.0)
        return jnp.maximum(conv3x3(h, blk["conv2_w"]) * blk["bn2"][0] + blk["bn2"][1], 0.0)

    xr = jnp.transpose(x_rgb_nchw, (0, 2, 3, 1))
    xd = jnp.transpose(x_dis_nchw, (0, 2, 3, 1))
    fr = block(xr @ params["in1_w"] + params["in1_b"], params["rgb_block"])
    fd = block(xd @ params["in2_w"] + params["in2_b"], params["dis_block"])
    return jnp.transpose(jnp.concatenate([fr, fd], axis=-1), (0, 3, 1, 2))


if __name__ == "__main__":
    key = jax.random.PRNGKey(0)
    k_in, k_p = jax.random.split(key)
    k_rgb, k_dis = jax.random.split(k_in)

    x_rgb = jax.random.normal(k_rgb, (2, 3, 16, 16), jnp.float32)
    x_dis = jax.random.normal(k_dis, (2, 2, 16, 16), jnp.float32)
    params = init_ccunet_params(k_p)

    out = jax.jit(ccunet_forward)(x_rgb, x_dis, params)
    jax.block_until_ready(out)
    assert out.shape == (2, 128, 16, 16), out.shape

    ref = jax.jit(_reference_forward)(x_rgb, x_dis, params)
    max_err = float(jnp.max(jnp.abs(out - ref)))
    assert max_err < 3e-2, f"kernel/reference mismatch: max abs err {max_err}"
    print("KERNEL_OK")
</pallas_src>

<mosaic_0001>
module attributes {stable_mosaic.version = 11 : i64} {
  func.func @_ccunet_fused_kernel(%arg0: i32, %arg1: i32, %arg2: memref<2x1x1x180x36xbf16, #tpu.memory_space<vmem>>, %arg3: memref<2x36x64xbf16, #tpu.memory_space<vmem>>, %arg4: memref<2x3x192x64xbf16, #tpu.memory_space<vmem>>, %arg5: memref<2x4x64xf32, #tpu.memory_space<vmem>>, %arg6: memref<1x8x16x128xf32, #tpu.memory_space<vmem>>, %arg7: memref<10x16x192xbf16, #tpu.memory_space<vmem>>) attributes {dimension_semantics = [#tpu.dimension_semantics<parallel>, #tpu.dimension_semantics<parallel>], iteration_bounds = array<i64: 2, 2>, scalar_prefetch = 0 : i64, scratch_operands = 1 : i64, tpu.core_type = #tpu.core_type<tc>, window_params = [{transform_indices = @transform_0, window_bounds = array<i64: 2, 1, 1, 180, 36>}, {pipeline_mode = #tpu.pipeline_mode<synchronous>, transform_indices = @transform_1, window_bounds = array<i64: 2, 36, 64>}, {pipeline_mode = #tpu.pipeline_mode<synchronous>, transform_indices = @transform_2, window_bounds = array<i64: 2, 3, 192, 64>}, {pipeline_mode = #tpu.pipeline_mode<synchronous>, transform_indices = @transform_3, window_bounds = array<i64: 2, 4, 64>}, {transform_indices = @transform_4, window_bounds = array<i64: 1, 8, 16, 128>}]} {
    %0 = tpu.iota {dimensions = array<i32: 0>} : vector<10x1x1xi32>
    %c8_i32 = arith.constant 8 : i32
    %1 = arith.muli %arg1, %c8_i32 : i32
    %c1_i32 = arith.constant 1 : i32
    %2 = arith.subi %1, %c1_i32 : i32
    %3 = vector.broadcast %2 : i32 to vector<10x1x1xi32>
    %4 = arith.addi %3, %0 : vector<10x1x1xi32>
    %c0_i32 = arith.constant 0 : i32
    %5 = vector.broadcast %c0_i32 : i32 to vector<10x1x1xi32>
    %6 = arith.cmpi sge, %4, %5 : vector<10x1x1xi32>
    %c16_i32 = arith.constant 16 : i32
    %7 = vector.broadcast %c16_i32 : i32 to vector<10x1x1xi32>
    %8 = arith.cmpi slt, %4, %7 : vector<10x1x1xi32>
    %9 = arith.andi %6, %8 : vector<10x1x1xi1>
    %10 = arith.extui %9 : vector<10x1x1xi1> to vector<10x1x1xi32>
    %11 = arith.sitofp %10 : vector<10x1x1xi32> to vector<10x1x1xf32>
    %12 = tpu.iota {dimensions = array<i32: 1>} : vector<1x18x1xi32>
    %c1_i32_0 = arith.constant 1 : i32
    %13 = vector.broadcast %c1_i32_0 : i32 to vector<1x18x1xi32>
    %14 = arith.cmpi sge, %12, %13 : vector<1x18x1xi32>
    %c16_i32_1 = arith.constant 16 : i32
    %15 = vector.broadcast %c16_i32_1 : i32 to vector<1x18x1xi32>
    %16 = arith.cmpi sle, %12, %15 : vector<1x18x1xi32>
    %17 = arith.andi %14, %16 : vector<1x18x1xi1>
    %18 = arith.extui %17 : vector<1x18x1xi1> to vector<1x18x1xi32>
    %19 = arith.sitofp %18 : vector<1x18x1xi32> to vector<1x18x1xf32>
    %20 = vector.broadcast %11 : vector<10x1x1xf32> to vector<10x18x1xf32>
    %21 = vector.broadcast %19 : vector<1x18x1xf32> to vector<10x18x1xf32>
    %22 = arith.mulf %20, %21 : vector<10x18x1xf32>
    %c0 = arith.constant 0 : index
    %c0_2 = arith.constant 0 : index
    %c0_3 = arith.constant 0 : index
    %23 = vector.load %arg5[%c0, %c0_2, %c0_3] : memref<2x4x64xf32, #tpu.memory_space<vmem>>, vector<1x4x64xf32>
    %24 = vector.shape_cast %23 : vector<1x4x64xf32> to vector<4x64xf32>
    %c0_4 = arith.constant 0 : index
    %c0_5 = arith.constant 0 : index
    %c0_6 = arith.constant 0 : index
    %c0_7 = arith.constant 0 : index
    %c0_8 = arith.constant 0 : index
    %25 = vector.load %arg2[%c0_4, %c0_5, %c0_6, %c0_7, %c0_8] : memref<2x1x1x180x36xbf16, #tpu.memory_space<vmem>>, vector<1x1x1x180x36xbf16>
    %26 = vector.shape_cast %25 : vector<1x1x1x180x36xbf16> to vector<180x36xbf16>
    %c0_9 = arith.constant 0 : index
    %c0_10 = arith.constant 0 : index
    %c0_11 = arith.constant 0 : index
    %27 = vector.load %arg3[%c0_9, %c0_10, %c0_11] : memref<2x36x64xbf16, #tpu.memory_space<vmem>>, vector<1x36x64xbf16>
    %28 = vector.shape_cast %27 : vector<1x36x64xbf16> to vector<36x64xbf16>
    %cst = arith.constant dense<0.000000e+00> : vector<180x64xf32>
    %29 = tpu.matmul %26, %28, %cst {dimension_numbers = #tpu.dot_dimension_numbers<[1], [0], [0], [1], [0, 0, 1, 1], [], []>} : vector<180x36xbf16>, vector<36x64xbf16>, vector<180x64xf32> -> vector<180x64xf32>
    %30 = vector.extract_strided_slice %24 {offsets = [0, 0], sizes = [1, 64], strides = [1, 1]} : vector<4x64xf32> to vector<1x64xf32>
    %31 = vector.broadcast %30 : vector<1x64xf32> to vector<180x64xf32>
    %32 = arith.mulf %29, %31 : vector<180x64xf32>
    %33 = vector.extract_strided_slice %24 {offsets = [1, 0], sizes = [1, 64], strides = [1, 1]} : vector<4x64xf32> to vector<1x64xf32>
    %34 = vector.broadcast %33 : vector<1x64xf32> to vector<180x64xf32>
    %35 = arith.addf %32, %34 : vector<180x64xf32>
    %cst_12 = arith.constant 0.000000e+00 : f32
    %36 = vector.broadcast %cst_12 : f32 to vector<180x64xf32>
    %37 = arith.maximumf %35, %36 : vector<180x64xf32>
    %38 = vector.shape_cast %37 : vector<180x64xf32> to vector<10x18x64xf32>
    %39 = vector.broadcast %22 : vector<10x18x1xf32> to vector<10x18x64xf32>
    %40 = arith.mulf %38, %39 : vector<10x18x64xf32>
    %41 = vector.extract_strided_slice %40 {offsets = [0, 0, 0], sizes = [10, 16, 64], strides = [1, 1, 1]} : vector<10x18x64xf32> to vector<10x16x64xf32>
    %42 = vector.extract_strided_slice %40 {offsets = [0, 1, 0], sizes = [10, 16, 64], strides = [1, 1, 1]} : vector<10x18x64xf32> to vector<10x16x64xf32>
    %43 = vector.extract_strided_slice %40 {offsets = [0, 2, 0], sizes = [10, 16, 64], strides = [1, 1, 1]} : vector<10x18x64xf32> to vector<10x16x64xf32>
    %44 = tpu.concatenate %41, %42, %43 in 2 : vector<10x16x64xf32>, vector<10x16x64xf32>, vector<10x16x64xf32> -> vector<10x16x192xf32>
    %45 = arith.truncf %44 : vector<10x16x192xf32> to vector<10x16x192xbf16>
    %c0_13 = arith.constant 0 : index
    %c0_14 = arith.constant 0 : index
    %c0_15 = arith.constant 0 : index
    %46 = vector.load %arg7[%c0_13, %c0_14, %c0_15] : memref<10x16x192xbf16, #tpu.memory_space<vmem>>, vector<10x16x192xbf16>
    tpu.vector_store %arg7[%c0_13, %c0_14, %c0_15], %45 {strides = array<i32>} : memref<10x16x192xbf16, #tpu.memory_space<vmem>>, vector<10x16x192xbf16>,
    %cst_16 = arith.constant 0.000000e+00 : f32
    %47 = vector.broadcast %cst_16 : f32 to vector<128x64xf32>
    %c0_17 = arith.constant 0 : index
    %c0_18 = arith.constant 0 : index
    %c0_19 = arith.constant 0 : index
    %48 = vector.load %arg7[%c0_17, %c0_18, %c0_19] : memref<10x16x192xbf16, #tpu.memory_space<vmem>>, vector<8x16x192xbf16>
    %49 = vector.shape_cast %48 : vector<8x16x192xbf16> to vector<128x192xbf16>
    %c0_20 = arith.constant 0 : index
    %c0_21 = arith.constant 0 : index
    %c0_22 = arith.constant 0 : index
    %c0_23 = arith.constant 0 : index
    %50 = vector.load %arg4[%c0_20, %c0_21, %c0_22, %c0_23] : memref<2x3x192x64xbf16, #tpu.memory_space<vmem>>, vector<1x1x192x64xbf16>
    %51 = vector.shape_cast %50 : vector<1x1x192x64xbf16> to vector<192x64xbf16>
    %cst_24 = arith.constant dense<0.000000e+00> : vector<128x64xf32>
    %52 = tpu.matmul %49, %51, %cst_24 {dimension_numbers = #tpu.dot_dimension_numbers<[1], [0], [0], [1], [0, 0, 1, 1], [], []>} : vector<128x192xbf16>, vector<192x64xbf16>, vector<128x64xf32> -> vector<128x64xf32>
    %53 = arith.addf %47, %52 : vector<128x64xf32>
    %c1 = arith.constant 1 : index
    %c0_25 = arith.constant 0 : index
    %c0_26 = arith.constant 0 : index
    %54 = vector.load %arg7[%c1, %c0_25, %c0_26] : memref<10x16x192xbf16, #tpu.memory_space<vmem>>, vector<8x16x192xbf16>
    %55 = vector.shape_cast %54 : vector<8x16x192xbf16> to vector<128x192xbf16>
    %c0_27 = arith.constant 0 : index
    %c1_28 = arith.constant 1 : index
    %c0_29 = arith.constant 0 : index
    %c0_30 = arith.constant 0 : index
    %56 = vector.load %arg4[%c0_27, %c1_28, %c0_29, %c0_30] : memref<2x3x192x64xbf16, #tpu.memory_space<vmem>>, vector<1x1x192x64xbf16>
    %57 = vector.shape_cast %56 : vector<1x1x192x64xbf16> to vector<192x64xbf16>
    %cst_31 = arith.constant dense<0.000000e+00> : vector<128x64xf32>
    %58 = tpu.matmul %55, %57, %cst_31 {dimension_numbers = #tpu.dot_dimension_numbers<[1], [0], [0], [1], [0, 0, 1, 1], [], []>} : vector<128x192xbf16>, vector<192x64xbf16>, vector<128x64xf32> -> vector<128x64xf32>
    %59 = arith.addf %53, %58 : vector<128x64xf32>
    %c2 = arith.constant 2 : index
    %c0_32 = arith.constant 0 : index
    %c0_33 = arith.constant 0 : index
    %60 = vector.load %arg7[%c2, %c0_32, %c0_33] : memref<10x16x192xbf16, #tpu.memory_space<vmem>>, vector<8x16x192xbf16>
    %61 = vector.shape_cast %60 : vector<8x16x192xbf16> to vector<128x192xbf16>
    %c0_34 = arith.constant 0 : index
    %c2_35 = arith.constant 2 : index
    %c0_36 = arith.constant 0 : index
    %c0_37 = arith.constant 0 : index
    %62 = vector.load %arg4[%c0_34, %c2_35, %c0_36, %c0_37] : memref<2x3x192x64xbf16, #tpu.memory_space<vmem>>, vector<1x1x192x64xbf16>
    %63 = vector.shape_cast %62 : vector<1x1x192x64xbf16> to vector<192x64xbf16>
    %cst_38 = arith.constant dense<0.000000e+00> : vector<128x64xf32>
    %64 = tpu.matmul %61, %63, %cst_38 {dimension_numbers = #tpu.dot_dimension_numbers<[1], [0], [0], [1], [0, 0, 1, 1], [], []>} : vector<128x192xbf16>, vector<192x64xbf16>, vector<128x64xf32> -> vector<128x64xf32>
    %65 = arith.addf %59, %64 : vector<128x64xf32>
    %66 = vector.extract_strided_slice %24 {offsets = [2, 0], sizes = [1, 64], strides = [1, 1]} : vector<4x64xf32> to vector<1x64xf32>
    %67 = vector.broadcast %66 : vector<1x64xf32> to vector<128x64xf32>
    %68 = arith.mulf %65, %67 : vector<128x64xf32>
    %69 = vector.extract_strided_slice %24 {offsets = [3, 0], sizes = [1, 64], strides = [1, 1]} : vector<4x64xf32> to vector<1x64xf32>
    %70 = vector.broadcast %69 : vector<1x64xf32> to vector<128x64xf32>
    %71 = arith.addf %68, %70 : vector<128x64xf32>
    %cst_39 = arith.constant 0.000000e+00 : f32
    %72 = vector.broadcast %cst_39 : f32 to vector<128x64xf32>
    %73 = arith.maximumf %71, %72 : vector<128x64xf32>
    %74 = vector.shape_cast %73 : vector<128x64xf32> to vector<8x16x64xf32>
    %c1_40 = arith.constant 1 : index
    %c0_41 = arith.constant 0 : index
    %c0_42 = arith.constant 0 : index
    %75 = vector.load %arg5[%c1_40, %c0_41, %c0_42] : memref<2x4x64xf32, #tpu.memory_space<vmem>>, vector<1x4x64xf32>
    %76 = vector.shape_cast %75 : vector<1x4x64xf32> to vector<4x64xf32>
    %c1_43 = arith.constant 1 : index
    %c0_44 = arith.constant 0 : index
    %c0_45 = arith.constant 0 : index
    %c0_46 = arith.constant 0 : index
    %c0_47 = arith.constant 0 : index
    %77 = vector.load %arg2[%c1_43, %c0_44, %c0_45, %c0_46, %c0_47] : memref<2x1x1x180x36xbf16, #tpu.memory_space<vmem>>, vector<1x1x1x180x36xbf16>
    %78 = vector.shape_cast %77 : vector<1x1x1x180x36xbf16> to vector<180x36xbf16>
    %c1_48 = arith.constant 1 : index
    %c0_49 = arith.constant 0 : index
    %c0_50 = arith.constant 0 : index
    %79 = vector.load %arg3[%c1_48, %c0_49, %c0_50] : memref<2x36x64xbf16, #tpu.memory_space<vmem>>, vector<1x36x64xbf16>
    %80 = vector.shape_cast %79 : vector<1x36x64xbf16> to vector<36x64xbf16>
    %cst_51 = arith.constant dense<0.000000e+00> : vector<180x64xf32>
    %81 = tpu.matmul %78, %80, %cst_51 {dimension_numbers = #tpu.dot_dimension_numbers<[1], [0], [0], [1], [0, 0, 1, 1], [], []>} : vector<180x36xbf16>, vector<36x64xbf16>, vector<180x64xf32> -> vector<180x64xf32>
    %82 = vector.extract_strided_slice %76 {offsets = [0, 0], sizes = [1, 64], strides = [1, 1]} : vector<4x64xf32> to vector<1x64xf32>
    %83 = vector.broadcast %82 : vector<1x64xf32> to vector<180x64xf32>
    %84 = arith.mulf %81, %83 : vector<180x64xf32>
    %85 = vector.extract_strided_slice %76 {offsets = [1, 0], sizes = [1, 64], strides = [1, 1]} : vector<4x64xf32> to vector<1x64xf32>
    %86 = vector.broadcast %85 : vector<1x64xf32> to vector<180x64xf32>
    %87 = arith.addf %84, %86 : vector<180x64xf32>
    %cst_52 = arith.constant 0.000000e+00 : f32
    %88 = vector.broadcast %cst_52 : f32 to vector<180x64xf32>
    %89 = arith.maximumf %87, %88 : vector<180x64xf32>
    %90 = vector.shape_cast %89 : vector<180x64xf32> to vector<10x18x64xf32>
    %91 = vector.broadcast %22 : vector<10x18x1xf32> to vector<10x18x64xf32>
    %92 = arith.mulf %90, %91 : vector<10x18x64xf32>
    %93 = vector.extract_strided_slice %92 {offsets = [0, 0, 0], sizes = [10, 16, 64], strides = [1, 1, 1]} : vector<10x18x64xf32> to vector<10x16x64xf32>
    %94 = vector.extract_strided_slice %92 {offsets = [0, 1, 0], sizes = [10, 16, 64], strides = [1, 1, 1]} : vector<10x18x64xf32> to vector<10x16x64xf32>
    %95 = vector.extract_strided_slice %92 {offsets = [0, 2, 0], sizes = [10, 16, 64], strides = [1, 1, 1]} : vector<10x18x64xf32> to vector<10x16x64xf32>
    %96 = tpu.concatenate %93, %94, %95 in 2 : vector<10x16x64xf32>, vector<10x16x64xf32>, vector<10x16x64xf32> -> vector<10x16x192xf32>
    %97 = arith.truncf %96 : vector<10x16x192xf32> to vector<10x16x192xbf16>
    %c0_53 = arith.constant 0 : index
    %c0_54 = arith.constant 0 : index
    %c0_55 = arith.constant 0 : index
    %98 = vector.load %arg7[%c0_53, %c0_54, %c0_55] : memref<10x16x192xbf16, #tpu.memory_space<vmem>>, vector<10x16x192xbf16>
    tpu.vector_store %arg7[%c0_53, %c0_54, %c0_55], %97 {strides = array<i32>} : memref<10x16x192xbf16, #tpu.memory_space<vmem>>, vector<10x16x192xbf16>,
    %cst_56 = arith.constant 0.000000e+00 : f32
    %99 = vector.broadcast %cst_56 : f32 to vector<128x64xf32>
    %c0_57 = arith.constant 0 : index
    %c0_58 = arith.constant 0 : index
    %c0_59 = arith.constant 0 : index
    %100 = vector.load %arg7[%c0_57, %c0_58, %c0_59] : memref<10x16x192xbf16, #tpu.memory_space<vmem>>, vector<8x16x192xbf16>
    %101 = vector.shape_cast %100 : vector<8x16x192xbf16> to vector<128x192xbf16>
    %c1_60 = arith.constant 1 : index
    %c0_61 = arith.constant 0 : index
    %c0_62 = arith.constant 0 : index
    %c0_63 = arith.constant 0 : index
    %102 = vector.load %arg4[%c1_60, %c0_61, %c0_62, %c0_63] : memref<2x3x192x64xbf16, #tpu.memory_space<vmem>>, vector<1x1x192x64xbf16>
    %103 = vector.shape_cast %102 : vector<1x1x192x64xbf16> to vector<192x64xbf16>
    %cst_64 = arith.constant dense<0.000000e+00> : vector<128x64xf32>
    %104 = tpu.matmul %101, %103, %cst_64 {dimension_numbers = #tpu.dot_dimension_numbers<[1], [0], [0], [1], [0, 0, 1, 1], [], []>} : vector<128x192xbf16>, vector<192x64xbf16>, vector<128x64xf32> -> vector<128x64xf32>
    %105 = arith.addf %99, %104 : vector<128x64xf32>
    %c1_65 = arith.constant 1 : index
    %c0_66 = arith.constant 0 : index
    %c0_67 = arith.constant 0 : index
    %106 = vector.load %arg7[%c1_65, %c0_66, %c0_67] : memref<10x16x192xbf16, #tpu.memory_space<vmem>>, vector<8x16x192xbf16>
    %107 = vector.shape_cast %106 : vector<8x16x192xbf16> to vector<128x192xbf16>
    %c1_68 = arith.constant 1 : index
    %c1_69 = arith.constant 1 : index
    %c0_70 = arith.constant 0 : index
    %c0_71 = arith.constant 0 : index
    %108 = vector.load %arg4[%c1_68, %c1_69, %c0_70, %c0_71] : memref<2x3x192x64xbf16, #tpu.memory_space<vmem>>, vector<1x1x192x64xbf16>
    %109 = vector.shape_cast %108 : vector<1x1x192x64xbf16> to vector<192x64xbf16>
    %cst_72 = arith.constant dense<0.000000e+00> : vector<128x64xf32>
    %110 = tpu.matmul %107, %109, %cst_72 {dimension_numbers = #tpu.dot_dimension_numbers<[1], [0], [0], [1], [0, 0, 1, 1], [], []>} : vector<128x192xbf16>, vector<192x64xbf16>, vector<128x64xf32> -> vector<128x64xf32>
    %111 = arith.addf %105, %110 : vector<128x64xf32>
    %c2_73 = arith.constant 2 : index
    %c0_74 = arith.constant 0 : index
    %c0_75 = arith.constant 0 : index
    %112 = vector.load %arg7[%c2_73, %c0_74, %c0_75] : memref<10x16x192xbf16, #tpu.memory_space<vmem>>, vector<8x16x192xbf16>
    %113 = vector.shape_cast %112 : vector<8x16x192xbf16> to vector<128x192xbf16>
    %c1_76 = arith.constant 1 : index
    %c2_77 = arith.constant 2 : index
    %c0_78 = arith.constant 0 : index
    %c0_79 = arith.constant 0 : index
    %114 = vector.load %arg4[%c1_76, %c2_77, %c0_78, %c0_79] : memref<2x3x192x64xbf16, #tpu.memory_space<vmem>>, vector<1x1x192x64xbf16>
    %115 = vector.shape_cast %114 : vector<1x1x192x64xbf16> to vector<192x64xbf16>
    %cst_80 = arith.constant dense<0.000000e+00> : vector<128x64xf32>
    %116 = tpu.matmul %113, %115, %cst_80 {dimension_numbers = #tpu.dot_dimension_numbers<[1], [0], [0], [1], [0, 0, 1, 1], [], []>} : vector<128x192xbf16>, vector<192x64xbf16>, vector<128x64xf32> -> vector<128x64xf32>
    %117 = arith.addf %111, %116 : vector<128x64xf32>
    %118 = vector.extract_strided_slice %76 {offsets = [2, 0], sizes = [1, 64], strides = [1, 1]} : vector<4x64xf32> to vector<1x64xf32>
    %119 = vector.broadcast %118 : vector<1x64xf32> to vector<128x64xf32>
    %120 = arith.mulf %117, %119 : vector<128x64xf32>
    %121 = vector.extract_strided_slice %76 {offsets = [3, 0], sizes = [1, 64], strides = [1, 1]} : vector<4x64xf32> to vector<1x64xf32>
    %122 = vector.broadcast %121 : vector<1x64xf32> to vector<128x64xf32>
    %123 = arith.addf %120, %122 : vector<128x64xf32>
    %cst_81 = arith.constant 0.000000e+00 : f32
    %124 = vector.broadcast %cst_81 : f32 to vector<128x64xf32>
    %125 = arith.maximumf %123, %124 : vector<128x64xf32>
    %126 = vector.shape_cast %125 : vector<128x64xf32> to vector<8x16x64xf32>
    %127 = tpu.concatenate %74, %126 in 2 : vector<8x16x64xf32>, vector<8x16x64xf32> -> vector<8x16x128xf32>
    %c0_82 = arith.constant 0 : index
    %c0_83 = arith.constant 0 : index
    %c0_84 = arith.constant 0 : index
    %c0_85 = arith.constant 0 : index
    %128 = vector.load %arg6[%c0_82, %c0_83, %c0_84, %c0_85] : memref<1x8x16x128xf32, #tpu.memory_space<vmem>>, vector<1x8x16x128xf32>
    %129 = vector.shape_cast %128 : vector<1x8x16x128xf32> to vector<8x16x128xf32>
    %130 = vector.shape_cast %127 : vector<8x16x128xf32> to vector<1x8x16x128xf32>
    tpu.vector_store %arg6[%c0_82, %c0_83, %c0_84, %c0_85], %130 {strides = array<i32>} : memref<1x8x16x128xf32, #tpu.memory_space<vmem>>, vector<1x8x16x128xf32>,
    return
  }
  func.func @transform_0(%arg0: i32, %arg1: i32) -> (i32, i32, i32, i32, i32) {
    %c0_i32 = arith.constant 0 : i32
    %c0_i32_0 = arith.constant 0 : i32
    %c0_i32_1 = arith.constant 0 : i32
    %c0_i32_2 = arith.constant 0 : i32
    return %c0_i32, %arg0, %arg1, %c0_i32_0, %c0_i32_1 : i32, i32, i32, i32, i32
  }
  func.func @transform_1(%arg0: i32, %arg1: i32) -> (i32, i32, i32) {
    %c0_i32 = arith.constant 0 : i32
    %c0_i32_0 = arith.constant 0 : i32
    %c0_i32_1 = arith.constant 0 : i32
    %c0_i32_2 = arith.constant 0 : i32
    return %c0_i32, %c0_i32_0, %c0_i32_1 : i32, i32, i32
  }
  func.func @transform_2(%arg0: i32, %arg1: i32) -> (i32, i32, i32, i32) {
    %c0_i32 = arith.constant 0 : i32
    %c0_i32_0 = arith.constant 0 : i32
    %c0_i32_1 = arith.constant 0 : i32
    %c0_i32_2 = arith.constant 0 : i32
    %c0_i32_3 = arith.constant 0 : i32
    return %c0_i32, %c0_i32_0, %c0_i32_1, %c0_i32_2 : i32, i32, i32, i32
  }
  func.func @transform_3(%arg0: i32, %arg1: i32) -> (i32, i32, i32) {
    %c0_i32 = arith.constant 0 : i32
    %c0_i32_0 = arith.constant 0 : i32
    %c0_i32_1 = arith.constant 0 : i32
    %c0_i32_2 = arith.constant 0 : i32
    return %c0_i32, %c0_i32_0, %c0_i32_1 : i32, i32, i32
  }
  func.func @transform_4(%arg0: i32, %arg1: i32) -> (i32, i32, i32, i32) {
    %c0_i32 = arith.constant 0 : i32
    %c0_i32_0 = arith.constant 0 : i32
    %c0_i32_1 = arith.constant 0 : i32
    return %arg0, %arg1, %c0_i32, %c0_i32_0 : i32, i32, i32, i32
  }
}

</mosaic_0001>

<llo_original>
// kernel: ccunet_forward.1
$region0: #{ccunet_forward.1}
  #allocation0 [shape = 'u32[]', space=smem, size = 0x4, offset = 0x4, fixed_abs, tag = 'smem constant byte address 0x4 - core index']
  #allocation1 [shape = 'u32[144,128]{1,0:T(1,128)}', space=vmem, size = 0x12000, scoped, tag = 'internal scratch']
  #allocation2 [shape = 'bf16[10,16,192]{2,1,0:T(8,128)(2,1)}', space=vmem, size = 0x14000, scoped, tag = 'scratch operand']
  %s0 = inlined_call_operand.vmem [shape: bf16[2,2,2,180,36], index: 0, kind: input, shape index: {}]
  %s1 = inlined_call_operand.vmem [shape: bf16[2,36,64], index: 1, kind: input, shape index: {}]
  %s2 = inlined_call_operand.vmem [shape: bf16[2,3,192,64], index: 2, kind: input, shape index: {}]
  %s3 = inlined_call_operand.vmem [shape: f32[2,4,64], index: 3, kind: input, shape index: {}]
  %s4 = inlined_call_operand.hbm [shape: f32[2,16,16,128], index: 4, kind: output, shape index: {}]
  %s5 = sld [smem:[#allocation0]]
  $region90: #{ccunet_forward.1} parent=0
    _
  %s7 = ssub.s32 1, %s5
  %s8 = scalar_select 0, %s7, %s5
  $region1: #{ccunet_forward.1} parent=0
    #allocation3 [shape = 'u8[188416]{0}', space=vmem, size = 0x2e000, scoped, tag = 'input window, operand 0']
    #allocation4 [shape = 'u8[131072]{0}', space=vmem, size = 0x20000, scoped, tag = 'output window, operand 0']
    #allocation5 [shape = 's32[2]{0}', space=sflag, size = 0x8, scoped, tag = 'scoped memory for ccunet_forward.1']
    %9 = vsyncpa [#allocation5], 0
    %s10 = scalar_lea.sflag [#allocation5], 1
    %11 = vsyncpa %s10, 0
    loop: start=0, step=1, limit=6
    $region2: #{ccunet_forward.1} parent=1 // loop_pre_header
      _
    $region3: #{ccunet_forward.1} parent=1 // loop_header
      %s13 = sphi 0, %s17
      %p14 = scmp.ge.s32.totalorder %s13, 6
      %s20 = sphi 0, %s32
      %s21 = sphi 0, %s28
      %s22 = sphi 0, %s20
      %s23 = sphi 0, %s21
      %s24 = sphi 0, %s22
      %s25 = sphi 0, %s23
      %s37 = sphi 0, %s39
      %s40 = sphi 0, %s37
      %s41 = sphi 0, %s40
      %s57 = sphi 0, %s41
      %s61 = sphi 0, %s61
      %s63 = sphi 0, %s61
      %s64 = sphi 0, %s63
      %s78 = sphi 0, %s64
      %s82 = sphi 0, %s82
      %s84 = sphi 0, %s82
      %s85 = sphi 0, %s84
      %s99 = sphi 0, %s85
      %s103 = sphi 0, %s103
      %s105 = sphi 0, %s103
      %s106 = sphi 0, %s105
      %s120 = sphi 0, %s106
      %s128 = sphi 0, %s130
      %s131 = sphi 0, %s128
      %s132 = sphi 0, %s131
      %s148 = sphi 0, %s132
    $region4: #{ccunet_forward.1} parent=1 // loop_header_branch
      %16 = sbr.rel (%p14) target = $region8
    $region5: #{ccunet_forward.1} parent=1 // loop_body
      %s18 = ssub.s32 %s13, 1
      %s19 = ssub.s32 %s13, 2
      %s26 = sadd.s32 1, %s21
      %p27 = scmp.ge.s32.totalorder %s26, 2
      %s28 = scalar_select %p27, 0, %s26
      %s29 = sadd.s32 1, %s20
      %s30 = scalar_select %p27, %s29, %s20
      %p31 = scmp.ge.s32.totalorder %s30, 2
      %s32 = scalar_select %p31, 0, %s30
      %s33 = ssub.s32 %s20, %s32
      %s34 = ssub.s32 %s21, %s28
      %s35 = sor.u32 %s33, %s34
      %p36 = scmp.eq.s32.totalorder %s35, 0
      %s38 = sadd.s32 %s37, 1
      %s39 = scalar_select %p36, %s37, %s38
      %p42 = pneg %p36
      %p43 = scmp.eq.s32.totalorder %s13, 3
      %p44 = por %p42, %p43
      %p45 = scmp.ne.s32.totalorder %s37, %s40
      %p46 = scmp.eq.s32.totalorder %s13, 0
      %p47 = por %p45, %p46
      %p48 = scmp.ne.s32.totalorder %s37, %s40
      %p49 = scmp.eq.s32.totalorder %s18, 3
      %p50 = por %p48, %p49
      %p51 = scmp.ne.s32.totalorder %s40, %s41
      %p52 = scmp.eq.s32.totalorder %s18, 0
      %p53 = por %p51, %p52
      %p54 = scmp.ne.s32.totalorder %s40, %s41
      %p55 = scmp.eq.s32.totalorder %s19, 3
      %p56 = por %p54, %p55
      %p58 = scmp.ne.s32.totalorder %s41, %s57
      %p59 = scmp.eq.s32.totalorder %s19, 0
      %p60 = por %p58, %p59
      %s62 = sadd.s32 %s61, 1
      %p65 = scmp.eq.s32.totalorder %s13, 3
      %p66 = scmp.ne.s32.totalorder %s61, %s63
      %p67 = scmp.eq.s32.totalorder %s13, 0
      %p68 = por %p66, %p67
      %p69 = scmp.ne.s32.totalorder %s61, %s63
      %p70 = scmp.eq.s32.totalorder %s18, 3
      %p71 = por %p69, %p70
      %p72 = scmp.ne.s32.totalorder %s63, %s64
      %p73 = scmp.eq.s32.totalorder %s18, 0
      %p74 = por %p72, %p73
      %p75 = scmp.ne.s32.totalorder %s63, %s64
      %p76 = scmp.eq.s32.totalorder %s19, 3
      %p77 = por %p75, %p76
      %p79 = scmp.ne.s32.totalorder %s64, %s78
      %p80 = scmp.eq.s32.totalorder %s19, 0
      %p81 = por %p79, %p80
      %s83 = sadd.s32 %s82, 1
      %p86 = scmp.eq.s32.totalorder %s13, 3
      %p87 = scmp.ne.s32.totalorder %s82, %s84
      %p88 = scmp.eq.s32.totalorder %s13, 0
      %p89 = por %p87, %p88
      %p90 = scmp.ne.s32.totalorder %s82, %s84
      %p91 = scmp.eq.s32.totalorder %s18, 3
      %p92 = por %p90, %p91
      %p93 = scmp.ne.s32.totalorder %s84, %s85
      %p94 = scmp.eq.s32.totalorder %s18, 0
      %p95 = por %p93, %p94
      %p96 = scmp.ne.s32.totalorder %s84, %s85
      %p97 = scmp.eq.s32.totalorder %s19, 3
      %p98 = por %p96, %p97
      %p100 = scmp.ne.s32.totalorder %s85, %s99
      %p101 = scmp.eq.s32.totalorder %s19, 0
      %p102 = por %p100, %p101
      %s104 = sadd.s32 %s103, 1
      %p107 = scmp.eq.s32.totalorder %s13, 3
      %p108 = scmp.ne.s32.totalorder %s103, %s105
      %p109 = scmp.eq.s32.totalorder %s13, 0
      %p110 = por %p108, %p109
      %p111 = scmp.ne.s32.totalorder %s103, %s105
      %p112 = scmp.eq.s32.totalorder %s18, 3
      %p113 = por %p111, %p112
      %p114 = scmp.ne.s32.totalorder %s105, %s106
      %p115 = scmp.eq.s32.totalorder %s18, 0
      %p116 = por %p114, %p115
      %p117 = scmp.ne.s32.totalorder %s105, %s106
      %p118 = scmp.eq.s32.totalorder %s19, 3
      %p119 = por %p117, %p118
      %p121 = scmp.ne.s32.totalorder %s106, %s120
      %p122 = scmp.eq.s32.totalorder %s19, 0
      %p123 = por %p121, %p122
      %s124 = ssub.s32 %s20, %s32
      %s125 = ssub.s32 %s21, %s28
      %s126 = sor.u32 %s124, %s125
      %p127 = scmp.eq.s32.totalorder %s126, 0
      %s129 = sadd.s32 %s128, 1
      %s130 = scalar_select %p127, %s128, %s129
      %p133 = pneg %p127
      %p134 = scmp.eq.s32.totalorder %s13, 3
      %p135 = por %p133, %p134
      %p136 = scmp.ne.s32.totalorder %s128, %s131
      %p137 = scmp.eq.s32.totalorder %s13, 0
      %p138 = por %p136, %p137
      %p139 = scmp.ne.s32.totalorder %s128, %s131
      %p140 = scmp.eq.s32.totalorder %s18, 3
      %p141 = por %p139, %p140
      %p142 = scmp.ne.s32.totalorder %s131, %s132
      %p143 = scmp.eq.s32.totalorder %s18, 0
      %p144 = por %p142, %p143
      %p145 = scmp.ne.s32.totalorder %s131, %s132
      %p146 = scmp.eq.s32.totalorder %s19, 3
      %p147 = por %p145, %p146
      %p149 = scmp.ne.s32.totalorder %s132, %s148
      %p150 = scmp.eq.s32.totalorder %s19, 0
      %p151 = por %p149, %p150
      %p152 = scmp.le.s32.totalorder 1, %s13
      %p153 = scmp.lt.s32.totalorder %s13, 5
      %p154 = pnand %p152, %p153
      %p155 = pneg %p154
      // Predicated region
      $region9: #{ccunet_forward.1} parent=5 // pred_check
        _
      $region10: #{ccunet_forward.1} parent=5 // pred_check_branch
        %157 = sbr.rel (%p154) target = $region12
      $region11: #{ccunet_forward.1} parent=5 // pred_region
        %s158 = ssub.s32 %s13, 1
        // Predicated region
        $region13: #{ccunet_forward.1} parent=11 // pred_check
          %p159 = pneg %p74
        $region14: #{ccunet_forward.1} parent=11 // pred_check_branch
          %161 = sbr.rel (%p159) target = $region16
        $region15: #{ccunet_forward.1} parent=11 // pred_region
          _
        $region16: #{ccunet_forward.1} parent=11 // pred_fallthru
          _
        // Predicated region
        $region17: #{ccunet_forward.1} parent=11 // pred_check
          %p162 = pneg %p95
        $region18: #{ccunet_forward.1} parent=11 // pred_check_branch
          %164 = sbr.rel (%p162) target = $region20
        $region19: #{ccunet_forward.1} parent=11 // pred_region
          _
        $region20: #{ccunet_forward.1} parent=11 // pred_fallthru
          _
        // Predicated region
        $region21: #{ccunet_forward.1} parent=11 // pred_check
          %p165 = pneg %p116
        $region22: #{ccunet_forward.1} parent=11 // pred_check_branch
          %167 = sbr.rel (%p165) target = $region24
        $region23: #{ccunet_forward.1} parent=11 // pred_region
          _
        $region24: #{ccunet_forward.1} parent=11 // pred_fallthru
          _
      $region12: #{ccunet_forward.1} parent=5 // pred_fallthru
        _
      %p168 = scmp.lt.s32.totalorder %s13, 4
      // Predicated region
      $region25: #{ccunet_forward.1} parent=5 // pred_check
        %p169 = pneg %p168
      $region26: #{ccunet_forward.1} parent=5 // pred_check_branch
        %171 = sbr.rel (%p169) target = $region28
      $region27: #{ccunet_forward.1} parent=5 // pred_region
        // Predicated region
        $region29: #{ccunet_forward.1} parent=27 // pred_check
          %p172 = pneg %p47
        $region30: #{ccunet_forward.1} parent=27 // pred_check_branch
          %174 = sbr.rel (%p172) target = $region32
        $region31: #{ccunet_forward.1} parent=27 // pred_region
          %s175 = sand.u32 %s37, 1
          %s176 = sand.u32 %s37, 1
          %s177 = smul.addr %s176, 184
          %s178 = scalar_lea.vmem [#allocation3], %s177
          %s179 = smul.addr %s21, 23
          %s180 = smul.addr %s20, 46
          %s181 = sadd.s32 %s179, %s180
          %s182 = smul.addr %s181, 4
          %s183 = scalar_lea.vmem %s0, %s182
          // Predicated region
          $region33: #{ccunet_forward.1} parent=31 // pred_check
            _
          $region34: #{ccunet_forward.1} parent=31 // pred_check_branch
            %185 = sbr.rel (0) target = $region36
          $region35: #{ccunet_forward.1} parent=31 // pred_region
            // Predicated region
            $region37: #{ccunet_forward.1} parent=35 // pred_check
              _
            $region38: #{ccunet_forward.1} parent=35 // pred_check_branch
              %187 = sbr.rel target = $region40
            $region39: #{ccunet_forward.1} parent=35 // pred_region
              // Predicated region
              $region52: #{ccunet_forward.1} parent=39 // pred_check
                _
              $region53: #{ccunet_forward.1} parent=39 // pred_check_branch
                %293 = sbr.rel (0) target = $region55
              $region54: #{ccunet_forward.1} parent=39 // pred_region
                loop: start=0, step=1, limit=1
                $region56: #{ccunet_forward.1} parent=54 // loop_pre_header
                  _
                $region57: #{ccunet_forward.1} parent=54 // loop_header
                  %s295 = sphi 0, %s299
                  %p296 = scmp.ge.s32.totalorder %s295, 1
                  %s300 = sphi %s183, %s183
                  %s301 = sphi %s178, %s178
                $region58: #{ccunet_forward.1} parent=54 // loop_header_branch
                  %298 = sbr.rel (%p296) target = $region62
                $region59: #{ccunet_forward.1} parent=54 // loop_body
                  _
                $region60: #{ccunet_forward.1} parent=54 // loop_footer
                  %s299 = sadd.s32 1, %s295
                $region61: #{ccunet_forward.1} parent=54 // loop_footer_branch
                  %294 = sbr.rel target = $region57
                $region62: #{ccunet_forward.1} parent=54 // loop_exit
                  _
                %s303 = ssub.s32 16, 1
                loop: start=0, step=1, limit=1
                $region63: #{ccunet_forward.1} parent=54 // loop_pre_header
                  _
                $region64: #{ccunet_forward.1} parent=54 // loop_header
                  %s305 = sphi 0, %s309
                  %p306 = scmp.ge.s32.totalorder %s305, 1
                  %s310 = sphi %s183, %s183
                  %s311 = sphi %s178, %s178
                $region65: #{ccunet_forward.1} parent=54 // loop_header_branch
                  %308 = sbr.rel (%p306) target = $region69
                $region66: #{ccunet_forward.1} parent=54 // loop_body
                  %v312 = vld [vmem:[%s310] sm:%s303]
                  %313 = vst [vmem:[%s311] sm:%s303] %v312
                  %v314 = vld [vmem:[%s310 + $0x4] sm:%s303]
                  %315 = vst [vmem:[%s311 + $0x4] sm:%s303] %v314
                  %v316 = vld [vmem:[%s310 + $0x8] sm:%s303]
                  %317 = vst [vmem:[%s311 + $0x8] sm:%s303] %v316
                  %v318 = vld [vmem:[%s310 + $0xc] sm:%s303]
                  %319 = vst [vmem:[%s311 + $0xc] sm:%s303] %v318
                  %v320 = vld [vmem:[%s310 + $0x10] sm:%s303]
                  %321 = vst [vmem:[%s311 + $0x10] sm:%s303] %v320
                  %v322 = vld [vmem:[%s310 + $0x14] sm:%s303]
                  %323 = vst [vmem:[%s311 + $0x14] sm:%s303] %v322
                  %v324 = vld [vmem:[%s310 + $0x18] sm:%s303]
                  %325 = vst [vmem:[%s311 + $0x18] sm:%s303] %v324
                  %v326 = vld [vmem:[%s310 + $0x1c] sm:%s303]
                  %327 = vst [vmem:[%s311 + $0x1c] sm:%s303] %v326
                  %v328 = vld [vmem:[%s310 + $0x20] sm:%s303]
                  %329 = vst [vmem:[%s311 + $0x20] sm:%s303] %v328
                  %v330 = vld [vmem:[%s310 + $0x24] sm:%s303]
                  %331 = vst [vmem:[%s311 + $0x24] sm:%s303] %v330
                  %v332 = vld [vmem:[%s310 + $0x28] sm:%s303]
                  %333 = vst [vmem:[%s311 + $0x28] sm:%s303] %v332
                  %v334 = vld [vmem:[%s310 + $0x2c] sm:%s303]
                  %335 = vst [vmem:[%s311 + $0x2c] sm:%s303] %v334
                  %v336 = vld [vmem:[%s310 + $0x30] sm:%s303]
                  %337 = vst [vmem:[%s311 + $0x30] sm:%s303] %v336
                  %v338 = vld [vmem:[%s310 + $0x34] sm:%s303]
                  %339 = vst [vmem:[%s311 + $0x34] sm:%s303] %v338
                  %v340 = vld [vmem:[%s310 + $0x38] sm:%s303]
                  %341 = vst [vmem:[%s311 + $0x38] sm:%s303] %v340
                  %v342 = vld [vmem:[%s310 + $0x3c] sm:%s303]
                  %343 = vst [vmem:[%s311 + $0x3c] sm:%s303] %v342
                  %v344 = vld [vmem:[%s310 + $0x40] sm:%s303]
                  %345 = vst [vmem:[%s311 + $0x40] sm:%s303] %v344
                  %v346 = vld [vmem:[%s310 + $0x44] sm:%s303]
                  %347 = vst [vmem:[%s311 + $0x44] sm:%s303] %v346
                  %v348 = vld [vmem:[%s310 + $0x48] sm:%s303]
                  %349 = vst [vmem:[%s311 + $0x48] sm:%s303] %v348
                  %v350 = vld [vmem:[%s310 + $0x4c] sm:%s303]
                  %351 = vst [vmem:[%s311 + $0x4c] sm:%s303] %v350
                  %v352 = vld [vmem:[%s310 + $0x50] sm:%s303]
                  %353 = vst [vmem:[%s311 + $0x50] sm:%s303] %v352
                  %v354 = vld [vmem:[%s310 + $0x54] sm:%s303]
                  %355 = vst [vmem:[%s311 + $0x54] sm:%s303] %v354
                  %v356 = vld [vmem:[%s310 + $0x58] sm:%s303]
                  %357 = vst [vmem:[%s311 + $0x58] sm:%s303] %v356
                  %v358 = vld [vmem:[%s310 + $0x170] sm:%s303]
                  %359 = vst [vmem:[%s311 + $0x5c] sm:%s303] %v358
                  %v360 = vld [vmem:[%s310 + $0x174] sm:%s303]
                  %361 = vst [vmem:[%s311 + $0x60] sm:%s303] %v360
                  %v362 = vld [vmem:[%s310 + $0x178] sm:%s303]
                  %363 = vst [vmem:[%s311 + $0x64] sm:%s303] %v362
                  %v364 = vld [vmem:[%s310 + $0x17c] sm:%s303]
                  %365 = vst [vmem:[%s311 + $0x68] sm:%s303] %v364
                  %v366 = vld [vmem:[%s310 + $0x180] sm:%s303]
                  %367 = vst [vmem:[%s311 + $0x6c] sm:%s303] %v366
                  %v368 = vld [vmem:[%s310 + $0x184] sm:%s303]
                  %369 = vst [vmem:[%s311 + $0x70] sm:%s303] %v368
                  %v370 = vld [vmem:[%s310 + $0x188] sm:%s303]
                  %371 = vst [vmem:[%s311 + $0x74] sm:%s303] %v370
                  %v372 = vld [vmem:[%s310 + $0x18c] sm:%s303]
                  %373 = vst [vmem:[%s311 + $0x78] sm:%s303] %v372
                  %v374 = vld [vmem:[%s310 + $0x190] sm:%s303]
                  %375 = vst [vmem:[%s311 + $0x7c] sm:%s303] %v374
                  %v376 = vld [vmem:[%s310 + $0x194] sm:%s303]
                  %377 = vst [vmem:[%s311 + $0x80] sm:%s303] %v376
                  %v378 = vld [vmem:[%s310 + $0x198] sm:%s303]
                  %379 = vst [vmem:[%s311 + $0x84] sm:%s303] %v378
                  %v380 = vld [vmem:[%s310 + $0x19c] sm:%s303]
                  %381 = vst [vmem:[%s311 + $0x88] sm:%s303] %v380
                  %v382 = vld [vmem:[%s310 + $0x1a0] sm:%s303]
                  %383 = vst [vmem:[%s311 + $0x8c] sm:%s303] %v382
                  %v384 = vld [vmem:[%s310 + $0x1a4] sm:%s303]
                  %385 = vst [vmem:[%s311 + $0x90] sm:%s303] %v384
                  %v386 = vld [vmem:[%s310 + $0x1a8] sm:%s303]
                  %387 = vst [vmem:[%s311 + $0x94] sm:%s303] %v386
                  %v388 = vld [vmem:[%s310 + $0x1ac] sm:%s303]
                  %389 = vst [vmem:[%s311 + $0x98] sm:%s303] %v388
                  %v390 = vld [vmem:[%s310 + $0x1b0] sm:%s303]
                  %391 = vst [vmem:[%s311 + $0x9c] sm:%s303] %v390
                  %v392 = vld [vmem:[%s310 + $0x1b4] sm:%s303]
                  %393 = vst [vmem:[%s311 + $0xa0] sm:%s303] %v392
                  %v394 = vld [vmem:[%s310 + $0x1b8] sm:%s303]
                  %395 = vst [vmem:[%s311 + $0xa4] sm:%s303] %v394
                  %v396 = vld [vmem:[%s310 + $0x1bc] sm:%s303]
                  %397 = vst [vmem:[%s311 + $0xa8] sm:%s303] %v396
                  %v398 = vld [vmem:[%s310 + $0x1c0] sm:%s303]
                  %399 = vst [vmem:[%s311 + $0xac] sm:%s303] %v398
                  %v400 = vld [vmem:[%s310 + $0x1c4] sm:%s303]
                  %401 = vst [vmem:[%s311 + $0xb0] sm:%s303] %v400
                  %v402 = vld [vmem:[%s310 + $0x1c8] sm:%s303]
                  %403 = vst [vmem:[%s311 + $0xb4] sm:%s303] %v402
                $region67: #{ccunet_forward.1} parent=54 // loop_footer
                  %s309 = sadd.s32 1, %s305
                $region68: #{ccunet_forward.1} parent=54 // loop_footer_branch
                  %304 = sbr.rel target = $region64
                $region69: #{ccunet_forward.1} parent=54 // loop_exit
                  _
              $region55: #{ccunet_forward.1} parent=39 // pred_fallthru
                _
            $region40: #{ccunet_forward.1} parent=35 // pred_fallthru
              _
            // Predicated region
            $region41: #{ccunet_forward.1} parent=35 // pred_check
              _
            $region42: #{ccunet_forward.1} parent=35 // pred_check_branch
              %189 = sbr.rel (0) target = $region44
            $region43: #{ccunet_forward.1} parent=35 // pred_region
              %s191 = ssub.s32 16, 1
              loop: start=0, step=1, limit=1
              $region45: #{ccunet_forward.1} parent=43 // loop_pre_header
                _
              $region46: #{ccunet_forward.1} parent=43 // loop_header
                %s193 = sphi 0, %s197
                %p194 = scmp.ge.s32.totalorder %s193, 1
                %s198 = sphi %s183, %s183
                %s199 = sphi %s178, %s178
              $region47: #{ccunet_forward.1} parent=43 // loop_header_branch
                %196 = sbr.rel (%p194) target = $region51
              $region48: #{ccunet_forward.1} parent=43 // loop_body
                %v200 = vld [vmem:[%s198] sm:%s191]
                %201 = vst [vmem:[%s199] sm:%s191] %v200
                %v202 = vld [vmem:[%s198 + $0x4] sm:%s191]
                %203 = vst [vmem:[%s199 + $0x4] sm:%s191] %v202
                %v204 = vld [vmem:[%s198 + $0x8] sm:%s191]
                %205 = vst [vmem:[%s199 + $0x8] sm:%s191] %v204
                %v206 = vld [vmem:[%s198 + $0xc] sm:%s191]
                %207 = vst [vmem:[%s199 + $0xc] sm:%s191] %v206
                %v208 = vld [vmem:[%s198 + $0x10] sm:%s191]
                %209 = vst [vmem:[%s199 + $0x10] sm:%s191] %v208
                %v210 = vld [vmem:[%s198 + $0x14] sm:%s191]
                %211 = vst [vmem:[%s199 + $0x14] sm:%s191] %v210
                %v212 = vld [vmem:[%s198 + $0x18] sm:%s191]
                %213 = vst [vmem:[%s199 + $0x18] sm:%s191] %v212
                %v214 = vld [vmem:[%s198 + $0x1c] sm:%s191]
                %215 = vst [vmem:[%s199 + $0x1c] sm:%s191] %v214
                %v216 = vld [vmem:[%s198 + $0x20] sm:%s191]
                %217 = vst [vmem:[%s199 + $0x20] sm:%s191] %v216
                %v218 = vld [vmem:[%s198 + $0x24] sm:%s191]
                %219 = vst [vmem:[%s199 + $0x24] sm:%s191] %v218
                %v220 = vld [vmem:[%s198 + $0x28] sm:%s191]
                %221 = vst [vmem:[%s199 + $0x28] sm:%s191] %v220
                %v222 = vld [vmem:[%s198 + $0x2c] sm:%s191]
                %223 = vst [vmem:[%s199 + $0x2c] sm:%s191] %v222
                %v224 = vld [vmem:[%s198 + $0x30] sm:%s191]
                %225 = vst [vmem:[%s199 + $0x30] sm:%s191] %v224
                %v226 = vld [vmem:[%s198 + $0x34] sm:%s191]
                %227 = vst [vmem:[%s199 + $0x34] sm:%s191] %v226
                %v228 = vld [vmem:[%s198 + $0x38] sm:%s191]
                %229 = vst [vmem:[%s199 + $0x38] sm:%s191] %v228
                %v230 = vld [vmem:[%s198 + $0x3c] sm:%s191]
                %231 = vst [vmem:[%s199 + $0x3c] sm:%s191] %v230
                %v232 = vld [vmem:[%s198 + $0x40] sm:%s191]
                %233 = vst [vmem:[%s199 + $0x40] sm:%s191] %v232
                %v234 = vld [vmem:[%s198 + $0x44] sm:%s191]
                %235 = vst [vmem:[%s199 + $0x44] sm:%s191] %v234
                %v236 = vld [vmem:[%s198 + $0x48] sm:%s191]
                %237 = vst [vmem:[%s199 + $0x48] sm:%s191] %v236
                %v238 = vld [vmem:[%s198 + $0x4c] sm:%s191]
                %239 = vst [vmem:[%s199 + $0x4c] sm:%s191] %v238
                %v240 = vld [vmem:[%s198 + $0x50] sm:%s191]
                %241 = vst [vmem:[%s199 + $0x50] sm:%s191] %v240
                %v242 = vld [vmem:[%s198 + $0x54] sm:%s191]
                %243 = vst [vmem:[%s199 + $0x54] sm:%s191] %v242
                %v244 = vld [vmem:[%s198 + $0x58] sm:%s191]
                %245 = vst [vmem:[%s199 + $0x58] sm:%s191] %v244
                %v246 = vld [vmem:[%s198 + $0x170] sm:%s191]
                %247 = vst [vmem:[%s199 + $0x5c] sm:%s191] %v246
                %v248 = vld [vmem:[%s198 + $0x174] sm:%s191]
                %249 = vst [vmem:[%s199 + $0x60] sm:%s191] %v248
                %v250 = vld [vmem:[%s198 + $0x178] sm:%s191]
                %251 = vst [vmem:[%s199 + $0x64] sm:%s191] %v250
                %v252 = vld [vmem:[%s198 + $0x17c] sm:%s191]
                %253 = vst [vmem:[%s199 + $0x68] sm:%s191] %v252
                %v254 = vld [vmem:[%s198 + $0x180] sm:%s191]
                %255 = vst [vmem:[%s199 + $0x6c] sm:%s191] %v254
                %v256 = vld [vmem:[%s198 + $0x184] sm:%s191]
                %257 = vst [vmem:[%s199 + $0x70] sm:%s191] %v256
                %v258 = vld [vmem:[%s198 + $0x188] sm:%s191]
                %259 = vst [vmem:[%s199 + $0x74] sm:%s191] %v258
                %v260 = vld [vmem:[%s198 + $0x18c] sm:%s191]
                %261 = vst [vmem:[%s199 + $0x78] sm:%s191] %v260
                %v262 = vld [vmem:[%s198 + $0x190] sm:%s191]
                %263 = vst [vmem:[%s199 + $0x7c] sm:%s191] %v262
                %v264 = vld [vmem:[%s198 + $0x194] sm:%s191]
                %265 = vst [vmem:[%s199 + $0x80] sm:%s191] %v264
                %v266 = vld [vmem:[%s198 + $0x198] sm:%s191]
                %267 = vst [vmem:[%s199 + $0x84] sm:%s191] %v266
                %v268 = vld [vmem:[%s198 + $0x19c] sm:%s191]
                %269 = vst [vmem:[%s199 + $0x88] sm:%s191] %v268
                %v270 = vld [vmem:[%s198 + $0x1a0] sm:%s191]
                %271 = vst [vmem:[%s199 + $0x8c] sm:%s191] %v270
                %v272 = vld [vmem:[%s198 + $0x1a4] sm:%s191]
                %273 = vst [vmem:[%s199 + $0x90] sm:%s191] %v272
                %v274 = vld [vmem:[%s198 + $0x1a8] sm:%s191]
                %275 = vst [vmem:[%s199 + $0x94] sm:%s191] %v274
                %v276 = vld [vmem:[%s198 + $0x1ac] sm:%s191]
                %277 = vst [vmem:[%s199 + $0x98] sm:%s191] %v276
                %v278 = vld [vmem:[%s198 + $0x1b0] sm:%s191]
                %279 = vst [vmem:[%s199 + $0x9c] sm:%s191] %v278
                %v280 = vld [vmem:[%s198 + $0x1b4] sm:%s191]
                %281 = vst [vmem:[%s199 + $0xa0] sm:%s191] %v280
                %v282 = vld [vmem:[%s198 + $0x1b8] sm:%s191]
                %283 = vst [vmem:[%s199 + $0xa4] sm:%s191] %v282
                %v284 = vld [vmem:[%s198 + $0x1bc] sm:%s191]
                %285 = vst [vmem:[%s199 + $0xa8] sm:%s191] %v284
                %v286 = vld [vmem:[%s198 + $0x1c0] sm:%s191]
                %287 = vst [vmem:[%s199 + $0xac] sm:%s191] %v286
                %v288 = vld [vmem:[%s198 + $0x1c4] sm:%s191]
                %289 = vst [vmem:[%s199 + $0xb0] sm:%s191] %v288
                %v290 = vld [vmem:[%s198 + $0x1c8] sm:%s191]
                %291 = vst [vmem:[%s199 + $0xb4] sm:%s191] %v290
              $region49: #{ccunet_forward.1} parent=43 // loop_footer
                %s197 = sadd.s32 1, %s193
              $region50: #{ccunet_forward.1} parent=43 // loop_footer_branch
                %192 = sbr.rel target = $region46
              $region51: #{ccunet_forward.1} parent=43 // loop_exit
                _
            $region44: #{ccunet_forward.1} parent=35 // pred_fallthru
              _
          $region36: #{ccunet_forward.1} parent=31 // pred_fallthru
            _
          %404 = vnop
        $region32: #{ccunet_forward.1} parent=27 // pred_fallthru
          _
      $region28: #{ccunet_forward.1} parent=5 // pred_fallthru
        _
      %p405 = scmp.le.s32.totalorder 1, %s13
      %p406 = scmp.lt.s32.totalorder %s13, 5
      %p407 = pnand %p405, %p406
      %p408 = pneg %p407
      // Predicated region
      $region70: #{ccunet_forward.1} parent=5 // pred_check
        _
      $region71: #{ccunet_forward.1} parent=5 // pred_check_branch
        %410 = sbr.rel (%p407) target = $region73
      $region72: #{ccunet_forward.1} parent=5 // pred_region
        %s411 = ssub.s32 %s13, 1
        %s412 = sand.u32 %s40, 1
        %s413 = sand.u32 %s40, 1
        %s414 = smul.addr %s413, 184
        %s415 = scalar_lea.vmem [#allocation3], %s414
        // Predicated region
        $region74: #{ccunet_forward.1} parent=72 // pred_check
          %p416 = pneg %p53
        $region75: #{ccunet_forward.1} parent=72 // pred_check_branch
          %418 = sbr.rel (%p416) target = $region77
        $region76: #{ccunet_forward.1} parent=72 // pred_region
          _
        $region77: #{ccunet_forward.1} parent=72 // pred_fallthru
          _
        %s419 = sand.u32 %s40, 1
        %s420 = sand.u32 %s40, 1
        %s421 = smul.addr %s420, 184
        %s422 = scalar_lea.vmem [#allocation3], %s421
        %p423 = pneg %p53
        %p424 = pneg %p50
        %p425 = pneg %p74
        %p426 = pneg %p71
        %p427 = pneg %p95
        %p428 = pneg %p92
        %p429 = pneg %p116
        %p430 = pneg %p113
        %p431 = pneg %p144
        %p432 = pneg %p141
        %s433 = sand.u32 %s131, 1
        %s434 = scalar_lea.sflag [#allocation5], %s433
        %s435 = sand.u32 %s131, 1
        %s436 = smul.addr %s435, 128
        %s437 = scalar_lea.vmem [#allocation4], %s436
        %s438 = smul.u32 8, %s23
        %s440 = smul.u32 %s23, 8
        %s441 = ssub.s32 %s440, 1
        %v442 = vstv %s441
        %v443 = vadd.s32 %v442, 1
        %v444 = vadd.s32 %v442, 2
        %v445 = vadd.s32 %v442, 3
        %v446 = vadd.s32 %v442, 4
        %v447 = vadd.s32 %v442, 5
        %v448 = vadd.s32 %v442, 6
        %v449 = vadd.s32 %v442, 7
        %v450 = vadd.s32 %v442, 8
        %v451 = vadd.s32 %v442, 9
        %vm452 = vcmp.ge.s32.totalorder %v442, 0
        %vm453 = vcmp.ge.s32.totalorder %v443, 0
        %vm454 = vcmp.ge.s32.totalorder %v444, 0
        %vm455 = vcmp.ge.s32.totalorder %v445, 0
        %vm456 = vcmp.ge.s32.totalorder %v446, 0
        %vm457 = vcmp.ge.s32.totalorder %v447, 0
        %vm458 = vcmp.ge.s32.totalorder %v448, 0
        %vm459 = vcmp.ge.s32.totalorder %v449, 0
        %vm460 = vcmp.ge.s32.totalorder %v450, 0
        %vm461 = vcmp.ge.s32.totalorder %v451, 0
        %vm462 = vcmp.lt.s32.totalorder %v442, 16
        %vm463 = vcmp.lt.s32.totalorder %v443, 16
        %vm464 = vcmp.lt.s32.totalorder %v444, 16
        %vm465 = vcmp.lt.s32.totalorder %v445, 16
        %vm466 = vcmp.lt.s32.totalorder %v446, 16
        %vm467 = vcmp.lt.s32.totalorder %v447, 16
        %vm468 = vcmp.lt.s32.totalorder %v448, 16
        %vm469 = vcmp.lt.s32.totalorder %v449, 16
        %vm470 = vcmp.lt.s32.totalorder %v450, 16
        %vm471 = vcmp.lt.s32.totalorder %v451, 16
        %vm472 = vmand %vm452, %vm462
        %vm473 = vmand %vm453, %vm463
        %vm474 = vmand %vm454, %vm464
        %vm475 = vmand %vm455, %vm465
        %vm476 = vmand %vm456, %vm466
        %vm477 = vmand %vm457, %vm467
        %vm478 = vmand %vm458, %vm468
        %vm479 = vmand %vm459, %vm469
        %vm480 = vmand %vm460, %vm470
        %vm481 = vmand %vm461, %vm471
        %v482 = vsel %vm472, 1, 0
        %v483 = vsel %vm473, 1, 0
        %v484 = vsel %vm474, 1, 0
        %v485 = vsel %vm475, 1, 0
        %v486 = vsel %vm476, 1, 0
        %v487 = vsel %vm477, 1, 0
        %v488 = vsel %vm478, 1, 0
        %v489 = vsel %vm479, 1, 0
        %v490 = vsel %vm480, 1, 0
        %v491 = vsel %vm481, 1, 0
        %v492 = vcvt.s32.f32 %v482
        %v493 = vcvt.s32.f32 %v483
        %v494 = vcvt.s32.f32 %v484
        %v495 = vcvt.s32.f32 %v485
        %v496 = vcvt.s32.f32 %v486
        %v497 = vcvt.s32.f32 %v487
        %v498 = vcvt.s32.f32 %v488
        %v499 = vcvt.s32.f32 %v489
        %v500 = vcvt.s32.f32 %v490
        %v501 = vcvt.s32.f32 %v491
        %v502 = vlaneseq
        %v503 = vshrl.u32 %v502, 7
        %v504 = vadd.s32 %v503, 8
        %v505 = vadd.s32 %v503, 16
        %vm506 = vcmp.ge.s32.totalorder %v503, 1
        %vm507 = vcmp.ge.s32.totalorder %v504, 1
        %vm508 = vcmp.ge.s32.totalorder %v505, 1
        %vm509 = vcmp.le.s32.totalorder %v503, 16
        %vm510 = vcmp.le.s32.totalorder %v504, 16
        %vm511 = vcmp.le.s32.totalorder %v505, 16
        %vm512 = vmand %vm506, %vm509
        %vm513 = vmand %vm507, %vm510
        %vm514 = vmand %vm508, %vm511
        %v515 = vsel %vm512, 1, 0
        %v516 = vsel %vm513, 1, 0
        %v517 = vsel %vm514, 1, 0
        %v518 = vcvt.s32.f32 %v515
        %v519 = vcvt.s32.f32 %v516
        %v520 = vcvt.s32.f32 %v517
        %v521 = vmul.f32 %v492, %v518
        %v522 = vmul.f32 %v492, %v519
        %v523 = vmul.f32 %v492, %v520
        %v524 = vmul.f32 %v493, %v518
        %v525 = vmul.f32 %v493, %v519
        %v526 = vmul.f32 %v493, %v520
        %v527 = vmul.f32 %v494, %v518
        %v528 = vmul.f32 %v494, %v519
        %v529 = vmul.f32 %v494, %v520
        %v530 = vmul.f32 %v495, %v518
        %v531 = vmul.f32 %v495, %v519
        %v532 = vmul.f32 %v495, %v520
        %v533 = vmul.f32 %v496, %v518
        %v534 = vmul.f32 %v496, %v519
        %v535 = vmul.f32 %v496, %v520
        %v536 = vmul.f32 %v497, %v518
        %v537 = vmul.f32 %v497, %v519
        %v538 = vmul.f32 %v497, %v520
        %v539 = vmul.f32 %v498, %v518
        %v540 = vmul.f32 %v498, %v519
        %v541 = vmul.f32 %v498, %v520
        %v542 = vmul.f32 %v499, %v518
        %v543 = vmul.f32 %v499, %v519
        %v544 = vmul.f32 %v499, %v520
        %v545 = vmul.f32 %v500, %v518
        %v546 = vmul.f32 %v500, %v519
        %v547 = vmul.f32 %v500, %v520
        %v548 = vmul.f32 %v501, %v518
        %v549 = vmul.f32 %v501, %v519
        %v550 = vmul.f32 %v501, %v520
        %v551 = vld [vmem:[%s3] sm:$0xf]
        %v552 = vld [vmem:[%s415] sm:$0xf]
        %v553 = vld [vmem:[%s415 + $0x4] sm:$0xf]
        %v554 = vld [vmem:[%s415 + $0x8] sm:$0xf]
        %v555 = vld [vmem:[%s415 + $0xc] sm:$0xf]
        %v556 = vld [vmem:[%s415 + $0x10] sm:$0xf]
        %v557 = vld [vmem:[%s415 + $0x14] sm:$0xf]
        %v558 = vld [vmem:[%s415 + $0x18] sm:$0xf]
        %v559 = vld [vmem:[%s415 + $0x1c] sm:$0xf]
        %v560 = vld [vmem:[%s415 + $0x20] sm:$0xf]
        %v561 = vld [vmem:[%s415 + $0x24] sm:$0xf]
        %v562 = vld [vmem:[%s415 + $0x28] sm:$0xf]
        %v563 = vld [vmem:[%s415 + $0x2c] sm:$0xf]
        %v564 = vld [vmem:[%s415 + $0x30] sm:$0xf]
        %v565 = vld [vmem:[%s415 + $0x34] sm:$0xf]
        %v566 = vld [vmem:[%s415 + $0x38] sm:$0xf]
        %v567 = vld [vmem:[%s415 + $0x3c] sm:$0xf]
        %v568 = vld [vmem:[%s415 + $0x40] sm:$0xf]
        %v569 = vld [vmem:[%s415 + $0x44] sm:$0xf]
        %v570 = vld [vmem:[%s415 + $0x48] sm:$0xf]
        %v571 = vld [vmem:[%s415 + $0x4c] sm:$0xf]
        %v572 = vld [vmem:[%s415 + $0x50] sm:$0xf]
        %v573 = vld [vmem:[%s415 + $0x54] sm:$0xf]
        %v574 = vld [vmem:[%s415 + $0x58] sm:$0x3]
        %v575 = vld [vmem:[%s1] sm:$0xf]
        %v576 = vld [vmem:[%s1 + $0x4] sm:$0xf]
        %v577 = vld [vmem:[%s1 + $0x8] sm:$0xf]
        %v578 = vld [vmem:[%s1 + $0xc] sm:$0xf]
        %v579 = vld [vmem:[%s1 + $0x10] sm:$0x3]
        %v603 = vunpack.c.l.b16 %v552
        %v604 = vunpack.c.l.b16 %v553
        %v605 = vunpack.c.l.b16 %v554
        %v606 = vunpack.c.l.b16 %v555
        %v607 = vunpack.c.l.b16 %v556
        %v608 = vunpack.c.l.b16 %v557
        %v609 = vunpack.c.l.b16 %v558
        %v610 = vunpack.c.l.b16 %v559
        %v611 = vunpack.c.l.b16 %v560
        %v612 = vunpack.c.l.b16 %v561
        %v613 = vunpack.c.l.b16 %v562
        %v614 = vunpack.c.l.b16 %v563
        %v615 = vunpack.c.l.b16 %v564
        %v616 = vunpack.c.l.b16 %v565
        %v617 = vunpack.c.l.b16 %v566
        %v618 = vunpack.c.l.b16 %v567
        %v619 = vunpack.c.l.b16 %v568
        %v620 = vunpack.c.l.b16 %v569
        %v621 = vunpack.c.l.b16 %v570
        %v622 = vunpack.c.l.b16 %v571
        %v623 = vunpack.c.l.b16 %v572
        %v624 = vunpack.c.l.b16 %v573
        %v625 = vunpack.c.l.b16 %v574
        %v626 = vpack.c.b16 %v604, %v603
        %v627 = vpack.c.b16 %v606, %v605
        %v628 = vpack.c.b16 %v608, %v607
        %v629 = vpack.c.b16 %v610, %v609
        %v630 = vpack.c.b16 %v612, %v611
        %v631 = vpack.c.b16 %v614, %v613
        %v632 = vpack.c.b16 %v616, %v615
        %v633 = vpack.c.b16 %v618, %v617
        %v634 = vpack.c.b16 %v620, %v619
        %v635 = vpack.c.b16 %v622, %v621
        %v636 = vpack.c.b16 %v624, %v623
        %v637 = vpack.c.b16 %v625, %v625
        %v643 = vunpack.c.l.b16 %v575
        %v644 = vunpack.c.l.b16 %v576
        %v645 = vunpack.c.l.b16 %v577
        %v646 = vunpack.c.l.b16 %v578
        %v647 = vunpack.c.l.b16 %v579
        %v648 = vpack.c.b16 %v644, %v643
        %v649 = vpack.c.b16 %v646, %v645
        %v650 = vpack.c.b16 %v647, %v647
        %vm653 = vcmask 293888
        %v655 = vsel %vm653, %v626, 0
        %v658 = vsel %vm653, %v627, 0
        %v661 = vsel %vm653, %v628, 0
        %v664 = vsel %vm653, %v629, 0
        %v667 = vsel %vm653, %v630, 0
        %v670 = vsel %vm653, %v631, 0
        %v673 = vsel %vm653, %v632, 0
        %v676 = vsel %vm653, %v633, 0
        %v679 = vsel %vm653, %v634, 0
        %v682 = vsel %vm653, %v635, 0
        %v685 = vsel %vm653, %v636, 0
        %v688 = vsel %vm653, %v637, 0
        %vm690 = vcmask 1041408
        %v692 = vsel %vm690, %v650, 0
        %694 = vmatprep.subr.bf16.mxu0 0
        %695 = vmatpush1.bf16.msra.mxu0 0
        %696 = vmatprep.subr.bf16.mxu0 0
        %697 = vmatpush1.bf16.msra.mxu0 0
        %698 = vmatprep.subr.bf16.mxu0 0
        %699 = vmatpush1.bf16.msra.mxu0 0
        %700 = vmatprep.subr.bf16.mxu0 0
        %701 = vmatpush1.bf16.msra.mxu0 0
        %702 = vmatprep.subr.bf16.mxu0 0
        %703 = vmatpush1.bf16.msra.mxu0 0
        %704 = vmatprep.subr.bf16.mxu0 0
        %705 = vmatpush1.bf16.msra.mxu0 %v692
        %706 = vmatprep.subr.bf16.mxu0 0
        %707 = vmatpush1.bf16.msra.mxu0 %v649
        %708 = vmatprep.subr.bf16.mxu0 0
        %709 = vmatpush1.bf16.msra.mxu0 %v648
        %710 = vmatprep.subr.bf16.mxu0 0
        %711 = vmatpush2.bf16.msra.mxu0 0
        %712 = vmatprep.subr.bf16.mxu0 0
        %713 = vmatpush2.bf16.msra.mxu0 0
        %714 = vmatprep.subr.bf16.mxu0 0
        %715 = vmatpush2.bf16.msra.mxu0 0
        %716 = vmatprep.subr.bf16.mxu0 0
        %717 = vmatpush2.bf16.msra.mxu0 0
        %718 = vmatprep.subr.bf16.mxu0 0
        %719 = vmatpush2.bf16.msra.mxu0 0
        %720 = vmatprep.subr.bf16.mxu0 0
        %721 = vmatpush2.bf16.msra.mxu0 0
        %722 = vmatprep.subr.bf16.mxu0 0
        %723 = vmatpush2.bf16.msra.mxu0 0
        %724 = vmatprep.subr.bf16.mxu0 0
        %725 = vmatpush2.bf16.msra.mxu0 0
        %726 = vmatprep.mubr.bf16.mxu0 0
        %727 = vmatmul.mubr.bf16.gmra.mxu0 %v655
        %v728 = vpop.f32.mrf.mxu0
        %v729 = vadd.f32 0.0, %v728
        %v730 = vpop.f32.mrf.mxu0
        %v731 = vpop.f32.mrf.mxu0
        %v732 = vadd.f32 0.0, %v731
        %v733 = vpop.f32.mrf.mxu0
        %734 = vmatprep.mubr.bf16.mxu0 0
        %735 = vmatmul.mubr.bf16.gmra.mxu0 %v658
        %v736 = vpop.f32.mrf.mxu0
        %v737 = vadd.f32 0.0, %v736
        %v738 = vpop.f32.mrf.mxu0
        %v739 = vpop.f32.mrf.mxu0
        %v740 = vadd.f32 0.0, %v739
        %v741 = vpop.f32.mrf.mxu0
        %742 = vmatprep.mubr.bf16.mxu0 0
        %743 = vmatmul.mubr.bf16.gmra.mxu0 %v661
        %v744 = vpop.f32.mrf.mxu0
        %v745 = vadd.f32 0.0, %v744
        %v746 = vpop.f32.mrf.mxu0
        %v747 = vpop.f32.mrf.mxu0
        %v748 = vadd.f32 0.0, %v747
        %v749 = vpop.f32.mrf.mxu0
        %750 = vmatprep.mubr.bf16.mxu0 0
        %751 = vmatmul.mubr.bf16.gmra.mxu0 %v664
        %v752 = vpop.f32.mrf.mxu0
        %v753 = vadd.f32 0.0, %v752
        %v754 = vpop.f32.mrf.mxu0
        %v755 = vpop.f32.mrf.mxu0
        %v756 = vadd.f32 0.0, %v755
        %v757 = vpop.f32.mrf.mxu0
        %758 = vmatprep.mubr.bf16.mxu0 0
        %759 = vmatmul.mubr.bf16.gmra.mxu0 %v667
        %v760 = vpop.f32.mrf.mxu0
        %v761 = vadd.f32 0.0, %v760
        %v762 = vpop.f32.mrf.mxu0
        %v763 = vpop.f32.mrf.mxu0
        %v764 = vadd.f32 0.0, %v763
        %v765 = vpop.f32.mrf.mxu0
        %766 = vmatprep.mubr.bf16.mxu0 0
        %767 = vmatmul.mubr.bf16.gmra.mxu0 %v670
        %v768 = vpop.f32.mrf.mxu0
        %v769 = vadd.f32 0.0, %v768
        %v770 = vpop.f32.mrf.mxu0
        %v771 = vpop.f32.mrf.mxu0
        %v772 = vadd.f32 0.0, %v771
        %v773 = vpop.f32.mrf.mxu0
        %774 = vmatprep.mubr.bf16.mxu0 0
        %775 = vmatmul.mubr.bf16.gmra.mxu0 %v673
        %v776 = vpop.f32.mrf.mxu0
        %v777 = vadd.f32 0.0, %v776
        %v778 = vpop.f32.mrf.mxu0
        %v779 = vpop.f32.mrf.mxu0
        %v780 = vadd.f32 0.0, %v779
        %v781 = vpop.f32.mrf.mxu0
        %782 = vmatprep.mubr.bf16.mxu0 0
        %783 = vmatmul.mubr.bf16.gmra.mxu0 %v676
        %v784 = vpop.f32.mrf.mxu0
        %v785 = vadd.f32 0.0, %v784
        %v786 = vpop.f32.mrf.mxu0
        %v787 = vpop.f32.mrf.mxu0
        %v788 = vadd.f32 0.0, %v787
        %v789 = vpop.f32.mrf.mxu0
        %790 = vmatprep.mubr.bf16.mxu0 0
        %791 = vmatmul.mubr.bf16.gmra.mxu0 %v679
        %v792 = vpop.f32.mrf.mxu0
        %v793 = vadd.f32 0.0, %v792
        %v794 = vpop.f32.mrf.mxu0
        %v795 = vpop.f32.mrf.mxu0
        %v796 = vadd.f32 0.0, %v795
        %v797 = vpop.f32.mrf.mxu0
        %798 = vmatprep.mubr.bf16.mxu0 0
        %799 = vmatmul.mubr.bf16.gmra.mxu0 %v682
        %v800 = vpop.f32.mrf.mxu0
        %v801 = vadd.f32 0.0, %v800
        %v802 = vpop.f32.mrf.mxu0
        %v803 = vpop.f32.mrf.mxu0
        %v804 = vadd.f32 0.0, %v803
        %v805 = vpop.f32.mrf.mxu0
        %806 = vmatprep.mubr.bf16.mxu0 0
        %807 = vmatmul.mubr.bf16.gmra.mxu0 %v685
        %v808 = vpop.f32.mrf.mxu0
        %v809 = vadd.f32 0.0, %v808
        %v810 = vpop.f32.mrf.mxu0
        %v811 = vpop.f32.mrf.mxu0
        %v812 = vadd.f32 0.0, %v811
        %v813 = vpop.f32.mrf.mxu0
        %814 = vmatprep.mubr.bf16.mxu0 0
        %815 = vmatmul.mubr.bf16.gmra.mxu0 %v688
        %v816 = vpop.f32.mrf.mxu0
        %v817 = vadd.f32 0.0, %v816
        %v818 = vpop.f32.mrf.mxu0
        %v819 = vpop.f32.mrf.mxu0
        %v820 = vpop.f32.mrf.mxu0
        %821 = vdwg.mxu0
        %v822 = vlaneseq
        %v823 = vshrl.u32 %v822, 7
        %v824 = vsub.s32 0, %v823
        %v825 = vrot.slane %v551, %v824
        %v826 = vmul.f32 %v729, %v825
        %v827 = vmul.f32 %v732, %v825
        %v828 = vmul.f32 %v737, %v825
        %v829 = vmul.f32 %v740, %v825
        %v830 = vmul.f32 %v745, %v825
        %v831 = vmul.f32 %v748, %v825
        %v832 = vmul.f32 %v753, %v825
        %v833 = vmul.f32 %v756, %v825
        %v834 = vmul.f32 %v761, %v825
        %v835 = vmul.f32 %v764, %v825
        %v836 = vmul.f32 %v769, %v825
        %v837 = vmul.f32 %v772, %v825
        %v838 = vmul.f32 %v777, %v825
        %v839 = vmul.f32 %v780, %v825
        %v840 = vmul.f32 %v785, %v825
        %v841 = vmul.f32 %v788, %v825
        %v842 = vmul.f32 %v793, %v825
        %v843 = vmul.f32 %v796, %v825
        %v844 = vmul.f32 %v801, %v825
        %v845 = vmul.f32 %v804, %v825
        %v846 = vmul.f32 %v809, %v825
        %v847 = vmul.f32 %v812, %v825
        %v848 = vmul.f32 %v817, %v825
        %v849 = vlaneseq
        %v850 = vshrl.u32 %v849, 7
        %v851 = vsub.s32 1, %v850
        %v852 = vrot.slane %v551, %v851
        %v853 = vadd.f32 %v826, %v852
        %v854 = vadd.f32 %v827, %v852
        %v855 = vadd.f32 %v828, %v852
        %v856 = vadd.f32 %v829, %v852
        %v857 = vadd.f32 %v830, %v852
        %v858 = vadd.f32 %v831, %v852
        %v859 = vadd.f32 %v832, %v852
        %v860 = vadd.f32 %v833, %v852
        %v861 = vadd.f32 %v834, %v852
        %v862 = vadd.f32 %v835, %v852
        %v863 = vadd.f32 %v836, %v852
        %v864 = vadd.f32 %v837, %v852
        %v865 = vadd.f32 %v838, %v852
        %v866 = vadd.f32 %v839, %v852
        %v867 = vadd.f32 %v840, %v852
        %v868 = vadd.f32 %v841, %v852
        %v869 = vadd.f32 %v842, %v852
        %v870 = vadd.f32 %v843, %v852
        %v871 = vadd.f32 %v844, %v852
        %v872 = vadd.f32 %v845, %v852
        %v873 = vadd.f32 %v846, %v852
        %v874 = vadd.f32 %v847, %v852
        %v875 = vadd.f32 %v848, %v852
        %v876 = vmax.f32 %v853, 0.0
        %v877 = vmax.f32 %v854, 0.0
        %v878 = vmax.f32 %v855, 0.0
        %v879 = vmax.f32 %v856, 0.0
        %v880 = vmax.f32 %v857, 0.0
        %v881 = vmax.f32 %v858, 0.0
        %v882 = vmax.f32 %v859, 0.0
        %v883 = vmax.f32 %v860, 0.0
        %v884 = vmax.f32 %v861, 0.0
        %v885 = vmax.f32 %v862, 0.0
        %v886 = vmax.f32 %v863, 0.0
        %v887 = vmax.f32 %v864, 0.0
        %v888 = vmax.f32 %v865, 0.0
        %v889 = vmax.f32 %v866, 0.0
        %v890 = vmax.f32 %v867, 0.0
        %v891 = vmax.f32 %v868, 0.0
        %v892 = vmax.f32 %v869, 0.0
        %v893 = vmax.f32 %v870, 0.0
        %v894 = vmax.f32 %v871, 0.0
        %v895 = vmax.f32 %v872, 0.0
        %v896 = vmax.f32 %v873, 0.0
        %v897 = vmax.f32 %v874, 0.0
        %v898 = vmax.f32 %v875, 0.0
        %v922 = vcombine.high %v876, %v876
        %v924 = vunpack.c.l.s4 1983009808
        %v925 = vunpack.c.0.s8 %v924
        %v926 = vlaneseq
        %v927 = vshrl.u32 %v926, 7
        %v928 = vsub.s32 %v925, %v927
        %v929 = vrot.slane %v876, %v928
        %v931 = vunpack.c.l.s4 1983009808
        %v932 = vunpack.c.0.s8 %v931
        %v933 = vlaneseq
        %v934 = vshrl.u32 %v933, 7
        %v935 = vsub.s32 %v932, %v934
        %v936 = vrot.slane %v922, %v935
        %v937 = vcombine.high %v929, %v929
        %v938 = vcombine.high %v936, %v936
        %v939 = vcombine.high %v877, %v877
        %v941 = vunpack.c.l.s4 1983009808
        %v942 = vunpack.c.0.s8 %v941
        %v943 = vlaneseq
        %v944 = vshrl.u32 %v943, 7
        %v945 = vsub.s32 %v942, %v944
        %v946 = vrot.slane %v877, %v945
        %v948 = vunpack.c.l.s4 1983009808
        %v949 = vunpack.c.0.s8 %v948
        %v950 = vlaneseq
        %v951 = vshrl.u32 %v950, 7
        %v952 = vsub.s32 %v949, %v951
        %v953 = vrot.slane %v939, %v952
        %v954 = vcombine.high %v946, %v946
        %v955 = vcombine.high %v953, %v953
        %v956 = vcombine.high %v878, %v878
        %v958 = vunpack.c.l.s4 1983009808
        %v959 = vunpack.c.0.s8 %v958
        %v960 = vlaneseq
        %v961 = vshrl.u32 %v960, 7
        %v962 = vsub.s32 %v959, %v961
        %v963 = vrot.slane %v878, %v962
        %v965 = vunpack.c.l.s4 1983009808
        %v966 = vunpack.c.0.s8 %v965
        %v967 = vlaneseq
        %v968 = vshrl.u32 %v967, 7
        %v969 = vsub.s32 %v966, %v968
        %v970 = vrot.slane %v956, %v969
        %v971 = vcombine.high %v963, %v963
        %v972 = vcombine.high %v970, %v970
        %v973 = vcombine.high %v879, %v879
        %v975 = vunpack.c.l.s4 1983009808
        %v976 = vunpack.c.0.s8 %v975
        %v977 = vlaneseq
        %v978 = vshrl.u32 %v977, 7
        %v979 = vsub.s32 %v976, %v978
        %v980 = vrot.slane %v879, %v979
        %v982 = vunpack.c.l.s4 1983009808
        %v983 = vunpack.c.0.s8 %v982
        %v984 = vlaneseq
        %v985 = vshrl.u32 %v984, 7
        %v986 = vsub.s32 %v983, %v985
        %v987 = vrot.slane %v973, %v986
        %v988 = vcombine.high %v980, %v980
        %v989 = vcombine.high %v987, %v987
        %v990 = vcombine.high %v880, %v880
        %v992 = vunpack.c.l.s4 1983009808
        %v993 = vunpack.c.0.s8 %v992
        %v994 = vlaneseq
        %v995 = vshrl.u32 %v994, 7
        %v996 = vsub.s32 %v993, %v995
        %v997 = vrot.slane %v880, %v996
        %v999 = vunpack.c.l.s4 1983009808
        %v1000 = vunpack.c.0.s8 %v999
        %v1001 = vlaneseq
        %v1002 = vshrl.u32 %v1001, 7
        %v1003 = vsub.s32 %v1000, %v1002
        %v1004 = vrot.slane %v990, %v1003
        %v1005 = vcombine.high %v997, %v997
        %v1006 = vcombine.high %v1004, %v1004
        %v1007 = vcombine.high %v881, %v881
        %v1009 = vunpack.c.l.s4 1983009808
        %v1010 = vunpack.c.0.s8 %v1009
        %v1011 = vlaneseq
        %v1012 = vshrl.u32 %v1011, 7
        %v1013 = vsub.s32 %v1010, %v1012
        %v1014 = vrot.slane %v881, %v1013
        %v1016 = vunpack.c.l.s4 1983009808
        %v1017 = vunpack.c.0.s8 %v1016
        %v1018 = vlaneseq
        %v1019 = vshrl.u32 %v1018, 7
        %v1020 = vsub.s32 %v1017, %v1019
        %v1021 = vrot.slane %v1007, %v1020
        %v1022 = vcombine.high %v1014, %v1014
        %v1023 = vcombine.high %v1021, %v1021
        %v1024 = vcombine.high %v882, %v882
        %v1026 = vunpack.c.l.s4 1983009808
        %v1027 = vunpack.c.0.s8 %v1026
        %v1028 = vlaneseq
        %v1029 = vshrl.u32 %v1028, 7
        %v1030 = vsub.s32 %v1027, %v1029
        %v1031 = vrot.slane %v882, %v1030
        %v1033 = vunpack.c.l.s4 1983009808
        %v1034 = vunpack.c.0.s8 %v1033
        %v1035 = vlaneseq
        %v1036 = vshrl.u32 %v1035, 7
        %v1037 = vsub.s32 %v1034, %v1036
        %v1038 = vrot.slane %v1024, %v1037
        %v1039 = vcombine.high %v1031, %v1031
        %v1040 = vcombine.high %v1038, %v1038
        %v1041 = vcombine.high %v883, %v883
        %v1043 = vunpack.c.l.s4 1983009808
        %v1044 = vunpack.c.0.s8 %v1043
        %v1045 = vlaneseq
        %v1046 = vshrl.u32 %v1045, 7
        %v1047 = vsub.s32 %v1044, %v1046
        %v1048 = vrot.slane %v883, %v1047
        %v1050 = vunpack.c.l.s4 1983009808
        %v1051 = vunpack.c.0.s8 %v1050
        %v1052 = vlaneseq
        %v1053 = vshrl.u32 %v1052, 7
        %v1054 = vsub.s32 %v1051, %v1053
        %v1055 = vrot.slane %v1041, %v1054
        %v1056 = vcombine.high %v1048, %v1048
        %v1057 = vcombine.high %v1055, %v1055
        %v1058 = vcombine.high %v884, %v884
        %v1060 = vunpack.c.l.s4 1983009808
        %v1061 = vunpack.c.0.s8 %v1060
        %v1062 = vlaneseq
        %v1063 = vshrl.u32 %v1062, 7
        %v1064 = vsub.s32 %v1061, %v1063
        %v1065 = vrot.slane %v884, %v1064
        %v1067 = vunpack.c.l.s4 1983009808
        %v1068 = vunpack.c.0.s8 %v1067
        %v1069 = vlaneseq
        %v1070 = vshrl.u32 %v1069, 7
        %v1071 = vsub.s32 %v1068, %v1070
        %v1072 = vrot.slane %v1058, %v1071
        %v1073 = vcombine.high %v1065, %v1065
        %v1074 = vcombine.high %v1072, %v1072
        %v1075 = vcombine.high %v885, %v885
        %v1077 = vunpack.c.l.s4 1983009808
        %v1078 = vunpack.c.0.s8 %v1077
        %v1079 = vlaneseq
        %v1080 = vshrl.u32 %v1079, 7
        %v1081 = vsub.s32 %v1078, %v1080
        %v1082 = vrot.slane %v885, %v1081
        %v1084 = vunpack.c.l.s4 1983009808
        %v1085 = vunpack.c.0.s8 %v1084
        %v1086 = vlaneseq
        %v1087 = vshrl.u32 %v1086, 7
        %v1088 = vsub.s32 %v1085, %v1087
        %v1089 = vrot.slane %v1075, %v1088
        %v1090 = vcombine.high %v1082, %v1082
        %v1091 = vcombine.high %v1089, %v1089
        %v1092 = vcombine.high %v886, %v886
        %v1094 = vunpack.c.l.s4 1983009808
        %v1095 = vunpack.c.0.s8 %v1094
        %v1096 = vlaneseq
        %v1097 = vshrl.u32 %v1096, 7
        %v1098 = vsub.s32 %v1095, %v1097
        %v1099 = vrot.slane %v886, %v1098
        %v1101 = vunpack.c.l.s4 1983009808
        %v1102 = vunpack.c.0.s8 %v1101
        %v1103 = vlaneseq
        %v1104 = vshrl.u32 %v1103, 7
        %v1105 = vsub.s32 %v1102, %v1104
        %v1106 = vrot.slane %v1092, %v1105
        %v1107 = vcombine.high %v1099, %v1099
        %v1108 = vcombine.high %v1106, %v1106
        %v1109 = vcombine.high %v887, %v887
        %v1111 = vunpack.c.l.s4 1983009808
        %v1112 = vunpack.c.0.s8 %v1111
        %v1113 = vlaneseq
        %v1114 = vshrl.u32 %v1113, 7
        %v1115 = vsub.s32 %v1112, %v1114
        %v1116 = vrot.slane %v887, %v1115
        %v1118 = vunpack.c.l.s4 1983009808
        %v1119 = vunpack.c.0.s8 %v1118
        %v1120 = vlaneseq
        %v1121 = vshrl.u32 %v1120, 7
        %v1122 = vsub.s32 %v1119, %v1121
        %v1123 = vrot.slane %v1109, %v1122
        %v1124 = vcombine.high %v1116, %v1116
        %v1125 = vcombine.high %v1123, %v1123
        %v1126 = vcombine.high %v888, %v888
        %v1128 = vunpack.c.l.s4 1983009808
        %v1129 = vunpack.c.0.s8 %v1128
        %v1130 = vlaneseq
        %v1131 = vshrl.u32 %v1130, 7
        %v1132 = vsub.s32 %v1129, %v1131
        %v1133 = vrot.slane %v888, %v1132
        %v1135 = vunpack.c.l.s4 1983009808
        %v1136 = vunpack.c.0.s8 %v1135
        %v1137 = vlaneseq
        %v1138 = vshrl.u32 %v1137, 7
        %v1139 = vsub.s32 %v1136, %v1138
        %v1140 = vrot.slane %v1126, %v1139
        %v1141 = vcombine.high %v1133, %v1133
        %v1142 = vcombine.high %v1140, %v1140
        %v1143 = vcombine.high %v889, %v889
        %v1145 = vunpack.c.l.s4 1983009808
        %v1146 = vunpack.c.0.s8 %v1145
        %v1147 = vlaneseq
        %v1148 = vshrl.u32 %v1147, 7
        %v1149 = vsub.s32 %v1146, %v1148
        %v1150 = vrot.slane %v889, %v1149
        %v1152 = vunpack.c.l.s4 1983009808
        %v1153 = vunpack.c.0.s8 %v1152
        %v1154 = vlaneseq
        %v1155 = vshrl.u32 %v1154, 7
        %v1156 = vsub.s32 %v1153, %v1155
        %v1157 = vrot.slane %v1143, %v1156
        %v1158 = vcombine.high %v1150, %v1150
        %v1159 = vcombine.high %v1157, %v1157
        %v1160 = vcombine.high %v890, %v890
        %v1162 = vunpack.c.l.s4 1983009808
        %v1163 = vunpack.c.0.s8 %v1162
        %v1164 = vlaneseq
        %v1165 = vshrl.u32 %v1164, 7
        %v1166 = vsub.s32 %v1163, %v1165
        %v1167 = vrot.slane %v890, %v1166
        %v1169 = vunpack.c.l.s4 1983009808
        %v1170 = vunpack.c.0.s8 %v1169
        %v1171 = vlaneseq
        %v1172 = vshrl.u32 %v1171, 7
        %v1173 = vsub.s32 %v1170, %v1172
        %v1174 = vrot.slane %v1160, %v1173
        %v1175 = vcombine.high %v1167, %v1167
        %v1176 = vcombine.high %v1174, %v1174
        %v1177 = vcombine.high %v891, %v891
        %v1179 = vunpack.c.l.s4 1983009808
        %v1180 = vunpack.c.0.s8 %v1179
        %v1181 = vlaneseq
        %v1182 = vshrl.u32 %v1181, 7
        %v1183 = vsub.s32 %v1180, %v1182
        %v1184 = vrot.slane %v891, %v1183
        %v1186 = vunpack.c.l.s4 1983009808
        %v1187 = vunpack.c.0.s8 %v1186
        %v1188 = vlaneseq
        %v1189 = vshrl.u32 %v1188, 7
        %v1190 = vsub.s32 %v1187, %v1189
        %v1191 = vrot.slane %v1177, %v1190
        %v1192 = vcombine.high %v1184, %v1184
        %v1193 = vcombine.high %v1191, %v1191
        %v1194 = vcombine.high %v892, %v892
        %v1196 = vunpack.c.l.s4 1983009808
        %v1197 = vunpack.c.0.s8 %v1196
        %v1198 = vlaneseq
        %v1199 = vshrl.u32 %v1198, 7
        %v1200 = vsub.s32 %v1197, %v1199
        %v1201 = vrot.slane %v892, %v1200
        %v1203 = vunpack.c.l.s4 1983009808
        %v1204 = vunpack.c.0.s8 %v1203
        %v1205 = vlaneseq
        %v1206 = vshrl.u32 %v1205, 7
        %v1207 = vsub.s32 %v1204, %v1206
        %v1208 = vrot.slane %v1194, %v1207
        %v1209 = vcombine.high %v1201, %v1201
        %v1210 = vcombine.high %v1208, %v1208
        %v1211 = vcombine.high %v893, %v893
        %v1213 = vunpack.c.l.s4 1983009808
        %v1214 = vunpack.c.0.s8 %v1213
        %v1215 = vlaneseq
        %v1216 = vshrl.u32 %v1215, 7
        %v1217 = vsub.s32 %v1214, %v1216
        %v1218 = vrot.slane %v893, %v1217
        %v1220 = vunpack.c.l.s4 1983009808
        %v1221 = vunpack.c.0.s8 %v1220
        %v1222 = vlaneseq
        %v1223 = vshrl.u32 %v1222, 7
        %v1224 = vsub.s32 %v1221, %v1223
        %v1225 = vrot.slane %v1211, %v1224
        %v1226 = vcombine.high %v1218, %v1218
        %v1227 = vcombine.high %v1225, %v1225
        %v1228 = vcombine.high %v894, %v894
        %v1230 = vunpack.c.l.s4 1983009808
        %v1231 = vunpack.c.0.s8 %v1230
        %v1232 = vlaneseq
        %v1233 = vshrl.u32 %v1232, 7
        %v1234 = vsub.s32 %v1231, %v1233
        %v1235 = vrot.slane %v894, %v1234
        %v1237 = vunpack.c.l.s4 1983009808
        %v1238 = vunpack.c.0.s8 %v1237
        %v1239 = vlaneseq
        %v1240 = vshrl.u32 %v1239, 7
        %v1241 = vsub.s32 %v1238, %v1240
        %v1242 = vrot.slane %v1228, %v1241
        %v1243 = vcombine.high %v1235, %v1235
        %v1244 = vcombine.high %v1242, %v1242
        %v1245 = vcombine.high %v895, %v895
        %v1247 = vunpack.c.l.s4 1983009808
        %v1248 = vunpack.c.0.s8 %v1247
        %v1249 = vlaneseq
        %v1250 = vshrl.u32 %v1249, 7
        %v1251 = vsub.s32 %v1248, %v1250
        %v1252 = vrot.slane %v895, %v1251
        %v1254 = vunpack.c.l.s4 1983009808
        %v1255 = vunpack.c.0.s8 %v1254
        %v1256 = vlaneseq
        %v1257 = vshrl.u32 %v1256, 7
        %v1258 = vsub.s32 %v1255, %v1257
        %v1259 = vrot.slane %v1245, %v1258
        %v1260 = vcombine.high %v1252, %v1252
        %v1261 = vcombine.high %v1259, %v1259
        %v1262 = vcombine.high %v896, %v896
        %v1264 = vunpack.c.l.s4 1983009808
        %v1265 = vunpack.c.0.s8 %v1264
        %v1266 = vlaneseq
        %v1267 = vshrl.u32 %v1266, 7
        %v1268 = vsub.s32 %v1265, %v1267
        %v1269 = vrot.slane %v896, %v1268
        %v1271 = vunpack.c.l.s4 1983009808
        %v1272 = vunpack.c.0.s8 %v1271
        %v1273 = vlaneseq
        %v1274 = vshrl.u32 %v1273, 7
        %v1275 = vsub.s32 %v1272, %v1274
        %v1276 = vrot.slane %v1262, %v1275
        %v1277 = vcombine.high %v1269, %v1269
        %v1278 = vcombine.high %v1276, %v1276
        %v1279 = vcombine.high %v897, %v897
        %v1281 = vunpack.c.l.s4 1983009808
        %v1282 = vunpack.c.0.s8 %v1281
        %v1283 = vlaneseq
        %v1284 = vshrl.u32 %v1283, 7
        %v1285 = vsub.s32 %v1282, %v1284
        %v1286 = vrot.slane %v897, %v1285
        %v1288 = vunpack.c.l.s4 1983009808
        %v1289 = vunpack.c.0.s8 %v1288
        %v1290 = vlaneseq
        %v1291 = vshrl.u32 %v1290, 7
        %v1292 = vsub.s32 %v1289, %v1291
        %v1293 = vrot.slane %v1279, %v1292
        %v1294 = vcombine.high %v1286, %v1286
        %v1295 = vcombine.high %v1293, %v1293
        %v1297 = vunpack.c.l.s4 1983009808
        %v1298 = vunpack.c.0.s8 %v1297
        %v1299 = vlaneseq
        %v1300 = vshrl.u32 %v1299, 7
        %v1301 = vsub.s32 %v1298, %v1300
        %v1302 = vrot.slane %v898, %v1301
        %v1303 = vcombine.high %v1302, %v1302
        %v1425 = vunpack.c.l.s4 269488144
        %v1426 = vunpack.c.0.s8 %v1425
        %v1427 = vlaneseq
        %v1428 = vshrl.u32 %v1427, 7
        %v1429 = vsub.s32 %v1426, %v1428
        %v1430 = vrot.slane %v521, %v1429
        %v1432 = vunpack.c.l.s4 842150450
        %v1433 = vunpack.c.0.s8 %v1432
        %v1434 = vlaneseq
        %v1435 = vshrl.u32 %v1434, 7
        %v1436 = vsub.s32 %v1433, %v1435
        %v1437 = vrot.slane %v521, %v1436
        %v1439 = vunpack.c.l.s4 1414812756
        %v1440 = vunpack.c.0.s8 %v1439
        %v1441 = vlaneseq
        %v1442 = vshrl.u32 %v1441, 7
        %v1443 = vsub.s32 %v1440, %v1442
        %v1444 = vrot.slane %v521, %v1443
        %v1446 = vunpack.c.l.s4 1987475062
        %v1447 = vunpack.c.0.s8 %v1446
        %v1448 = vlaneseq
        %v1449 = vshrl.u32 %v1448, 7
        %v1450 = vsub.s32 %v1447, %v1449
        %v1451 = vrot.slane %v521, %v1450
        %v1453 = vunpack.c.l.s4 269488144
        %v1454 = vunpack.c.0.s8 %v1453
        %v1455 = vlaneseq
        %v1456 = vshrl.u32 %v1455, 7
        %v1457 = vsub.s32 %v1454, %v1456
        %v1458 = vrot.slane %v522, %v1457
        %v1460 = vunpack.c.l.s4 842150450
        %v1461 = vunpack.c.0.s8 %v1460
        %v1462 = vlaneseq
        %v1463 = vshrl.u32 %v1462, 7
        %v1464 = vsub.s32 %v1461, %v1463
        %v1465 = vrot.slane %v522, %v1464
        %v1467 = vunpack.c.l.s4 1414812756
        %v1468 = vunpack.c.0.s8 %v1467
        %v1469 = vlaneseq
        %v1470 = vshrl.u32 %v1469, 7
        %v1471 = vsub.s32 %v1468, %v1470
        %v1472 = vrot.slane %v522, %v1471
        %v1474 = vunpack.c.l.s4 1987475062
        %v1475 = vunpack.c.0.s8 %v1474
        %v1476 = vlaneseq
        %v1477 = vshrl.u32 %v1476, 7
        %v1478 = vsub.s32 %v1475, %v1477
        %v1479 = vrot.slane %v522, %v1478
        %v1481 = vunpack.c.l.s4 269488144
        %v1482 = vunpack.c.0.s8 %v1481
        %v1483 = vlaneseq
        %v1484 = vshrl.u32 %v1483, 7
        %v1485 = vsub.s32 %v1482, %v1484
        %v1486 = vrot.slane %v523, %v1485
        %v1488 = vunpack.c.l.s4 269488144
        %v1489 = vunpack.c.0.s8 %v1488
        %v1490 = vlaneseq
        %v1491 = vshrl.u32 %v1490, 7
        %v1492 = vsub.s32 %v1489, %v1491
        %v1493 = vrot.slane %v524, %v1492
        %v1495 = vunpack.c.l.s4 842150450
        %v1496 = vunpack.c.0.s8 %v1495
        %v1497 = vlaneseq
        %v1498 = vshrl.u32 %v1497, 7
        %v1499 = vsub.s32 %v1496, %v1498
        %v1500 = vrot.slane %v524, %v1499
        %v1502 = vunpack.c.l.s4 1414812756
        %v1503 = vunpack.c.0.s8 %v1502
        %v1504 = vlaneseq
        %v1505 = vshrl.u32 %v1504, 7
        %v1506 = vsub.s32 %v1503, %v1505
        %v1507 = vrot.slane %v524, %v1506
        %v1509 = vunpack.c.l.s4 1987475062
        %v1510 = vunpack.c.0.s8 %v1509
        %v1511 = vlaneseq
        %v1512 = vshrl.u32 %v1511, 7
        %v1513 = vsub.s32 %v1510, %v1512
        %v1514 = vrot.slane %v524, %v1513
        %v1516 = vunpack.c.l.s4 269488144
        %v1517 = vunpack.c.0.s8 %v1516
        %v1518 = vlaneseq
        %v1519 = vshrl.u32 %v1518, 7
        %v1520 = vsub.s32 %v1517, %v1519
        %v1521 = vrot.slane %v525, %v1520
        %v1523 = vunpack.c.l.s4 842150450
        %v1524 = vunpack.c.0.s8 %v1523
        %v1525 = vlaneseq
        %v1526 = vshrl.u32 %v1525, 7
        %v1527 = vsub.s32 %v1524, %v1526
        %v1528 = vrot.slane %v525, %v1527
        %v1530 = vunpack.c.l.s4 1414812756
        %v1531 = vunpack.c.0.s8 %v1530
        %v1532 = vlaneseq
        %v1533 = vshrl.u32 %v1532, 7
        %v1534 = vsub.s32 %v1531, %v1533
        %v1535 = vrot.slane %v525, %v1534
        %v1537 = vunpack.c.l.s4 1987475062
        %v1538 = vunpack.c.0.s8 %v1537
        %v1539 = vlaneseq
        %v1540 = vshrl.u32 %v1539, 7
        %v1541 = vsub.s32 %v1538, %v1540
        %v1542 = vrot.slane %v525, %v1541
        %v1544 = vunpack.c.l.s4 269488144
        %v1545 = vunpack.c.0.s8 %v1544
        %v1546 = vlaneseq
        %v1547 = vshrl.u32 %v1546, 7
        %v1548 = vsub.s32 %v1545, %v1547
        %v1549 = vrot.slane %v526, %v1548
        %v1551 = vunpack.c.l.s4 269488144
        %v1552 = vunpack.c.0.s8 %v1551
        %v1553 = vlaneseq
        %v1554 = vshrl.u32 %v1553, 7
        %v1555 = vsub.s32 %v1552, %v1554
        %v1556 = vrot.slane %v527, %v1555
        %v1558 = vunpack.c.l.s4 842150450
        %v1559 = vunpack.c.0.s8 %v1558
        %v1560 = vlaneseq
        %v1561 = vshrl.u32 %v1560, 7
        %v1562 = vsub.s32 %v1559, %v1561
        %v1563 = vrot.slane %v527, %v1562
        %v1565 = vunpack.c.l.s4 1414812756
        %v1566 = vunpack.c.0.s8 %v1565
        %v1567 = vlaneseq
        %v1568 = vshrl.u32 %v1567, 7
        %v1569 = vsub.s32 %v1566, %v1568
        %v1570 = vrot.slane %v527, %v1569
        %v1572 = vunpack.c.l.s4 1987475062
        %v1573 = vunpack.c.0.s8 %v1572
        %v1574 = vlaneseq
        %v1575 = vshrl.u32 %v1574, 7
        %v1576 = vsub.s32 %v1573, %v1575
        %v1577 = vrot.slane %v527, %v1576
        %v1579 = vunpack.c.l.s4 269488144
        %v1580 = vunpack.c.0.s8 %v1579
        %v1581 = vlaneseq
        %v1582 = vshrl.u32 %v1581, 7
        %v1583 = vsub.s32 %v1580, %v1582
        %v1584 = vrot.slane %v528, %v1583
        %v1586 = vunpack.c.l.s4 842150450
        %v1587 = vunpack.c.0.s8 %v1586
        %v1588 = vlaneseq
        %v1589 = vshrl.u32 %v1588, 7
        %v1590 = vsub.s32 %v1587, %v1589
        %v1591 = vrot.slane %v528, %v1590
        %v1593 = vunpack.c.l.s4 1414812756
        %v1594 = vunpack.c.0.s8 %v1593
        %v1595 = vlaneseq
        %v1596 = vshrl.u32 %v1595, 7
        %v1597 = vsub.s32 %v1594, %v1596
        %v1598 = vrot.slane %v528, %v1597
        %v1600 = vunpack.c.l.s4 1987475062
        %v1601 = vunpack.c.0.s8 %v1600
        %v1602 = vlaneseq
        %v1603 = vshrl.u32 %v1602, 7
        %v1604 = vsub.s32 %v1601, %v1603
        %v1605 = vrot.slane %v528, %v1604
        %v1607 = vunpack.c.l.s4 269488144
        %v1608 = vunpack.c.0.s8 %v1607
        %v1609 = vlaneseq
        %v1610 = vshrl.u32 %v1609, 7
        %v1611 = vsub.s32 %v1608, %v1610
        %v1612 = vrot.slane %v529, %v1611
        %v1614 = vunpack.c.l.s4 269488144
        %v1615 = vunpack.c.0.s8 %v1614
        %v1616 = vlaneseq
        %v1617 = vshrl.u32 %v1616, 7
        %v1618 = vsub.s32 %v1615, %v1617
        %v1619 = vrot.slane %v530, %v1618
        %v1621 = vunpack.c.l.s4 842150450
        %v1622 = vunpack.c.0.s8 %v1621
        %v1623 = vlaneseq
        %v1624 = vshrl.u32 %v1623, 7
        %v1625 = vsub.s32 %v1622, %v1624
        %v1626 = vrot.slane %v530, %v1625
        %v1628 = vunpack.c.l.s4 1414812756
        %v1629 = vunpack.c.0.s8 %v1628
        %v1630 = vlaneseq
        %v1631 = vshrl.u32 %v1630, 7
        %v1632 = vsub.s32 %v1629, %v1631
        %v1633 = vrot.slane %v530, %v1632
        %v1635 = vunpack.c.l.s4 1987475062
        %v1636 = vunpack.c.0.s8 %v1635
        %v1637 = vlaneseq
        %v1638 = vshrl.u32 %v1637, 7
        %v1639 = vsub.s32 %v1636, %v1638
        %v1640 = vrot.slane %v530, %v1639
        %v1642 = vunpack.c.l.s4 269488144
        %v1643 = vunpack.c.0.s8 %v1642
        %v1644 = vlaneseq
        %v1645 = vshrl.u32 %v1644, 7
        %v1646 = vsub.s32 %v1643, %v1645
        %v1647 = vrot.slane %v531, %v1646
        %v1649 = vunpack.c.l.s4 842150450
        %v1650 = vunpack.c.0.s8 %v1649
        %v1651 = vlaneseq
        %v1652 = vshrl.u32 %v1651, 7
        %v1653 = vsub.s32 %v1650, %v1652
        %v1654 = vrot.slane %v531, %v1653
        %v1656 = vunpack.c.l.s4 1414812756
        %v1657 = vunpack.c.0.s8 %v1656
        %v1658 = vlaneseq
        %v1659 = vshrl.u32 %v1658, 7
        %v1660 = vsub.s32 %v1657, %v1659
        %v1661 = vrot.slane %v531, %v1660
        %v1663 = vunpack.c.l.s4 1987475062
        %v1664 = vunpack.c.0.s8 %v1663
        %v1665 = vlaneseq
        %v1666 = vshrl.u32 %v1665, 7
        %v1667 = vsub.s32 %v1664, %v1666
        %v1668 = vrot.slane %v531, %v1667
        %v1670 = vunpack.c.l.s4 269488144
        %v1671 = vunpack.c.0.s8 %v1670
        %v1672 = vlaneseq
        %v1673 = vshrl.u32 %v1672, 7
        %v1674 = vsub.s32 %v1671, %v1673
        %v1675 = vrot.slane %v532, %v1674
        %v1677 = vunpack.c.l.s4 269488144
        %v1678 = vunpack.c.0.s8 %v1677
        %v1679 = vlaneseq
        %v1680 = vshrl.u32 %v1679, 7
        %v1681 = vsub.s32 %v1678, %v1680
        %v1682 = vrot.slane %v533, %v1681
        %v1684 = vunpack.c.l.s4 842150450
        %v1685 = vunpack.c.0.s8 %v1684
        %v1686 = vlaneseq
        %v1687 = vshrl.u32 %v1686, 7
        %v1688 = vsub.s32 %v1685, %v1687
        %v1689 = vrot.slane %v533, %v1688
        %v1691 = vunpack.c.l.s4 1414812756
        %v1692 = vunpack.c.0.s8 %v1691
        %v1693 = vlaneseq
        %v1694 = vshrl.u32 %v1693, 7
        %v1695 = vsub.s32 %v1692, %v1694
        %v1696 = vrot.slane %v533, %v1695
        %v1698 = vunpack.c.l.s4 1987475062
        %v1699 = vunpack.c.0.s8 %v1698
        %v1700 = vlaneseq
        %v1701 = vshrl.u32 %v1700, 7
        %v1702 = vsub.s32 %v1699, %v1701
        %v1703 = vrot.slane %v533, %v1702
        %v1705 = vunpack.c.l.s4 269488144
        %v1706 = vunpack.c.0.s8 %v1705
        %v1707 = vlaneseq
        %v1708 = vshrl.u32 %v1707, 7
        %v1709 = vsub.s32 %v1706, %v1708
        %v1710 = vrot.slane %v534, %v1709
        %v1712 = vunpack.c.l.s4 842150450
        %v1713 = vunpack.c.0.s8 %v1712
        %v1714 = vlaneseq
        %v1715 = vshrl.u32 %v1714, 7
        %v1716 = vsub.s32 %v1713, %v1715
        %v1717 = vrot.slane %v534, %v1716
        %v1719 = vunpack.c.l.s4 1414812756
        %v1720 = vunpack.c.0.s8 %v1719
        %v1721 = vlaneseq
        %v1722 = vshrl.u32 %v1721, 7
        %v1723 = vsub.s32 %v1720, %v1722
        %v1724 = vrot.slane %v534, %v1723
        %v1726 = vunpack.c.l.s4 1987475062
        %v1727 = vunpack.c.0.s8 %v1726
        %v1728 = vlaneseq
        %v1729 = vshrl.u32 %v1728, 7
        %v1730 = vsub.s32 %v1727, %v1729
        %v1731 = vrot.slane %v534, %v1730
        %v1733 = vunpack.c.l.s4 269488144
        %v1734 = vunpack.c.0.s8 %v1733
        %v1735 = vlaneseq
        %v1736 = vshrl.u32 %v1735, 7
        %v1737 = vsub.s32 %v1734, %v1736
        %v1738 = vrot.slane %v535, %v1737
        %v1740 = vunpack.c.l.s4 269488144
        %v1741 = vunpack.c.0.s8 %v1740
        %v1742 = vlaneseq
        %v1743 = vshrl.u32 %v1742, 7
        %v1744 = vsub.s32 %v1741, %v1743
        %v1745 = vrot.slane %v536, %v1744
        %v1747 = vunpack.c.l.s4 842150450
        %v1748 = vunpack.c.0.s8 %v1747
        %v1749 = vlaneseq
        %v1750 = vshrl.u32 %v1749, 7
        %v1751 = vsub.s32 %v1748, %v1750
        %v1752 = vrot.slane %v536, %v1751
        %v1754 = vunpack.c.l.s4 1414812756
        %v1755 = vunpack.c.0.s8 %v1754
        %v1756 = vlaneseq
        %v1757 = vshrl.u32 %v1756, 7
        %v1758 = vsub.s32 %v1755, %v1757
        %v1759 = vrot.slane %v536, %v1758
        %v1761 = vunpack.c.l.s4 1987475062
        %v1762 = vunpack.c.0.s8 %v1761
        %v1763 = vlaneseq
        %v1764 = vshrl.u32 %v1763, 7
        %v1765 = vsub.s32 %v1762, %v1764
        %v1766 = vrot.slane %v536, %v1765
        %v1768 = vunpack.c.l.s4 269488144
        %v1769 = vunpack.c.0.s8 %v1768
        %v1770 = vlaneseq
        %v1771 = vshrl.u32 %v1770, 7
        %v1772 = vsub.s32 %v1769, %v1771
        %v1773 = vrot.slane %v537, %v1772
        %v1775 = vunpack.c.l.s4 842150450
        %v1776 = vunpack.c.0.s8 %v1775
        %v1777 = vlaneseq
        %v1778 = vshrl.u32 %v1777, 7
        %v1779 = vsub.s32 %v1776, %v1778
        %v1780 = vrot.slane %v537, %v1779
        %v1782 = vunpack.c.l.s4 1414812756
        %v1783 = vunpack.c.0.s8 %v1782
        %v1784 = vlaneseq
        %v1785 = vshrl.u32 %v1784, 7
        %v1786 = vsub.s32 %v1783, %v1785
        %v1787 = vrot.slane %v537, %v1786
        %v1789 = vunpack.c.l.s4 1987475062
        %v1790 = vunpack.c.0.s8 %v1789
        %v1791 = vlaneseq
        %v1792 = vshrl.u32 %v1791, 7
        %v1793 = vsub.s32 %v1790, %v1792
        %v1794 = vrot.slane %v537, %v1793
        %v1796 = vunpack.c.l.s4 269488144
        %v1797 = vunpack.c.0.s8 %v1796
        %v1798 = vlaneseq
        %v1799 = vshrl.u32 %v1798, 7
        %v1800 = vsub.s32 %v1797, %v1799
        %v1801 = vrot.slane %v538, %v1800
        %v1803 = vunpack.c.l.s4 269488144
        %v1804 = vunpack.c.0.s8 %v1803
        %v1805 = vlaneseq
        %v1806 = vshrl.u32 %v1805, 7
        %v1807 = vsub.s32 %v1804, %v1806
        %v1808 = vrot.slane %v539, %v1807
        %v1810 = vunpack.c.l.s4 842150450
        %v1811 = vunpack.c.0.s8 %v1810
        %v1812 = vlaneseq
        %v1813 = vshrl.u32 %v1812, 7
        %v1814 = vsub.s32 %v1811, %v1813
        %v1815 = vrot.slane %v539, %v1814
        %v1817 = vunpack.c.l.s4 1414812756
        %v1818 = vunpack.c.0.s8 %v1817
        %v1819 = vlaneseq
        %v1820 = vshrl.u32 %v1819, 7
        %v1821 = vsub.s32 %v1818, %v1820
        %v1822 = vrot.slane %v539, %v1821
        %v1824 = vunpack.c.l.s4 1987475062
        %v1825 = vunpack.c.0.s8 %v1824
        %v1826 = vlaneseq
        %v1827 = vshrl.u32 %v1826, 7
        %v1828 = vsub.s32 %v1825, %v1827
        %v1829 = vrot.slane %v539, %v1828
        %v1831 = vunpack.c.l.s4 269488144
        %v1832 = vunpack.c.0.s8 %v1831
        %v1833 = vlaneseq
        %v1834 = vshrl.u32 %v1833, 7
        %v1835 = vsub.s32 %v1832, %v1834
        %v1836 = vrot.slane %v540, %v1835
        %v1838 = vunpack.c.l.s4 842150450
        %v1839 = vunpack.c.0.s8 %v1838
        %v1840 = vlaneseq
        %v1841 = vshrl.u32 %v1840, 7
        %v1842 = vsub.s32 %v1839, %v1841
        %v1843 = vrot.slane %v540, %v1842
        %v1845 = vunpack.c.l.s4 1414812756
        %v1846 = vunpack.c.0.s8 %v1845
        %v1847 = vlaneseq
        %v1848 = vshrl.u32 %v1847, 7
        %v1849 = vsub.s32 %v1846, %v1848
        %v1850 = vrot.slane %v540, %v1849
        %v1852 = vunpack.c.l.s4 1987475062
        %v1853 = vunpack.c.0.s8 %v1852
        %v1854 = vlaneseq
        %v1855 = vshrl.u32 %v1854, 7
        %v1856 = vsub.s32 %v1853, %v1855
        %v1857 = vrot.slane %v540, %v1856
        %v1859 = vunpack.c.l.s4 269488144
        %v1860 = vunpack.c.0.s8 %v1859
        %v1861 = vlaneseq
        %v1862 = vshrl.u32 %v1861, 7
        %v1863 = vsub.s32 %v1860, %v1862
        %v1864 = vrot.slane %v541, %v1863
        %v1866 = vunpack.c.l.s4 269488144
        %v1867 = vunpack.c.0.s8 %v1866
        %v1868 = vlaneseq
        %v1869 = vshrl.u32 %v1868, 7
        %v1870 = vsub.s32 %v1867, %v1869
        %v1871 = vrot.slane %v542, %v1870
        %v1873 = vunpack.c.l.s4 842150450
        %v1874 = vunpack.c.0.s8 %v1873
        %v1875 = vlaneseq
        %v1876 = vshrl.u32 %v1875, 7
        %v1877 = vsub.s32 %v1874, %v1876
        %v1878 = vrot.slane %v542, %v1877
        %v1880 = vunpack.c.l.s4 1414812756
        %v1881 = vunpack.c.0.s8 %v1880
        %v1882 = vlaneseq
        %v1883 = vshrl.u32 %v1882, 7
        %v1884 = vsub.s32 %v1881, %v1883
        %v1885 = vrot.slane %v542, %v1884
        %v1887 = vunpack.c.l.s4 1987475062
        %v1888 = vunpack.c.0.s8 %v1887
        %v1889 = vlaneseq
        %v1890 = vshrl.u32 %v1889, 7
        %v1891 = vsub.s32 %v1888, %v1890
        %v1892 = vrot.slane %v542, %v1891
        %v1894 = vunpack.c.l.s4 269488144
        %v1895 = vunpack.c.0.s8 %v1894
        %v1896 = vlaneseq
        %v1897 = vshrl.u32 %v1896, 7
        %v1898 = vsub.s32 %v1895, %v1897
        %v1899 = vrot.slane %v543, %v1898
        %v1901 = vunpack.c.l.s4 842150450
        %v1902 = vunpack.c.0.s8 %v1901
        %v1903 = vlaneseq
        %v1904 = vshrl.u32 %v1903, 7
        %v1905 = vsub.s32 %v1902, %v1904
        %v1906 = vrot.slane %v543, %v1905
        %v1908 = vunpack.c.l.s4 1414812756
        %v1909 = vunpack.c.0.s8 %v1908
        %v1910 = vlaneseq
        %v1911 = vshrl.u32 %v1910, 7
        %v1912 = vsub.s32 %v1909, %v1911
        %v1913 = vrot.slane %v543, %v1912
        %v1915 = vunpack.c.l.s4 1987475062
        %v1916 = vunpack.c.0.s8 %v1915
        %v1917 = vlaneseq
        %v1918 = vshrl.u32 %v1917, 7
        %v1919 = vsub.s32 %v1916, %v1918
        %v1920 = vrot.slane %v543, %v1919
        %v1922 = vunpack.c.l.s4 269488144
        %v1923 = vunpack.c.0.s8 %v1922
        %v1924 = vlaneseq
        %v1925 = vshrl.u32 %v1924, 7
        %v1926 = vsub.s32 %v1923, %v1925
        %v1927 = vrot.slane %v544, %v1926
        %v1929 = vunpack.c.l.s4 269488144
        %v1930 = vunpack.c.0.s8 %v1929
        %v1931 = vlaneseq
        %v1932 = vshrl.u32 %v1931, 7
        %v1933 = vsub.s32 %v1930, %v1932
        %v1934 = vrot.slane %v545, %v1933
        %v1936 = vunpack.c.l.s4 842150450
        %v1937 = vunpack.c.0.s8 %v1936
        %v1938 = vlaneseq
        %v1939 = vshrl.u32 %v1938, 7
        %v1940 = vsub.s32 %v1937, %v1939
        %v1941 = vrot.slane %v545, %v1940
        %v1943 = vunpack.c.l.s4 1414812756
        %v1944 = vunpack.c.0.s8 %v1943
        %v1945 = vlaneseq
        %v1946 = vshrl.u32 %v1945, 7
        %v1947 = vsub.s32 %v1944, %v1946
        %v1948 = vrot.slane %v545, %v1947
        %v1950 = vunpack.c.l.s4 1987475062
        %v1951 = vunpack.c.0.s8 %v1950
        %v1952 = vlaneseq
        %v1953 = vshrl.u32 %v1952, 7
        %v1954 = vsub.s32 %v1951, %v1953
        %v1955 = vrot.slane %v545, %v1954
        %v1957 = vunpack.c.l.s4 269488144
        %v1958 = vunpack.c.0.s8 %v1957
        %v1959 = vlaneseq
        %v1960 = vshrl.u32 %v1959, 7
        %v1961 = vsub.s32 %v1958, %v1960
        %v1962 = vrot.slane %v546, %v1961
        %v1964 = vunpack.c.l.s4 842150450
        %v1965 = vunpack.c.0.s8 %v1964
        %v1966 = vlaneseq
        %v1967 = vshrl.u32 %v1966, 7
        %v1968 = vsub.s32 %v1965, %v1967
        %v1969 = vrot.slane %v546, %v1968
        %v1971 = vunpack.c.l.s4 1414812756
        %v1972 = vunpack.c.0.s8 %v1971
        %v1973 = vlaneseq
        %v1974 = vshrl.u32 %v1973, 7
        %v1975 = vsub.s32 %v1972, %v1974
        %v1976 = vrot.slane %v546, %v1975
        %v1978 = vunpack.c.l.s4 1987475062
        %v1979 = vunpack.c.0.s8 %v1978
        %v1980 = vlaneseq
        %v1981 = vshrl.u32 %v1980, 7
        %v1982 = vsub.s32 %v1979, %v1981
        %v1983 = vrot.slane %v546, %v1982
        %v1985 = vunpack.c.l.s4 269488144
        %v1986 = vunpack.c.0.s8 %v1985
        %v1987 = vlaneseq
        %v1988 = vshrl.u32 %v1987, 7
        %v1989 = vsub.s32 %v1986, %v1988
        %v1990 = vrot.slane %v547, %v1989
        %v1992 = vunpack.c.l.s4 269488144
        %v1993 = vunpack.c.0.s8 %v1992
        %v1994 = vlaneseq
        %v1995 = vshrl.u32 %v1994, 7
        %v1996 = vsub.s32 %v1993, %v1995
        %v1997 = vrot.slane %v548, %v1996
        %v1999 = vunpack.c.l.s4 842150450
        %v2000 = vunpack.c.0.s8 %v1999
        %v2001 = vlaneseq
        %v2002 = vshrl.u32 %v2001, 7
        %v2003 = vsub.s32 %v2000, %v2002
        %v2004 = vrot.slane %v548, %v2003
        %v2006 = vunpack.c.l.s4 1414812756
        %v2007 = vunpack.c.0.s8 %v2006
        %v2008 = vlaneseq
        %v2009 = vshrl.u32 %v2008, 7
        %v2010 = vsub.s32 %v2007, %v2009
        %v2011 = vrot.slane %v548, %v2010
        %v2013 = vunpack.c.l.s4 1987475062
        %v2014 = vunpack.c.0.s8 %v2013
        %v2015 = vlaneseq
        %v2016 = vshrl.u32 %v2015, 7
        %v2017 = vsub.s32 %v2014, %v2016
        %v2018 = vrot.slane %v548, %v2017
        %v2020 = vunpack.c.l.s4 269488144
        %v2021 = vunpack.c.0.s8 %v2020
        %v2022 = vlaneseq
        %v2023 = vshrl.u32 %v2022, 7
        %v2024 = vsub.s32 %v2021, %v2023
        %v2025 = vrot.slane %v549, %v2024
        %v2027 = vunpack.c.l.s4 842150450
        %v2028 = vunpack.c.0.s8 %v2027
        %v2029 = vlaneseq
        %v2030 = vshrl.u32 %v2029, 7
        %v2031 = vsub.s32 %v2028, %v2030
        %v2032 = vrot.slane %v549, %v2031
        %v2034 = vunpack.c.l.s4 1414812756
        %v2035 = vunpack.c.0.s8 %v2034
        %v2036 = vlaneseq
        %v2037 = vshrl.u32 %v2036, 7
        %v2038 = vsub.s32 %v2035, %v2037
        %v2039 = vrot.slane %v549, %v2038
        %v2041 = vunpack.c.l.s4 1987475062
        %v2042 = vunpack.c.0.s8 %v2041
        %v2043 = vlaneseq
        %v2044 = vshrl.u32 %v2043, 7
        %v2045 = vsub.s32 %v2042, %v2044
        %v2046 = vrot.slane %v549, %v2045
        %v2048 = vunpack.c.l.s4 269488144
        %v2049 = vunpack.c.0.s8 %v2048
        %v2050 = vlaneseq
        %v2051 = vshrl.u32 %v2050, 7
        %v2052 = vsub.s32 %v2049, %v2051
        %v2053 = vrot.slane %v550, %v2052
        %v2144 = vmul.f32 %v929, %v1430
        %v2145 = vmul.f32 %v937, %v1437
        %v2146 = vmul.f32 %v936, %v1444
        %v2147 = vmul.f32 %v938, %v1451
        %v2148 = vmul.f32 %v946, %v1458
        %v2149 = vmul.f32 %v954, %v1465
        %v2150 = vmul.f32 %v953, %v1472
        %v2151 = vmul.f32 %v955, %v1479
        %v2152 = vmul.f32 %v963, %v1486
        %v2153 = vmul.f32 %v971, %v1493
        %v2154 = vmul.f32 %v970, %v1500
        %v2155 = vmul.f32 %v972, %v1507
        %v2156 = vmul.f32 %v980, %v1514
        %v2157 = vmul.f32 %v988, %v1521
        %v2158 = vmul.f32 %v987, %v1528
        %v2159 = vmul.f32 %v989, %v1535
        %v2160 = vmul.f32 %v997, %v1542
        %v2161 = vmul.f32 %v1005, %v1549
        %v2162 = vmul.f32 %v1004, %v1556
        %v2163 = vmul.f32 %v1006, %v1563
        %v2164 = vmul.f32 %v1014, %v1570
        %v2165 = vmul.f32 %v1022, %v1577
        %v2166 = vmul.f32 %v1021, %v1584
        %v2167 = vmul.f32 %v1023, %v1591
        %v2168 = vmul.f32 %v1031, %v1598
        %v2169 = vmul.f32 %v1039, %v1605
        %v2170 = vmul.f32 %v1038, %v1612
        %v2171 = vmul.f32 %v1040, %v1619
        %v2172 = vmul.f32 %v1048, %v1626
        %v2173 = vmul.f32 %v1056, %v1633
        %v2174 = vmul.f32 %v1055, %v1640
        %v2175 = vmul.f32 %v1057, %v1647
        %v2176 = vmul.f32 %v1065, %v1654
        %v2177 = vmul.f32 %v1073, %v1661
        %v2178 = vmul.f32 %v1072, %v1668
        %v2179 = vmul.f32 %v1074, %v1675
        %v2180 = vmul.f32 %v1082, %v1682
        %v2181 = vmul.f32 %v1090, %v1689
        %v2182 = vmul.f32 %v1089, %v1696
        %v2183 = vmul.f32 %v1091, %v1703
        %v2184 = vmul.f32 %v1099, %v1710
        %v2185 = vmul.f32 %v1107, %v1717
        %v2186 = vmul.f32 %v1106, %v1724
        %v2187 = vmul.f32 %v1108, %v1731
        %v2188 = vmul.f32 %v1116, %v1738
        %v2189 = vmul.f32 %v1124, %v1745
        %v2190 = vmul.f32 %v1123, %v1752
        %v2191 = vmul.f32 %v1125, %v1759
        %v2192 = vmul.f32 %v1133, %v1766
        %v2193 = vmul.f32 %v1141, %v1773
        %v2194 = vmul.f32 %v1140, %v1780
        %v2195 = vmul.f32 %v1142, %v1787
        %v2196 = vmul.f32 %v1150, %v1794
        %v2197 = vmul.f32 %v1158, %v1801
        %v2198 = vmul.f32 %v1157, %v1808
        %v2199 = vmul.f32 %v1159, %v1815
        %v2200 = vmul.f32 %v1167, %v1822
        %v2201 = vmul.f32 %v1175, %v1829
        %v2202 = vmul.f32 %v1174, %v1836
        %v2203 = vmul.f32 %v1176, %v1843
        %v2204 = vmul.f32 %v1184, %v1850
        %v2205 = vmul.f32 %v1192, %v1857
        %v2206 = vmul.f32 %v1191, %v1864
        %v2207 = vmul.f32 %v1193, %v1871
        %v2208 = vmul.f32 %v1201, %v1878
        %v2209 = vmul.f32 %v1209, %v1885
        %v2210 = vmul.f32 %v1208, %v1892
        %v2211 = vmul.f32 %v1210, %v1899
        %v2212 = vmul.f32 %v1218, %v1906
        %v2213 = vmul.f32 %v1226, %v1913
        %v2214 = vmul.f32 %v1225, %v1920
        %v2215 = vmul.f32 %v1227, %v1927
        %v2216 = vmul.f32 %v1235, %v1934
        %v2217 = vmul.f32 %v1243, %v1941
        %v2218 = vmul.f32 %v1242, %v1948
        %v2219 = vmul.f32 %v1244, %v1955
        %v2220 = vmul.f32 %v1252, %v1962
        %v2221 = vmul.f32 %v1260, %v1969
        %v2222 = vmul.f32 %v1259, %v1976
        %v2223 = vmul.f32 %v1261, %v1983
        %v2224 = vmul.f32 %v1269, %v1990
        %v2225 = vmul.f32 %v1277, %v1997
        %v2226 = vmul.f32 %v1276, %v2004
        %v2227 = vmul.f32 %v1278, %v2011
        %v2228 = vmul.f32 %v1286, %v2018
        %v2229 = vmul.f32 %v1294, %v2025
        %v2230 = vmul.f32 %v1293, %v2032
        %v2231 = vmul.f32 %v1295, %v2039
        %v2232 = vmul.f32 %v1302, %v2046
        %v2233 = vmul.f32 %v1303, %v2053
        %v2314 = vcombine.low %v2144, %v2145
        %v2315 = vcombine.low %v2146, %v2147
        %v2317 = vunpack.c.l.s4 1983009808
        %v2318 = vunpack.c.0.s8 %v2317
        %v2319 = vlaneseq
        %v2320 = vshrl.u32 %v2319, 7
        %v2321 = vsub.s32 %v2318, %v2320
        %v2322 = vrot.slane %v2314, %v2321
        %v2324 = vunpack.c.l.s4 1983009808
        %v2325 = vunpack.c.0.s8 %v2324
        %v2326 = vlaneseq
        %v2327 = vshrl.u32 %v2326, 7
        %v2328 = vsub.s32 %v2325, %v2327
        %v2329 = vrot.slane %v2315, %v2328
        %v2330 = vcombine.low %v2322, %v2329
        %v2331 = vcombine.low %v2148, %v2149
        %v2332 = vcombine.low %v2150, %v2151
        %v2334 = vunpack.c.l.s4 1983009808
        %v2335 = vunpack.c.0.s8 %v2334
        %v2336 = vlaneseq
        %v2337 = vshrl.u32 %v2336, 7
        %v2338 = vsub.s32 %v2335, %v2337
        %v2339 = vrot.slane %v2331, %v2338
        %v2341 = vunpack.c.l.s4 1983009808
        %v2342 = vunpack.c.0.s8 %v2341
        %v2343 = vlaneseq
        %v2344 = vshrl.u32 %v2343, 7
        %v2345 = vsub.s32 %v2342, %v2344
        %v2346 = vrot.slane %v2332, %v2345
        %v2347 = vcombine.low %v2339, %v2346
        %v2348 = vcombine.low %v2153, %v2154
        %v2349 = vcombine.low %v2155, %v2156
        %v2351 = vunpack.c.l.s4 1983009808
        %v2352 = vunpack.c.0.s8 %v2351
        %v2353 = vlaneseq
        %v2354 = vshrl.u32 %v2353, 7
        %v2355 = vsub.s32 %v2352, %v2354
        %v2356 = vrot.slane %v2348, %v2355
        %v2358 = vunpack.c.l.s4 1983009808
        %v2359 = vunpack.c.0.s8 %v2358
        %v2360 = vlaneseq
        %v2361 = vshrl.u32 %v2360, 7
        %v2362 = vsub.s32 %v2359, %v2361
        %v2363 = vrot.slane %v2349, %v2362
        %v2364 = vcombine.low %v2356, %v2363
        %v2365 = vcombine.low %v2157, %v2158
        %v2366 = vcombine.low %v2159, %v2160
        %v2368 = vunpack.c.l.s4 1983009808
        %v2369 = vunpack.c.0.s8 %v2368
        %v2370 = vlaneseq
        %v2371 = vshrl.u32 %v2370, 7
        %v2372 = vsub.s32 %v2369, %v2371
        %v2373 = vrot.slane %v2365, %v2372
        %v2375 = vunpack.c.l.s4 1983009808
        %v2376 = vunpack.c.0.s8 %v2375
        %v2377 = vlaneseq
        %v2378 = vshrl.u32 %v2377, 7
        %v2379 = vsub.s32 %v2376, %v2378
        %v2380 = vrot.slane %v2366, %v2379
        %v2381 = vcombine.low %v2373, %v2380
        %v2382 = vcombine.low %v2162, %v2163
        %v2383 = vcombine.low %v2164, %v2165
        %v2385 = vunpack.c.l.s4 1983009808
        %v2386 = vunpack.c.0.s8 %v2385
        %v2387 = vlaneseq
        %v2388 = vshrl.u32 %v2387, 7
        %v2389 = vsub.s32 %v2386, %v2388
        %v2390 = vrot.slane %v2382, %v2389
        %v2392 = vunpack.c.l.s4 1983009808
        %v2393 = vunpack.c.0.s8 %v2392
        %v2394 = vlaneseq
        %v2395 = vshrl.u32 %v2394, 7
        %v2396 = vsub.s32 %v2393, %v2395
        %v2397 = vrot.slane %v2383, %v2396
        %v2398 = vcombine.low %v2390, %v2397
        %v2399 = vcombine.low %v2166, %v2167
        %v2400 = vcombine.low %v2168, %v2169
        %v2402 = vunpack.c.l.s4 1983009808
        %v2403 = vunpack.c.0.s8 %v2402
        %v2404 = vlaneseq
        %v2405 = vshrl.u32 %v2404, 7
        %v2406 = vsub.s32 %v2403, %v2405
        %v2407 = vrot.slane %v2399, %v2406
        %v2409 = vunpack.c.l.s4 1983009808
        %v2410 = vunpack.c.0.s8 %v2409
        %v2411 = vlaneseq
        %v2412 = vshrl.u32 %v2411, 7
        %v2413 = vsub.s32 %v2410, %v2412
        %v2414 = vrot.slane %v2400, %v2413
        %v2415 = vcombine.low %v2407, %v2414
        %v2416 = vcombine.low %v2171, %v2172
        %v2417 = vcombine.low %v2173, %v2174
        %v2419 = vunpack.c.l.s4 1983009808
        %v2420 = vunpack.c.0.s8 %v2419
        %v2421 = vlaneseq
        %v2422 = vshrl.u32 %v2421, 7
        %v2423 = vsub.s32 %v2420, %v2422
        %v2424 = vrot.slane %v2416, %v2423
        %v2426 = vunpack.c.l.s4 1983009808
        %v2427 = vunpack.c.0.s8 %v2426
        %v2428 = vlaneseq
        %v2429 = vshrl.u32 %v2428, 7
        %v2430 = vsub.s32 %v2427, %v2429
        %v2431 = vrot.slane %v2417, %v2430
        %v2432 = vcombine.low %v2424, %v2431
        %v2433 = vcombine.low %v2175, %v2176
        %v2434 = vcombine.low %v2177, %v2178
        %v2436 = vunpack.c.l.s4 1983009808
        %v2437 = vunpack.c.0.s8 %v2436
        %v2438 = vlaneseq
        %v2439 = vshrl.u32 %v2438, 7
        %v2440 = vsub.s32 %v2437, %v2439
        %v2441 = vrot.slane %v2433, %v2440
        %v2443 = vunpack.c.l.s4 1983009808
        %v2444 = vunpack.c.0.s8 %v2443
        %v2445 = vlaneseq
        %v2446 = vshrl.u32 %v2445, 7
        %v2447 = vsub.s32 %v2444, %v2446
        %v2448 = vrot.slane %v2434, %v2447
        %v2449 = vcombine.low %v2441, %v2448
        %v2450 = vcombine.low %v2180, %v2181
        %v2451 = vcombine.low %v2182, %v2183
        %v2453 = vunpack.c.l.s4 1983009808
        %v2454 = vunpack.c.0.s8 %v2453
        %v2455 = vlaneseq
        %v2456 = vshrl.u32 %v2455, 7
        %v2457 = vsub.s32 %v2454, %v2456
        %v2458 = vrot.slane %v2450, %v2457
        %v2460 = vunpack.c.l.s4 1983009808
        %v2461 = vunpack.c.0.s8 %v2460
        %v2462 = vlaneseq
        %v2463 = vshrl.u32 %v2462, 7
        %v2464 = vsub.s32 %v2461, %v2463
        %v2465 = vrot.slane %v2451, %v2464
        %v2466 = vcombine.low %v2458, %v2465
        %v2467 = vcombine.low %v2184, %v2185
        %v2468 = vcombine.low %v2186, %v2187
        %v2470 = vunpack.c.l.s4 1983009808
        %v2471 = vunpack.c.0.s8 %v2470
        %v2472 = vlaneseq
        %v2473 = vshrl.u32 %v2472, 7
        %v2474 = vsub.s32 %v2471, %v2473
        %v2475 = vrot.slane %v2467, %v2474
        %v2477 = vunpack.c.l.s4 1983009808
        %v2478 = vunpack.c.0.s8 %v2477
        %v2479 = vlaneseq
        %v2480 = vshrl.u32 %v2479, 7
        %v2481 = vsub.s32 %v2478, %v2480
        %v2482 = vrot.slane %v2468, %v2481
        %v2483 = vcombine.low %v2475, %v2482
        %v2484 = vcombine.low %v2189, %v2190
        %v2485 = vcombine.low %v2191, %v2192
        %v2487 = vunpack.c.l.s4 1983009808
        %v2488 = vunpack.c.0.s8 %v2487
        %v2489 = vlaneseq
        %v2490 = vshrl.u32 %v2489, 7
        %v2491 = vsub.s32 %v2488, %v2490
        %v2492 = vrot.slane %v2484, %v2491
        %v2494 = vunpack.c.l.s4 1983009808
        %v2495 = vunpack.c.0.s8 %v2494
        %v2496 = vlaneseq
        %v2497 = vshrl.u32 %v2496, 7
        %v2498 = vsub.s32 %v2495, %v2497
        %v2499 = vrot.slane %v2485, %v2498
        %v2500 = vcombine.low %v2492, %v2499
        %v2501 = vcombine.low %v2193, %v2194
        %v2502 = vcombine.low %v2195, %v2196
        %v2504 = vunpack.c.l.s4 1983009808
        %v2505 = vunpack.c.0.s8 %v2504
        %v2506 = vlaneseq
        %v2507 = vshrl.u32 %v2506, 7
        %v2508 = vsub.s32 %v2505, %v2507
        %v2509 = vrot.slane %v2501, %v2508
        %v2511 = vunpack.c.l.s4 1983009808
        %v2512 = vunpack.c.0.s8 %v2511
        %v2513 = vlaneseq
        %v2514 = vshrl.u32 %v2513, 7
        %v2515 = vsub.s32 %v2512, %v2514
        %v2516 = vrot.slane %v2502, %v2515
        %v2517 = vcombine.low %v2509, %v2516
        %v2518 = vcombine.low %v2198, %v2199
        %v2519 = vcombine.low %v2200, %v2201
        %v2521 = vunpack.c.l.s4 1983009808
        %v2522 = vunpack.c.0.s8 %v2521
        %v2523 = vlaneseq
        %v2524 = vshrl.u32 %v2523, 7
        %v2525 = vsub.s32 %v2522, %v2524
        %v2526 = vrot.slane %v2518, %v2525
        %v2528 = vunpack.c.l.s4 1983009808
        %v2529 = vunpack.c.0.s8 %v2528
        %v2530 = vlaneseq
        %v2531 = vshrl.u32 %v2530, 7
        %v2532 = vsub.s32 %v2529, %v2531
        %v2533 = vrot.slane %v2519, %v2532
        %v2534 = vcombine.low %v2526, %v2533
        %v2535 = vcombine.low %v2202, %v2203
        %v2536 = vcombine.low %v2204, %v2205
        %v2538 = vunpack.c.l.s4 1983009808
        %v2539 = vunpack.c.0.s8 %v2538
        %v2540 = vlaneseq
        %v2541 = vshrl.u32 %v2540, 7
        %v2542 = vsub.s32 %v2539, %v2541
        %v2543 = vrot.slane %v2535, %v2542
        %v2545 = vunpack.c.l.s4 1983009808
        %v2546 = vunpack.c.0.s8 %v2545
        %v2547 = vlaneseq
        %v2548 = vshrl.u32 %v2547, 7
        %v2549 = vsub.s32 %v2546, %v2548
        %v2550 = vrot.slane %v2536, %v2549
        %v2551 = vcombine.low %v2543, %v2550
        %v2552 = vcombine.low %v2207, %v2208
        %v2553 = vcombine.low %v2209, %v2210
        %v2555 = vunpack.c.l.s4 1983009808
        %v2556 = vunpack.c.0.s8 %v2555
        %v2557 = vlaneseq
        %v2558 = vshrl.u32 %v2557, 7
        %v2559 = vsub.s32 %v2556, %v2558
        %v2560 = vrot.slane %v2552, %v2559
        %v2562 = vunpack.c.l.s4 1983009808
        %v2563 = vunpack.c.0.s8 %v2562
        %v2564 = vlaneseq
        %v2565 = vshrl.u32 %v2564, 7
        %v2566 = vsub.s32 %v2563, %v2565
        %v2567 = vrot.slane %v2553, %v2566
        %v2568 = vcombine.low %v2560, %v2567
        %v2569 = vcombine.low %v2211, %v2212
        %v2570 = vcombine.low %v2213, %v2214
        %v2572 = vunpack.c.l.s4 1983009808
        %v2573 = vunpack.c.0.s8 %v2572
        %v2574 = vlaneseq
        %v2575 = vshrl.u32 %v2574, 7
        %v2576 = vsub.s32 %v2573, %v2575
        %v2577 = vrot.slane %v2569, %v2576
        %v2579 = vunpack.c.l.s4 1983009808
        %v2580 = vunpack.c.0.s8 %v2579
        %v2581 = vlaneseq
        %v2582 = vshrl.u32 %v2581, 7
        %v2583 = vsub.s32 %v2580, %v2582
        %v2584 = vrot.slane %v2570, %v2583
        %v2585 = vcombine.low %v2577, %v2584
        %v2586 = vcombine.low %v2216, %v2217
        %v2587 = vcombine.low %v2218, %v2219
        %v2589 = vunpack.c.l.s4 1983009808
        %v2590 = vunpack.c.0.s8 %v2589
        %v2591 = vlaneseq
        %v2592 = vshrl.u32 %v2591, 7
        %v2593 = vsub.s32 %v2590, %v2592
        %v2594 = vrot.slane %v2586, %v2593
        %v2596 = vunpack.c.l.s4 1983009808
        %v2597 = vunpack.c.0.s8 %v2596
        %v2598 = vlaneseq
        %v2599 = vshrl.u32 %v2598, 7
        %v2600 = vsub.s32 %v2597, %v2599
        %v2601 = vrot.slane %v2587, %v2600
        %v2602 = vcombine.low %v2594, %v2601
        %v2603 = vcombine.low %v2220, %v2221
        %v2604 = vcombine.low %v2222, %v2223
        %v2606 = vunpack.c.l.s4 1983009808
        %v2607 = vunpack.c.0.s8 %v2606
        %v2608 = vlaneseq
        %v2609 = vshrl.u32 %v2608, 7
        %v2610 = vsub.s32 %v2607, %v2609
        %v2611 = vrot.slane %v2603, %v2610
        %v2613 = vunpack.c.l.s4 1983009808
        %v2614 = vunpack.c.0.s8 %v2613
        %v2615 = vlaneseq
        %v2616 = vshrl.u32 %v2615, 7
        %v2617 = vsub.s32 %v2614, %v2616
        %v2618 = vrot.slane %v2604, %v2617
        %v2619 = vcombine.low %v2611, %v2618
        %v2620 = vcombine.low %v2225, %v2226
        %v2621 = vcombine.low %v2227, %v2228
        %v2623 = vunpack.c.l.s4 1983009808
        %v2624 = vunpack.c.0.s8 %v2623
        %v2625 = vlaneseq
        %v2626 = vshrl.u32 %v2625, 7
        %v2627 = vsub.s32 %v2624, %v2626
        %v2628 = vrot.slane %v2620, %v2627
        %v2630 = vunpack.c.l.s4 1983009808
        %v2631 = vunpack.c.0.s8 %v2630
        %v2632 = vlaneseq
        %v2633 = vshrl.u32 %v2632, 7
        %v2634 = vsub.s32 %v2631, %v2633
        %v2635 = vrot.slane %v2621, %v2634
        %v2636 = vcombine.low %v2628, %v2635
        %v2637 = vcombine.low %v2229, %v2230
        %v2638 = vcombine.low %v2231, %v2232
        %v2640 = vunpack.c.l.s4 1983009808
        %v2641 = vunpack.c.0.s8 %v2640
        %v2642 = vlaneseq
        %v2643 = vshrl.u32 %v2642, 7
        %v2644 = vsub.s32 %v2641, %v2643
        %v2645 = vrot.slane %v2637, %v2644
        %v2647 = vunpack.c.l.s4 1983009808
        %v2648 = vunpack.c.0.s8 %v2647
        %v2649 = vlaneseq
        %v2650 = vshrl.u32 %v2649, 7
        %v2651 = vsub.s32 %v2648, %v2650
        %v2652 = vrot.slane %v2638, %v2651
        %v2653 = vcombine.low %v2645, %v2652
        %v2685 = vunpack.c.l.s4 1983009808
        %v2686 = vunpack.c.0.s8 %v2685
        %v2687 = vlaneseq
        %v2688 = vshrl.u32 %v2687, 7
        %v2689 = vsub.s32 %v2686, %v2688
        %v2690 = vrot.slane %v2152, %v2689
        %v2692 = vunpack.c.l.s4 1983009808
        %v2693 = vunpack.c.0.s8 %v2692
        %v2694 = vlaneseq
        %v2695 = vshrl.u32 %v2694, 7
        %v2696 = vsub.s32 %v2693, %v2695
        %v2697 = vrot.slane %v2161, %v2696
        %v2699 = vunpack.c.l.s4 1983009808
        %v2700 = vunpack.c.0.s8 %v2699
        %v2701 = vlaneseq
        %v2702 = vshrl.u32 %v2701, 7
        %v2703 = vsub.s32 %v2700, %v2702
        %v2704 = vrot.slane %v2170, %v2703
        %v2706 = vunpack.c.l.s4 1983009808
        %v2707 = vunpack.c.0.s8 %v2706
        %v2708 = vlaneseq
        %v2709 = vshrl.u32 %v2708, 7
        %v2710 = vsub.s32 %v2707, %v2709
        %v2711 = vrot.slane %v2179, %v2710
        %v2713 = vunpack.c.l.s4 1983009808
        %v2714 = vunpack.c.0.s8 %v2713
        %v2715 = vlaneseq
        %v2716 = vshrl.u32 %v2715, 7
        %v2717 = vsub.s32 %v2714, %v2716
        %v2718 = vrot.slane %v2188, %v2717
        %v2720 = vunpack.c.l.s4 1983009808
        %v2721 = vunpack.c.0.s8 %v2720
        %v2722 = vlaneseq
        %v2723 = vshrl.u32 %v2722, 7
        %v2724 = vsub.s32 %v2721, %v2723
        %v2725 = vrot.slane %v2197, %v2724
        %v2727 = vunpack.c.l.s4 1983009808
        %v2728 = vunpack.c.0.s8 %v2727
        %v2729 = vlaneseq
        %v2730 = vshrl.u32 %v2729, 7
        %v2731 = vsub.s32 %v2728, %v2730
        %v2732 = vrot.slane %v2206, %v2731
        %v2734 = vunpack.c.l.s4 1983009808
        %v2735 = vunpack.c.0.s8 %v2734
        %v2736 = vlaneseq
        %v2737 = vshrl.u32 %v2736, 7
        %v2738 = vsub.s32 %v2735, %v2737
        %v2739 = vrot.slane %v2215, %v2738
        %v2741 = vunpack.c.l.s4 1983009808
        %v2742 = vunpack.c.0.s8 %v2741
        %v2743 = vlaneseq
        %v2744 = vshrl.u32 %v2743, 7
        %v2745 = vsub.s32 %v2742, %v2744
        %v2746 = vrot.slane %v2224, %v2745
        %v2748 = vunpack.c.l.s4 1983009808
        %v2749 = vunpack.c.0.s8 %v2748
        %v2750 = vlaneseq
        %v2751 = vshrl.u32 %v2750, 7
        %v2752 = vsub.s32 %v2749, %v2751
        %v2753 = vrot.slane %v2233, %v2752
        %vm2754 = vcmask 1046528
        %v2755 = vrot.slane %v2330, 1
        %v2756 = vrot.slane %v2347, 1
        %v2757 = vsel %vm2754, %v2755, %v2756
        %v2758 = vrot.slane %v2690, 1
        %v2759 = vsel %vm2754, %v2756, %v2758
        %v2760 = vrot.slane %v2364, 1
        %v2761 = vrot.slane %v2381, 1
        %v2762 = vsel %vm2754, %v2760, %v2761
        %v2763 = vrot.slane %v2697, 1
        %v2764 = vsel %vm2754, %v2761, %v2763
        %v2765 = vrot.slane %v2398, 1
        %v2766 = vrot.slane %v2415, 1
        %v2767 = vsel %vm2754, %v2765, %v2766
        %v2768 = vrot.slane %v2704, 1
        %v2769 = vsel %vm2754, %v2766, %v2768
        %v2770 = vrot.slane %v2432, 1
        %v2771 = vrot.slane %v2449, 1
        %v2772 = vsel %vm2754, %v2770, %v2771
        %v2773 = vrot.slane %v2711, 1
        %v2774 = vsel %vm2754, %v2771, %v2773
        %v2775 = vrot.slane %v2466, 1
        %v2776 = vrot.slane %v2483, 1
        %v2777 = vsel %vm2754, %v2775, %v2776
        %v2778 = vrot.slane %v2718, 1
        %v2779 = vsel %vm2754, %v2776, %v2778
        %v2780 = vrot.slane %v2500, 1
        %v2781 = vrot.slane %v2517, 1
        %v2782 = vsel %vm2754, %v2780, %v2781
        %v2783 = vrot.slane %v2725, 1
        %v2784 = vsel %vm2754, %v2781, %v2783
        %v2785 = vrot.slane %v2534, 1
        %v2786 = vrot.slane %v2551, 1
        %v2787 = vsel %vm2754, %v2785, %v2786
        %v2788 = vrot.slane %v2732, 1
        %v2789 = vsel %vm2754, %v2786, %v2788
        %v2790 = vrot.slane %v2568, 1
        %v2791 = vrot.slane %v2585, 1
        %v2792 = vsel %vm2754, %v2790, %v2791
        %v2793 = vrot.slane %v2739, 1
        %v2794 = vsel %vm2754, %v2791, %v2793
        %v2795 = vrot.slane %v2602, 1
        %v2796 = vrot.slane %v2619, 1
        %v2797 = vsel %vm2754, %v2795, %v2796
        %v2798 = vrot.slane %v2746, 1
        %v2799 = vsel %vm2754, %v2796, %v2798
        %v2800 = vrot.slane %v2636, 1
        %v2801 = vrot.slane %v2653, 1
        %v2802 = vsel %vm2754, %v2800, %v2801
        %v2803 = vrot.slane %v2753, 1
        %v2804 = vsel %vm2754, %v2801, %v2803
        %2805 = vrot.lane.b32.xlu0 %v2757, 64
        %v2806 = vpop.permute.xlu0 %2805
        %2807 = vrot.lane.b32.xlu0 %v2759, 64
        %v2808 = vpop.permute.xlu0 %2807
        %2809 = vrot.lane.b32.xlu0 %v2762, 64
        %v2810 = vpop.permute.xlu0 %2809
        %2811 = vrot.lane.b32.xlu0 %v2764, 64
        %v2812 = vpop.permute.xlu0 %2811
        %2813 = vrot.lane.b32.xlu0 %v2767, 64
        %v2814 = vpop.permute.xlu0 %2813
        %2815 = vrot.lane.b32.xlu0 %v2769, 64
        %v2816 = vpop.permute.xlu0 %2815
        %2817 = vrot.lane.b32.xlu0 %v2772, 64
        %v2818 = vpop.permute.xlu0 %2817
        %2819 = vrot.lane.b32.xlu0 %v2774, 64
        %v2820 = vpop.permute.xlu0 %2819
        %2821 = vrot.lane.b32.xlu0 %v2777, 64
        %v2822 = vpop.permute.xlu0 %2821
        %2823 = vrot.lane.b32.xlu0 %v2779, 64
        %v2824 = vpop.permute.xlu0 %2823
        %2825 = vrot.lane.b32.xlu0 %v2782, 64
        %v2826 = vpop.permute.xlu0 %2825
        %2827 = vrot.lane.b32.xlu0 %v2784, 64
        %v2828 = vpop.permute.xlu0 %2827
        %2829 = vrot.lane.b32.xlu0 %v2787, 64
        %v2830 = vpop.permute.xlu0 %2829
        %2831 = vrot.lane.b32.xlu0 %v2789, 64
        %v2832 = vpop.permute.xlu0 %2831
        %2833 = vrot.lane.b32.xlu0 %v2792, 64
        %v2834 = vpop.permute.xlu0 %2833
        %2835 = vrot.lane.b32.xlu0 %v2794, 64
        %v2836 = vpop.permute.xlu0 %2835
        %2837 = vrot.lane.b32.xlu0 %v2797, 64
        %v2838 = vpop.permute.xlu0 %2837
        %2839 = vrot.lane.b32.xlu0 %v2799, 64
        %v2840 = vpop.permute.xlu0 %2839
        %2841 = vrot.lane.b32.xlu0 %v2802, 64
        %v2842 = vpop.permute.xlu0 %2841
        %2843 = vrot.lane.b32.xlu0 %v2804, 64
        %v2844 = vpop.permute.xlu0 %2843
        %v2865 = vcombine.low %v2145, %v2146
        %v2866 = vcombine.low %v2147, %v2148
        %v2868 = vunpack.c.l.s4 1983009808
        %v2869 = vunpack.c.0.s8 %v2868
        %v2870 = vlaneseq
        %v2871 = vshrl.u32 %v2870, 7
        %v2872 = vsub.s32 %v2869, %v2871
        %v2873 = vrot.slane %v2865, %v2872
        %v2875 = vunpack.c.l.s4 1983009808
        %v2876 = vunpack.c.0.s8 %v2875
        %v2877 = vlaneseq
        %v2878 = vshrl.u32 %v2877, 7
        %v2879 = vsub.s32 %v2876, %v2878
        %v2880 = vrot.slane %v2866, %v2879
        %v2881 = vcombine.low %v2873, %v2880
        %v2882 = vcombine.low %v2149, %v2150
        %v2883 = vcombine.low %v2151, %v2152
        %v2885 = vunpack.c.l.s4 1983009808
        %v2886 = vunpack.c.0.s8 %v2885
        %v2887 = vlaneseq
        %v2888 = vshrl.u32 %v2887, 7
        %v2889 = vsub.s32 %v2886, %v2888
        %v2890 = vrot.slane %v2882, %v2889
        %v2892 = vunpack.c.l.s4 1983009808
        %v2893 = vunpack.c.0.s8 %v2892
        %v2894 = vlaneseq
        %v2895 = vshrl.u32 %v2894, 7
        %v2896 = vsub.s32 %v2893, %v2895
        %v2897 = vrot.slane %v2883, %v2896
        %v2898 = vcombine.low %v2890, %v2897
        %v2899 = vcombine.low %v2154, %v2155
        %v2900 = vcombine.low %v2156, %v2157
        %v2902 = vunpack.c.l.s4 1983009808
        %v2903 = vunpack.c.0.s8 %v2902
        %v2904 = vlaneseq
        %v2905 = vshrl.u32 %v2904, 7
        %v2906 = vsub.s32 %v2903, %v2905
        %v2907 = vrot.slane %v2899, %v2906
        %v2909 = vunpack.c.l.s4 1983009808
        %v2910 = vunpack.c.0.s8 %v2909
        %v2911 = vlaneseq
        %v2912 = vshrl.u32 %v2911, 7
        %v2913 = vsub.s32 %v2910, %v2912
        %v2914 = vrot.slane %v2900, %v2913
        %v2915 = vcombine.low %v2907, %v2914
        %v2916 = vcombine.low %v2158, %v2159
        %v2917 = vcombine.low %v2160, %v2161
        %v2919 = vunpack.c.l.s4 1983009808
        %v2920 = vunpack.c.0.s8 %v2919
        %v2921 = vlaneseq
        %v2922 = vshrl.u32 %v2921, 7
        %v2923 = vsub.s32 %v2920, %v2922
        %v2924 = vrot.slane %v2916, %v2923
        %v2926 = vunpack.c.l.s4 1983009808
        %v2927 = vunpack.c.0.s8 %v2926
        %v2928 = vlaneseq
        %v2929 = vshrl.u32 %v2928, 7
        %v2930 = vsub.s32 %v2927, %v2929
        %v2931 = vrot.slane %v2917, %v2930
        %v2932 = vcombine.low %v2924, %v2931
        %v2933 = vcombine.low %v2163, %v2164
        %v2934 = vcombine.low %v2165, %v2166
        %v2936 = vunpack.c.l.s4 1983009808
        %v2937 = vunpack.c.0.s8 %v2936
        %v2938 = vlaneseq
        %v2939 = vshrl.u32 %v2938, 7
        %v2940 = vsub.s32 %v2937, %v2939
        %v2941 = vrot.slane %v2933, %v2940
        %v2943 = vunpack.c.l.s4 1983009808
        %v2944 = vunpack.c.0.s8 %v2943
        %v2945 = vlaneseq
        %v2946 = vshrl.u32 %v2945, 7
        %v2947 = vsub.s32 %v2944, %v2946
        %v2948 = vrot.slane %v2934, %v2947
        %v2949 = vcombine.low %v2941, %v2948
        %v2950 = vcombine.low %v2167, %v2168
        %v2951 = vcombine.low %v2169, %v2170
        %v2953 = vunpack.c.l.s4 1983009808
        %v2954 = vunpack.c.0.s8 %v2953
        %v2955 = vlaneseq
        %v2956 = vshrl.u32 %v2955, 7
        %v2957 = vsub.s32 %v2954, %v2956
        %v2958 = vrot.slane %v2950, %v2957
        %v2960 = vunpack.c.l.s4 1983009808
        %v2961 = vunpack.c.0.s8 %v2960
        %v2962 = vlaneseq
        %v2963 = vshrl.u32 %v2962, 7
        %v2964 = vsub.s32 %v2961, %v2963
        %v2965 = vrot.slane %v2951, %v2964
        %v2966 = vcombine.low %v2958, %v2965
        %v2967 = vcombine.low %v2172, %v2173
        %v2968 = vcombine.low %v2174, %v2175
        %v2970 = vunpack.c.l.s4 1983009808
        %v2971 = vunpack.c.0.s8 %v2970
        %v2972 = vlaneseq
        %v2973 = vshrl.u32 %v2972, 7
        %v2974 = vsub.s32 %v2971, %v2973
        %v2975 = vrot.slane %v2967, %v2974
        %v2977 = vunpack.c.l.s4 1983009808
        %v2978 = vunpack.c.0.s8 %v2977
        %v2979 = vlaneseq
        %v2980 = vshrl.u32 %v2979, 7
        %v2981 = vsub.s32 %v2978, %v2980
        %v2982 = vrot.slane %v2968, %v2981
        %v2983 = vcombine.low %v2975, %v2982
        %v2984 = vcombine.low %v2176, %v2177
        %v2985 = vcombine.low %v2178, %v2179
        %v2987 = vunpack.c.l.s4 1983009808
        %v2988 = vunpack.c.0.s8 %v2987
        %v2989 = vlaneseq
        %v2990 = vshrl.u32 %v2989, 7
        %v2991 = vsub.s32 %v2988, %v2990
        %v2992 = vrot.slane %v2984, %v2991
        %v2994 = vunpack.c.l.s4 1983009808
        %v2995 = vunpack.c.0.s8 %v2994
        %v2996 = vlaneseq
        %v2997 = vshrl.u32 %v2996, 7
        %v2998 = vsub.s32 %v2995, %v2997
        %v2999 = vrot.slane %v2985, %v2998
        %v3000 = vcombine.low %v2992, %v2999
        %v3001 = vcombine.low %v2181, %v2182
        %v3002 = vcombine.low %v2183, %v2184
        %v3004 = vunpack.c.l.s4 1983009808
        %v3005 = vunpack.c.0.s8 %v3004
        %v3006 = vlaneseq
        %v3007 = vshrl.u32 %v3006, 7
        %v3008 = vsub.s32 %v3005, %v3007
        %v3009 = vrot.slane %v3001, %v3008
        %v3011 = vunpack.c.l.s4 1983009808
        %v3012 = vunpack.c.0.s8 %v3011
        %v3013 = vlaneseq
        %v3014 = vshrl.u32 %v3013, 7
        %v3015 = vsub.s32 %v3012, %v3014
        %v3016 = vrot.slane %v3002, %v3015
        %v3017 = vcombine.low %v3009, %v3016
        %v3018 = vcombine.low %v2185, %v2186
        %v3019 = vcombine.low %v2187, %v2188
        %v3021 = vunpack.c.l.s4 1983009808
        %v3022 = vunpack.c.0.s8 %v3021
        %v3023 = vlaneseq
        %v3024 = vshrl.u32 %v3023, 7
        %v3025 = vsub.s32 %v3022, %v3024
        %v3026 = vrot.slane %v3018, %v3025
        %v3028 = vunpack.c.l.s4 1983009808
        %v3029 = vunpack.c.0.s8 %v3028
        %v3030 = vlaneseq
        %v3031 = vshrl.u32 %v3030, 7
        %v3032 = vsub.s32 %v3029, %v3031
        %v3033 = vrot.slane %v3019, %v3032
        %v3034 = vcombine.low %v3026, %v3033
        %v3035 = vcombine.low %v2190, %v2191
        %v3036 = vcombine.low %v2192, %v2193
        %v3038 = vunpack.c.l.s4 1983009808
        %v3039 = vunpack.c.0.s8 %v3038
        %v3040 = vlaneseq
        %v3041 = vshrl.u32 %v3040, 7
        %v3042 = vsub.s32 %v3039, %v3041
        %v3043 = vrot.slane %v3035, %v3042
        %v3045 = vunpack.c.l.s4 1983009808
        %v3046 = vunpack.c.0.s8 %v3045
        %v3047 = vlaneseq
        %v3048 = vshrl.u32 %v3047, 7
        %v3049 = vsub.s32 %v3046, %v3048
        %v3050 = vrot.slane %v3036, %v3049
        %v3051 = vcombine.low %v3043, %v3050
        %v3052 = vcombine.low %v2194, %v2195
        %v3053 = vcombine.low %v2196, %v2197
        %v3055 = vunpack.c.l.s4 1983009808
        %v3056 = vunpack.c.0.s8 %v3055
        %v3057 = vlaneseq
        %v3058 = vshrl.u32 %v3057, 7
        %v3059 = vsub.s32 %v3056, %v3058
        %v3060 = vrot.slane %v3052, %v3059
        %v3062 = vunpack.c.l.s4 1983009808
        %v3063 = vunpack.c.0.s8 %v3062
        %v3064 = vlaneseq
        %v3065 = vshrl.u32 %v3064, 7
        %v3066 = vsub.s32 %v3063, %v3065
        %v3067 = vrot.slane %v3053, %v3066
        %v3068 = vcombine.low %v3060, %v3067
        %v3069 = vcombine.low %v2199, %v2200
        %v3070 = vcombine.low %v2201, %v2202
        %v3072 = vunpack.c.l.s4 1983009808
        %v3073 = vunpack.c.0.s8 %v3072
        %v3074 = vlaneseq
        %v3075 = vshrl.u32 %v3074, 7
        %v3076 = vsub.s32 %v3073, %v3075
        %v3077 = vrot.slane %v3069, %v3076
        %v3079 = vunpack.c.l.s4 1983009808
        %v3080 = vunpack.c.0.s8 %v3079
        %v3081 = vlaneseq
        %v3082 = vshrl.u32 %v3081, 7
        %v3083 = vsub.s32 %v3080, %v3082
        %v3084 = vrot.slane %v3070, %v3083
        %v3085 = vcombine.low %v3077, %v3084
        %v3086 = vcombine.low %v2203, %v2204
        %v3087 = vcombine.low %v2205, %v2206
        %v3089 = vunpack.c.l.s4 1983009808
        %v3090 = vunpack.c.0.s8 %v3089
        %v3091 = vlaneseq
        %v3092 = vshrl.u32 %v3091, 7
        %v3093 = vsub.s32 %v3090, %v3092
        %v3094 = vrot.slane %v3086, %v3093
        %v3096 = vunpack.c.l.s4 1983009808
        %v3097 = vunpack.c.0.s8 %v3096
        %v3098 = vlaneseq
        %v3099 = vshrl.u32 %v3098, 7
        %v3100 = vsub.s32 %v3097, %v3099
        %v3101 = vrot.slane %v3087, %v3100
        %v3102 = vcombine.low %v3094, %v3101
        %v3103 = vcombine.low %v2208, %v2209
        %v3104 = vcombine.low %v2210, %v2211
        %v3106 = vunpack.c.l.s4 1983009808
        %v3107 = vunpack.c.0.s8 %v3106
        %v3108 = vlaneseq
        %v3109 = vshrl.u32 %v3108, 7
        %v3110 = vsub.s32 %v3107, %v3109
        %v3111 = vrot.slane %v3103, %v3110
        %v3113 = vunpack.c.l.s4 1983009808
        %v3114 = vunpack.c.0.s8 %v3113
        %v3115 = vlaneseq
        %v3116 = vshrl.u32 %v3115, 7
        %v3117 = vsub.s32 %v3114, %v3116
        %v3118 = vrot.slane %v3104, %v3117
        %v3119 = vcombine.low %v3111, %v3118
        %v3120 = vcombine.low %v2212, %v2213
        %v3121 = vcombine.low %v2214, %v2215
        %v3123 = vunpack.c.l.s4 1983009808
        %v3124 = vunpack.c.0.s8 %v3123
        %v3125 = vlaneseq
        %v3126 = vshrl.u32 %v3125, 7
        %v3127 = vsub.s32 %v3124, %v3126
        %v3128 = vrot.slane %v3120, %v3127
        %v3130 = vunpack.c.l.s4 1983009808
        %v3131 = vunpack.c.0.s8 %v3130
        %v3132 = vlaneseq
        %v3133 = vshrl.u32 %v3132, 7
        %v3134 = vsub.s32 %v3131, %v3133
        %v3135 = vrot.slane %v3121, %v3134
        %v3136 = vcombine.low %v3128, %v3135
        %v3137 = vcombine.low %v2217, %v2218
        %v3138 = vcombine.low %v2219, %v2220
        %v3140 = vunpack.c.l.s4 1983009808
        %v3141 = vunpack.c.0.s8 %v3140
        %v3142 = vlaneseq
        %v3143 = vshrl.u32 %v3142, 7
        %v3144 = vsub.s32 %v3141, %v3143
        %v3145 = vrot.slane %v3137, %v3144
        %v3147 = vunpack.c.l.s4 1983009808
        %v3148 = vunpack.c.0.s8 %v3147
        %v3149 = vlaneseq
        %v3150 = vshrl.u32 %v3149, 7
        %v3151 = vsub.s32 %v3148, %v3150
        %v3152 = vrot.slane %v3138, %v3151
        %v3153 = vcombine.low %v3145, %v3152
        %v3154 = vcombine.low %v2221, %v2222
        %v3155 = vcombine.low %v2223, %v2224
        %v3157 = vunpack.c.l.s4 1983009808
        %v3158 = vunpack.c.0.s8 %v3157
        %v3159 = vlaneseq
        %v3160 = vshrl.u32 %v3159, 7
        %v3161 = vsub.s32 %v3158, %v3160
        %v3162 = vrot.slane %v3154, %v3161
        %v3164 = vunpack.c.l.s4 1983009808
        %v3165 = vunpack.c.0.s8 %v3164
        %v3166 = vlaneseq
        %v3167 = vshrl.u32 %v3166, 7
        %v3168 = vsub.s32 %v3165, %v3167
        %v3169 = vrot.slane %v3155, %v3168
        %v3170 = vcombine.low %v3162, %v3169
        %v3171 = vcombine.low %v2226, %v2227
        %v3172 = vcombine.low %v2228, %v2229
        %v3174 = vunpack.c.l.s4 1983009808
        %v3175 = vunpack.c.0.s8 %v3174
        %v3176 = vlaneseq
        %v3177 = vshrl.u32 %v3176, 7
        %v3178 = vsub.s32 %v3175, %v3177
        %v3179 = vrot.slane %v3171, %v3178
        %v3181 = vunpack.c.l.s4 1983009808
        %v3182 = vunpack.c.0.s8 %v3181
        %v3183 = vlaneseq
        %v3184 = vshrl.u32 %v3183, 7
        %v3185 = vsub.s32 %v3182, %v3184
        %v3186 = vrot.slane %v3172, %v3185
        %v3187 = vcombine.low %v3179, %v3186
        %v3188 = vcombine.low %v2230, %v2231
        %v3189 = vcombine.low %v2232, %v2233
        %v3191 = vunpack.c.l.s4 1983009808
        %v3192 = vunpack.c.0.s8 %v3191
        %v3193 = vlaneseq
        %v3194 = vshrl.u32 %v3193, 7
        %v3195 = vsub.s32 %v3192, %v3194
        %v3196 = vrot.slane %v3188, %v3195
        %v3198 = vunpack.c.l.s4 1983009808
        %v3199 = vunpack.c.0.s8 %v3198
        %v3200 = vlaneseq
        %v3201 = vshrl.u32 %v3200, 7
        %v3202 = vsub.s32 %v3199, %v3201
        %v3203 = vrot.slane %v3189, %v3202
        %v3204 = vcombine.low %v3196, %v3203
        %vm3225 = vcmask 523264
        %v3226 = vsel %vm3225, %v2330, %v2806
        %v3227 = vsel %vm3225, %v2347, %v2808
        %v3228 = vsel %vm3225, %v2364, %v2810
        %v3229 = vsel %vm3225, %v2381, %v2812
        %v3230 = vsel %vm3225, %v2398, %v2814
        %v3231 = vsel %vm3225, %v2415, %v2816
        %v3232 = vsel %vm3225, %v2432, %v2818
        %v3233 = vsel %vm3225, %v2449, %v2820
        %v3234 = vsel %vm3225, %v2466, %v2822
        %v3235 = vsel %vm3225, %v2483, %v2824
        %v3236 = vsel %vm3225, %v2500, %v2826
        %v3237 = vsel %vm3225, %v2517, %v2828
        %v3238 = vsel %vm3225, %v2534, %v2830
        %v3239 = vsel %vm3225, %v2551, %v2832
        %v3240 = vsel %vm3225, %v2568, %v2834
        %v3241 = vsel %vm3225, %v2585, %v2836
        %v3242 = vsel %vm3225, %v2602, %v2838
        %v3243 = vsel %vm3225, %v2619, %v2840
        %v3244 = vsel %vm3225, %v2636, %v2842
        %v3245 = vsel %vm3225, %v2653, %v2844
        %v3246 = vpack.c.bf16 %v3227, %v3226
        %v3247 = vpack.c.bf16 %v2898, %v2881
        %v3248 = vpack.c.bf16 %v3229, %v3228
        %v3249 = vpack.c.bf16 %v2932, %v2915
        %v3250 = vpack.c.bf16 %v3231, %v3230
        %v3251 = vpack.c.bf16 %v2966, %v2949
        %v3252 = vpack.c.bf16 %v3233, %v3232
        %v3253 = vpack.c.bf16 %v3000, %v2983
        %v3254 = vpack.c.bf16 %v3235, %v3234
        %v3255 = vpack.c.bf16 %v3034, %v3017
        %v3256 = vpack.c.bf16 %v3237, %v3236
        %v3257 = vpack.c.bf16 %v3068, %v3051
        %v3258 = vpack.c.bf16 %v3239, %v3238
        %v3259 = vpack.c.bf16 %v3102, %v3085
        %v3260 = vpack.c.bf16 %v3241, %v3240
        %v3261 = vpack.c.bf16 %v3136, %v3119
        %v3262 = vpack.c.bf16 %v3243, %v3242
        %v3263 = vpack.c.bf16 %v3170, %v3153
        %v3264 = vpack.c.bf16 %v3245, %v3244
        %v3265 = vpack.c.bf16 %v3204, %v3187
        %v3286 = vunpack.c.l.b16 %v3246
        %v3287 = vunpack.c.l.b16 %v3247
        %v3288 = vunpack.c.h.b16 %v3246
        %v3289 = vunpack.c.h.b16 %v3247
        %v3290 = vunpack.c.l.b16 %v3248
        %v3291 = vunpack.c.l.b16 %v3249
        %v3292 = vunpack.c.h.b16 %v3248
        %v3293 = vunpack.c.h.b16 %v3249
        %v3294 = vunpack.c.l.b16 %v3250
        %v3295 = vunpack.c.l.b16 %v3251
        %v3296 = vunpack.c.h.b16 %v3250
        %v3297 = vunpack.c.h.b16 %v3251
        %v3298 = vunpack.c.l.b16 %v3252
        %v3299 = vunpack.c.l.b16 %v3253
        %v3300 = vunpack.c.h.b16 %v3252
        %v3301 = vunpack.c.h.b16 %v3253
        %v3302 = vunpack.c.l.b16 %v3254
        %v3303 = vunpack.c.l.b16 %v3255
        %v3304 = vunpack.c.h.b16 %v3254
        %v3305 = vunpack.c.h.b16 %v3255
        %v3306 = vunpack.c.l.b16 %v3256
        %v3307 = vunpack.c.l.b16 %v3257
        %v3308 = vunpack.c.h.b16 %v3256
        %v3309 = vunpack.c.h.b16 %v3257
        %v3310 = vunpack.c.l.b16 %v3258
        %v3311 = vunpack.c.l.b16 %v3259
        %v3312 = vunpack.c.h.b16 %v3258
        %v3313 = vunpack.c.h.b16 %v3259
        %v3314 = vunpack.c.l.b16 %v3260
        %v3315 = vunpack.c.l.b16 %v3261
        %v3316 = vunpack.c.h.b16 %v3260
        %v3317 = vunpack.c.h.b16 %v3261
        %v3318 = vunpack.c.l.b16 %v3262
        %v3319 = vunpack.c.l.b16 %v3263
        %v3320 = vunpack.c.h.b16 %v3262
        %v3321 = vunpack.c.h.b16 %v3263
        %v3322 = vunpack.c.l.b16 %v3264
        %v3323 = vunpack.c.l.b16 %v3265
        %v3324 = vunpack.c.h.b16 %v3264
        %v3325 = vunpack.c.h.b16 %v3265
        %v3326 = vpack.c.b16 %v3287, %v3286
        %v3327 = vpack.c.b16 %v3289, %v3288
        %v3328 = vpack.c.b16 %v3291, %v3290
        %v3329 = vpack.c.b16 %v3293, %v3292
        %v3330 = vpack.c.b16 %v3295, %v3294
        %v3331 = vpack.c.b16 %v3297, %v3296
        %v3332 = vpack.c.b16 %v3299, %v3298
        %v3333 = vpack.c.b16 %v3301, %v3300
        %v3334 = vpack.c.b16 %v3303, %v3302
        %v3335 = vpack.c.b16 %v3305, %v3304
        %v3336 = vpack.c.b16 %v3307, %v3306
        %v3337 = vpack.c.b16 %v3309, %v3308
        %v3338 = vpack.c.b16 %v3311, %v3310
        %v3339 = vpack.c.b16 %v3313, %v3312
        %v3340 = vpack.c.b16 %v3315, %v3314
        %v3341 = vpack.c.b16 %v3317, %v3316
        %v3342 = vpack.c.b16 %v3319, %v3318
        %v3343 = vpack.c.b16 %v3321, %v3320
        %v3344 = vpack.c.b16 %v3323, %v3322
        %v3345 = vpack.c.b16 %v3325, %v3324
        %vm3366 = vcmask 1043456
        %vm3367 = vcmask 523268
        %vm3368 = vmor %vm3367, %vm3366
        %3369 = vst.msk [vmem:[#allocation2] sm:$0xff] %vm3368, %v3326
        %3370 = vst.msk [vmem:[#allocation2 + $0x8] sm:$0xff] %vm3368, %v3327
        %3371 = vst.msk [vmem:[#allocation2 + $0x10] sm:$0xff] %vm3368, %v3328
        %3372 = vst.msk [vmem:[#allocation2 + $0x18] sm:$0xff] %vm3368, %v3329
        %3373 = vst.msk [vmem:[#allocation2 + $0x20] sm:$0xff] %vm3368, %v3330
        %3374 = vst.msk [vmem:[#allocation2 + $0x28] sm:$0xff] %vm3368, %v3331
        %3375 = vst.msk [vmem:[#allocation2 + $0x30] sm:$0xff] %vm3368, %v3332
        %3376 = vst.msk [vmem:[#allocation2 + $0x38] sm:$0xff] %vm3368, %v3333
        %3377 = vst.msk [vmem:[#allocation2 + $0x40] sm:$0xff] %vm3368, %v3334
        %3378 = vst.msk [vmem:[#allocation2 + $0x48] sm:$0xff] %vm3368, %v3335
        %3379 = vst.msk [vmem:[#allocation2 + $0x50] sm:$0xff] %vm3368, %v3336
        %3380 = vst.msk [vmem:[#allocation2 + $0x58] sm:$0xff] %vm3368, %v3337
        %3381 = vst.msk [vmem:[#allocation2 + $0x60] sm:$0xff] %vm3368, %v3338
        %3382 = vst.msk [vmem:[#allocation2 + $0x68] sm:$0xff] %vm3368, %v3339
        %3383 = vst.msk [vmem:[#allocation2 + $0x70] sm:$0xff] %vm3368, %v3340
        %3384 = vst.msk [vmem:[#allocation2 + $0x78] sm:$0xff] %vm3368, %v3341
        %3385 = vst.msk [vmem:[#allocation2 + $0x80] sm:$0xff] %vm3368, %v3342
        %3386 = vst.msk [vmem:[#allocation2 + $0x88] sm:$0xff] %vm3368, %v3343
        %3387 = vst.msk [vmem:[#allocation2 + $0x90] sm:$0xff] %vm3368, %v3344
        %3388 = vst.msk [vmem:[#allocation2 + $0x98] sm:$0xff] %vm3368, %v3345
        %v3389 = vld [vmem:[#allocation2] sm:$0xff]
        %v3390 = vld [vmem:[#allocation2 + $0x8] sm:$0xff]
        %v3391 = vld [vmem:[#allocation2 + $0x10] sm:$0xff]
        %v3392 = vld [vmem:[#allocation2 + $0x18] sm:$0xff]
        %v3393 = vld [vmem:[#allocation2 + $0x20] sm:$0xff]
        %v3394 = vld [vmem:[#allocation2 + $0x28] sm:$0xff]
        %v3395 = vld [vmem:[#allocation2 + $0x30] sm:$0xff]
        %v3396 = vld [vmem:[#allocation2 + $0x38] sm:$0xff]
        %v3397 = vld [vmem:[#allocation2 + $0x40] sm:$0xff]
        %v3398 = vld [vmem:[#allocation2 + $0x48] sm:$0xff]
        %v3399 = vld [vmem:[#allocation2 + $0x50] sm:$0xff]
        %v3400 = vld [vmem:[#allocation2 + $0x58] sm:$0xff]
        %v3401 = vld [vmem:[#allocation2 + $0x60] sm:$0xff]
        %v3402 = vld [vmem:[#allocation2 + $0x68] sm:$0xff]
        %v3403 = vld [vmem:[#allocation2 + $0x70] sm:$0xff]
        %v3404 = vld [vmem:[#allocation2 + $0x78] sm:$0xff]
        %v3405 = vld [vmem:[%s2] sm:$0xf]
        %v3406 = vld [vmem:[%s2 + $0x4] sm:$0xf]
        %v3407 = vld [vmem:[%s2 + $0x8] sm:$0xf]
        %v3408 = vld [vmem:[%s2 + $0xc] sm:$0xf]
        %v3409 = vld [vmem:[%s2 + $0x10] sm:$0xf]
        %v3410 = vld [vmem:[%s2 + $0x14] sm:$0xf]
        %v3411 = vld [vmem:[%s2 + $0x18] sm:$0xf]
        %v3412 = vld [vmem:[%s2 + $0x1c] sm:$0xf]
        %v3413 = vld [vmem:[%s2 + $0x20] sm:$0xf]
        %v3414 = vld [vmem:[%s2 + $0x24] sm:$0xf]
        %v3415 = vld [vmem:[%s2 + $0x28] sm:$0xf]
        %v3416 = vld [vmem:[%s2 + $0x2c] sm:$0xf]
        %v3417 = vld [vmem:[%s2 + $0x30] sm:$0xf]
        %v3418 = vld [vmem:[%s2 + $0x34] sm:$0xf]
        %v3419 = vld [vmem:[%s2 + $0x38] sm:$0xf]
        %v3420 = vld [vmem:[%s2 + $0x3c] sm:$0xf]
        %v3421 = vld [vmem:[%s2 + $0x40] sm:$0xf]
        %v3422 = vld [vmem:[%s2 + $0x44] sm:$0xf]
        %v3423 = vld [vmem:[%s2 + $0x48] sm:$0xf]
        %v3424 = vld [vmem:[%s2 + $0x4c] sm:$0xf]
        %v3425 = vld [vmem:[%s2 + $0x50] sm:$0xf]
        %v3426 = vld [vmem:[%s2 + $0x54] sm:$0xf]
        %v3427 = vld [vmem:[%s2 + $0x58] sm:$0xf]
        %v3428 = vld [vmem:[%s2 + $0x5c] sm:$0xf]
        %s3429 = scalar_lea.vmem [#allocation2], 16
        %v3430 = vld [vmem:[%s3429] sm:$0xff]
        %v3431 = vld [vmem:[%s3429 + $0x8] sm:$0xff]
        %v3432 = vld [vmem:[%s3429 + $0x10] sm:$0xff]
        %v3433 = vld [vmem:[%s3429 + $0x18] sm:$0xff]
        %v3434 = vld [vmem:[%s3429 + $0x20] sm:$0xff]
        %v3435 = vld [vmem:[%s3429 + $0x28] sm:$0xff]
        %v3436 = vld [vmem:[%s3429 + $0x30] sm:$0xff]
        %v3437 = vld [vmem:[%s3429 + $0x38] sm:$0xff]
        %v3438 = vld [vmem:[%s3429 + $0x40] sm:$0xff]
        %v3439 = vld [vmem:[%s3429 + $0x48] sm:$0xff]
        %v3440 = vld [vmem:[%s3429 + $0x50] sm:$0xff]
        %v3441 = vld [vmem:[%s3429 + $0x58] sm:$0xff]
        %v3442 = vld [vmem:[%s3429 + $0x60] sm:$0xff]
        %v3443 = vld [vmem:[%s3429 + $0x68] sm:$0xff]
        %v3444 = vld [vmem:[%s3429 + $0x70] sm:$0xff]
        %v3445 = vld [vmem:[%s3429 + $0x78] sm:$0xff]
        %s3446 = scalar_lea.vmem %s2, 96
        %v3447 = vld [vmem:[%s3446] sm:$0xf]
        %v3448 = vld [vmem:[%s3446 + $0x4] sm:$0xf]
        %v3449 = vld [vmem:[%s3446 + $0x8] sm:$0xf]
        %v3450 = vld [vmem:[%s3446 + $0xc] sm:$0xf]
        %v3451 = vld [vmem:[%s3446 + $0x10] sm:$0xf]
        %v3452 = vld [vmem:[%s3446 + $0x14] sm:$0xf]
        %v3453 = vld [vmem:[%s3446 + $0x18] sm:$0xf]
        %v3454 = vld [vmem:[%s3446 + $0x1c] sm:$0xf]
        %v3455 = vld [vmem:[%s3446 + $0x20] sm:$0xf]
        %v3456 = vld [vmem:[%s3446 + $0x24] sm:$0xf]
        %v3457 = vld [vmem:[%s3446 + $0x28] sm:$0xf]
        %v3458 = vld [vmem:[%s3446 + $0x2c] sm:$0xf]
        %v3459 = vld [vmem:[%s3446 + $0x30] sm:$0xf]
        %v3460 = vld [vmem:[%s3446 + $0x34] sm:$0xf]
        %v3461 = vld [vmem:[%s3446 + $0x38] sm:$0xf]
        %v3462 = vld [vmem:[%s3446 + $0x3c] sm:$0xf]
        %v3463 = vld [vmem:[%s3446 + $0x40] sm:$0xf]
        %v3464 = vld [vmem:[%s3446 + $0x44] sm:$0xf]
        %v3465 = vld [vmem:[%s3446 + $0x48] sm:$0xf]
        %v3466 = vld [vmem:[%s3446 + $0x4c] sm:$0xf]
        %v3467 = vld [vmem:[%s3446 + $0x50] sm:$0xf]
        %v3468 = vld [vmem:[%s3446 + $0x54] sm:$0xf]
        %v3469 = vld [vmem:[%s3446 + $0x58] sm:$0xf]
        %v3470 = vld [vmem:[%s3446 + $0x5c] sm:$0xf]
        %v3487 = vunpack.c.l.b16 %v3430
        %v3488 = vunpack.c.h.b16 %v3430
        %v3489 = vunpack.c.l.b16 %v3431
        %v3490 = vunpack.c.h.b16 %v3431
        %v3491 = vunpack.c.l.b16 %v3432
        %v3492 = vunpack.c.h.b16 %v3432
        %v3493 = vunpack.c.l.b16 %v3433
        %v3494 = vunpack.c.h.b16 %v3433
        %v3495 = vunpack.c.l.b16 %v3434
        %v3496 = vunpack.c.h.b16 %v3434
        %v3497 = vunpack.c.l.b16 %v3435
        %v3498 = vunpack.c.h.b16 %v3435
        %v3499 = vunpack.c.l.b16 %v3436
        %v3500 = vunpack.c.h.b16 %v3436
        %v3501 = vunpack.c.l.b16 %v3437
        %v3502 = vunpack.c.h.b16 %v3437
        %v3503 = vunpack.c.l.b16 %v3438
        %v3504 = vunpack.c.h.b16 %v3438
        %v3505 = vunpack.c.l.b16 %v3439
        %v3506 = vunpack.c.h.b16 %v3439
        %v3507 = vunpack.c.l.b16 %v3440
        %v3508 = vunpack.c.h.b16 %v3440
        %v3509 = vunpack.c.l.b16 %v3441
        %v3510 = vunpack.c.h.b16 %v3441
        %v3511 = vunpack.c.l.b16 %v3442
        %v3512 = vunpack.c.h.b16 %v3442
        %v3513 = vunpack.c.l.b16 %v3443
        %v3514 = vunpack.c.h.b16 %v3443
        %v3515 = vunpack.c.l.b16 %v3444
        %v3516 = vunpack.c.h.b16 %v3444
        %v3517 = vunpack.c.l.b16 %v3445
        %v3518 = vunpack.c.h.b16 %v3445
        %v3519 = vpack.c.b16 %v3489, %v3487
        %v3520 = vpack.c.b16 %v3490, %v3488
        %v3521 = vpack.c.b16 %v3493, %v3491
        %v3522 = vpack.c.b16 %v3494, %v3492
        %v3523 = vpack.c.b16 %v3497, %v3495
        %v3524 = vpack.c.b16 %v3498, %v3496
        %v3525 = vpack.c.b16 %v3501, %v3499
        %v3526 = vpack.c.b16 %v3502, %v3500
        %v3527 = vpack.c.b16 %v3505, %v3503
        %v3528 = vpack.c.b16 %v3506, %v3504
        %v3529 = vpack.c.b16 %v3509, %v3507
        %v3530 = vpack.c.b16 %v3510, %v3508
        %v3531 = vpack.c.b16 %v3513, %v3511
        %v3532 = vpack.c.b16 %v3514, %v3512
        %v3533 = vpack.c.b16 %v3517, %v3515
        %v3534 = vpack.c.b16 %v3518, %v3516
        %v3567 = vunpack.c.l.b16 %v3447
        %v3568 = vunpack.c.l.b16 %v3448
        %v3569 = vunpack.c.l.b16 %v3449
        %v3570 = vunpack.c.l.b16 %v3450
        %v3571 = vunpack.c.l.b16 %v3451
        %v3572 = vunpack.c.l.b16 %v3452
        %v3573 = vunpack.c.l.b16 %v3453
        %v3574 = vunpack.c.l.b16 %v3454
        %v3575 = vunpack.c.l.b16 %v3455
        %v3576 = vunpack.c.l.b16 %v3456
        %v3577 = vunpack.c.l.b16 %v3457
        %v3578 = vunpack.c.l.b16 %v3458
        %v3579 = vunpack.c.l.b16 %v3459
        %v3580 = vunpack.c.l.b16 %v3460
        %v3581 = vunpack.c.l.b16 %v3461
        %v3582 = vunpack.c.l.b16 %v3462
        %v3583 = vunpack.c.l.b16 %v3463
        %v3584 = vunpack.c.l.b16 %v3464
        %v3585 = vunpack.c.l.b16 %v3465
        %v3586 = vunpack.c.l.b16 %v3466
        %v3587 = vunpack.c.l.b16 %v3467
        %v3588 = vunpack.c.l.b16 %v3468
        %v3589 = vunpack.c.l.b16 %v3469
        %v3590 = vunpack.c.l.b16 %v3470
        %v3591 = vpack.c.b16 %v3568, %v3567
        %v3592 = vpack.c.b16 %v3570, %v3569
        %v3593 = vpack.c.b16 %v3572, %v3571
        %v3594 = vpack.c.b16 %v3574, %v3573
        %v3595 = vpack.c.b16 %v3576, %v3575
        %v3596 = vpack.c.b16 %v3578, %v3577
        %v3597 = vpack.c.b16 %v3580, %v3579
        %v3598 = vpack.c.b16 %v3582, %v3581
        %v3599 = vpack.c.b16 %v3584, %v3583
        %v3600 = vpack.c.b16 %v3586, %v3585
        %v3601 = vpack.c.b16 %v3588, %v3587
        %v3602 = vpack.c.b16 %v3590, %v3589
        %v3616 = vsel %vm3225, %v3520, 0
        %v3619 = vsel %vm3225, %v3522, 0
        %v3622 = vsel %vm3225, %v3524, 0
        %v3625 = vsel %vm3225, %v3526, 0
        %v3628 = vsel %vm3225, %v3528, 0
        %v3631 = vsel %vm3225, %v3530, 0
        %v3634 = vsel %vm3225, %v3532, 0
        %v3637 = vsel %vm3225, %v3534, 0
        %3639 = vmatprep.subr.bf16.mxu0 0
        %3640 = vmatpush1.bf16.msra.mxu0 %v3598
        %3641 = vmatprep.subr.bf16.mxu0 0
        %3642 = vmatpush1.bf16.msra.mxu0 %v3597
        %3643 = vmatprep.subr.bf16.mxu0 0
        %3644 = vmatpush1.bf16.msra.mxu0 %v3596
        %3645 = vmatprep.subr.bf16.mxu0 0
        %3646 = vmatpush1.bf16.msra.mxu0 %v3595
        %3647 = vmatprep.subr.bf16.mxu0 0
        %3648 = vmatpush1.bf16.msra.mxu0 %v3594
        %3649 = vmatprep.subr.bf16.mxu0 0
        %3650 = vmatpush1.bf16.msra.mxu0 %v3593
        %3651 = vmatprep.subr.bf16.mxu0 0
        %3652 = vmatpush1.bf16.msra.mxu0 %v3592
        %3653 = vmatprep.subr.bf16.mxu0 0
        %3654 = vmatpush1.bf16.msra.mxu0 %v3591
        %3655 = vmatprep.subr.bf16.mxu0 0
        %3656 = vmatpush2.bf16.msra.mxu0 0
        %3657 = vmatprep.subr.bf16.mxu0 0
        %3658 = vmatpush2.bf16.msra.mxu0 0
        %3659 = vmatprep.subr.bf16.mxu0 0
        %3660 = vmatpush2.bf16.msra.mxu0 0
        %3661 = vmatprep.subr.bf16.mxu0 0
        %3662 = vmatpush2.bf16.msra.mxu0 0
        %3663 = vmatprep.subr.bf16.mxu0 0
        %3664 = vmatpush2.bf16.msra.mxu0 %v3602
        %3665 = vmatprep.subr.bf16.mxu0 0
        %3666 = vmatpush2.bf16.msra.mxu0 %v3601
        %3667 = vmatprep.subr.bf16.mxu0 0
        %3668 = vmatpush2.bf16.msra.mxu0 %v3600
        %3669 = vmatprep.subr.bf16.mxu0 0
        %3670 = vmatpush2.bf16.msra.mxu0 %v3599
        %3671 = vmatprep.mubr.bf16.mxu0 %v3616
        %3672 = vmatmul.mubr.bf16.gmra.mxu0 %v3519
        %v3673 = vpop.f32.mrf.mxu0
        %v3674 = vadd.f32 0.0, %v3673
        %v3675 = vpop.f32.mrf.mxu0
        %v3676 = vpop.f32.mrf.mxu0
        %v3677 = vadd.f32 0.0, %v3676
        %v3678 = vpop.f32.mrf.mxu0
        %3679 = vmatprep.mubr.bf16.mxu0 %v3619
        %3680 = vmatmul.mubr.bf16.gmra.mxu0 %v3521
        %v3681 = vpop.f32.mrf.mxu0
        %v3682 = vadd.f32 0.0, %v3681
        %v3683 = vpop.f32.mrf.mxu0
        %v3684 = vpop.f32.mrf.mxu0
        %v3685 = vadd.f32 0.0, %v3684
        %v3686 = vpop.f32.mrf.mxu0
        %3687 = vmatprep.mubr.bf16.mxu0 %v3622
        %3688 = vmatmul.mubr.bf16.gmra.mxu0 %v3523
        %v3689 = vpop.f32.mrf.mxu0
        %v3690 = vadd.f32 0.0, %v3689
        %v3691 = vpop.f32.mrf.mxu0
        %v3692 = vpop.f32.mrf.mxu0
        %v3693 = vadd.f32 0.0, %v3692
        %v3694 = vpop.f32.mrf.mxu0
        %3695 = vmatprep.mubr.bf16.mxu0 %v3625
        %3696 = vmatmul.mubr.bf16.gmra.mxu0 %v3525
        %v3697 = vpop.f32.mrf.mxu0
        %v3698 = vadd.f32 0.0, %v3697
        %v3699 = vpop.f32.mrf.mxu0
        %v3700 = vpop.f32.mrf.mxu0
        %v3701 = vadd.f32 0.0, %v3700
        %v3702 = vpop.f32.mrf.mxu0
        %3703 = vmatprep.mubr.bf16.mxu0 %v3628
        %3704 = vmatmul.mubr.bf16.gmra.mxu0 %v3527
        %v3705 = vpop.f32.mrf.mxu0
        %v3706 = vadd.f32 0.0, %v3705
        %v3707 = vpop.f32.mrf.mxu0
        %v3708 = vpop.f32.mrf.mxu0
        %v3709 = vadd.f32 0.0, %v3708
        %v3710 = vpop.f32.mrf.mxu0
        %3711 = vmatprep.mubr.bf16.mxu0 %v3631
        %3712 = vmatmul.mubr.bf16.gmra.mxu0 %v3529
        %v3713 = vpop.f32.mrf.mxu0
        %v3714 = vadd.f32 0.0, %v3713
        %v3715 = vpop.f32.mrf.mxu0
        %v3716 = vpop.f32.mrf.mxu0
        %v3717 = vadd.f32 0.0, %v3716
        %v3718 = vpop.f32.mrf.mxu0
        %3719 = vmatprep.mubr.bf16.mxu0 %v3634
        %3720 = vmatmul.mubr.bf16.gmra.mxu0 %v3531
        %v3721 = vpop.f32.mrf.mxu0
        %v3722 = vadd.f32 0.0, %v3721
        %v3723 = vpop.f32.mrf.mxu0
        %v3724 = vpop.f32.mrf.mxu0
        %v3725 = vadd.f32 0.0, %v3724
        %v3726 = vpop.f32.mrf.mxu0
        %3727 = vmatprep.mubr.bf16.mxu0 %v3637
        %3728 = vmatmul.mubr.bf16.gmra.mxu0 %v3533
        %v3729 = vpop.f32.mrf.mxu0
        %v3730 = vadd.f32 0.0, %v3729
        %v3731 = vpop.f32.mrf.mxu0
        %v3732 = vpop.f32.mrf.mxu0
        %v3733 = vadd.f32 0.0, %v3732
        %v3734 = vpop.f32.mrf.mxu0
        %3735 = vdwg.mxu0
        %v3752 = vunpack.c.l.b16 %v3389
        %v3753 = vunpack.c.h.b16 %v3389
        %v3754 = vunpack.c.l.b16 %v3390
        %v3755 = vunpack.c.h.b16 %v3390
        %v3756 = vunpack.c.l.b16 %v3391
        %v3757 = vunpack.c.h.b16 %v3391
        %v3758 = vunpack.c.l.b16 %v3392
        %v3759 = vunpack.c.h.b16 %v3392
        %v3760 = vunpack.c.l.b16 %v3393
        %v3761 = vunpack.c.h.b16 %v3393
        %v3762 = vunpack.c.l.b16 %v3394
        %v3763 = vunpack.c.h.b16 %v3394
        %v3764 = vunpack.c.l.b16 %v3395
        %v3765 = vunpack.c.h.b16 %v3395
        %v3766 = vunpack.c.l.b16 %v3396
        %v3767 = vunpack.c.h.b16 %v3396
        %v3768 = vunpack.c.l.b16 %v3397
        %v3769 = vunpack.c.h.b16 %v3397
        %v3770 = vunpack.c.l.b16 %v3398
        %v3771 = vunpack.c.h.b16 %v3398
        %v3772 = vunpack.c.l.b16 %v3399
        %v3773 = vunpack.c.h.b16 %v3399
        %v3774 = vunpack.c.l.b16 %v3400
        %v3775 = vunpack.c.h.b16 %v3400
        %v3776 = vunpack.c.l.b16 %v3401
        %v3777 = vunpack.c.h.b16 %v3401
        %v3778 = vunpack.c.l.b16 %v3402
        %v3779 = vunpack.c.h.b16 %v3402
        %v3780 = vunpack.c.l.b16 %v3403
        %v3781 = vunpack.c.h.b16 %v3403
        %v3782 = vunpack.c.l.b16 %v3404
        %v3783 = vunpack.c.h.b16 %v3404
        %v3784 = vpack.c.b16 %v3754, %v3752
        %v3785 = vpack.c.b16 %v3755, %v3753
        %v3786 = vpack.c.b16 %v3758, %v3756
        %v3787 = vpack.c.b16 %v3759, %v3757
        %v3788 = vpack.c.b16 %v3762, %v3760
        %v3789 = vpack.c.b16 %v3763, %v3761
        %v3790 = vpack.c.b16 %v3766, %v3764
        %v3791 = vpack.c.b16 %v3767, %v3765
        %v3792 = vpack.c.b16 %v3770, %v3768
        %v3793 = vpack.c.b16 %v3771, %v3769
        %v3794 = vpack.c.b16 %v3774, %v3772
        %v3795 = vpack.c.b16 %v3775, %v3773
        %v3796 = vpack.c.b16 %v3778, %v3776
        %v3797 = vpack.c.b16 %v3779, %v3777
        %v3798 = vpack.c.b16 %v3782, %v3780
        %v3799 = vpack.c.b16 %v3783, %v3781
        %v3832 = vunpack.c.l.b16 %v3405
        %v3833 = vunpack.c.l.b16 %v3406
        %v3834 = vunpack.c.l.b16 %v3407
        %v3835 = vunpack.c.l.b16 %v3408
        %v3836 = vunpack.c.l.b16 %v3409
        %v3837 = vunpack.c.l.b16 %v3410
        %v3838 = vunpack.c.l.b16 %v3411
        %v3839 = vunpack.c.l.b16 %v3412
        %v3840 = vunpack.c.l.b16 %v3413
        %v3841 = vunpack.c.l.b16 %v3414
        %v3842 = vunpack.c.l.b16 %v3415
        %v3843 = vunpack.c.l.b16 %v3416
        %v3844 = vunpack.c.l.b16 %v3417
        %v3845 = vunpack.c.l.b16 %v3418
        %v3846 = vunpack.c.l.b16 %v3419
        %v3847 = vunpack.c.l.b16 %v3420
        %v3848 = vunpack.c.l.b16 %v3421
        %v3849 = vunpack.c.l.b16 %v3422
        %v3850 = vunpack.c.l.b16 %v3423
        %v3851 = vunpack.c.l.b16 %v3424
        %v3852 = vunpack.c.l.b16 %v3425
        %v3853 = vunpack.c.l.b16 %v3426
        %v3854 = vunpack.c.l.b16 %v3427
        %v3855 = vunpack.c.l.b16 %v3428
        %v3856 = vpack.c.b16 %v3833, %v3832
        %v3857 = vpack.c.b16 %v3835, %v3834
        %v3858 = vpack.c.b16 %v3837, %v3836
        %v3859 = vpack.c.b16 %v3839, %v3838
        %v3860 = vpack.c.b16 %v3841, %v3840
        %v3861 = vpack.c.b16 %v3843, %v3842
        %v3862 = vpack.c.b16 %v3845, %v3844
        %v3863 = vpack.c.b16 %v3847, %v3846
        %v3864 = vpack.c.b16 %v3849, %v3848
        %v3865 = vpack.c.b16 %v3851, %v3850
        %v3866 = vpack.c.b16 %v3853, %v3852
        %v3867 = vpack.c.b16 %v3855, %v3854
        %v3881 = vsel %vm3225, %v3785, 0
        %v3884 = vsel %vm3225, %v3787, 0
        %v3887 = vsel %vm3225, %v3789, 0
        %v3890 = vsel %vm3225, %v3791, 0
        %v3893 = vsel %vm3225, %v3793, 0
        %v3896 = vsel %vm3225, %v3795, 0
        %v3899 = vsel %vm3225, %v3797, 0
        %v3902 = vsel %vm3225, %v3799, 0
        %3904 = vmatprep.subr.bf16.mxu0 0
        %3905 = vmatpush1.bf16.msra.mxu0 %v3863
        %3906 = vmatprep.subr.bf16.mxu0 0
        %3907 = vmatpush1.bf16.msra.mxu0 %v3862
        %3908 = vmatprep.subr.bf16.mxu0 0
        %3909 = vmatpush1.bf16.msra.mxu0 %v3861
        %3910 = vmatprep.subr.bf16.mxu0 0
        %3911 = vmatpush1.bf16.msra.mxu0 %v3860
        %3912 = vmatprep.subr.bf16.mxu0 0
        %3913 = vmatpush1.bf16.msra.mxu0 %v3859
        %3914 = vmatprep.subr.bf16.mxu0 0
        %3915 = vmatpush1.bf16.msra.mxu0 %v3858
        %3916 = vmatprep.subr.bf16.mxu0 0
        %3917 = vmatpush1.bf16.msra.mxu0 %v3857
        %3918 = vmatprep.subr.bf16.mxu0 0
        %3919 = vmatpush1.bf16.msra.mxu0 %v3856
        %3920 = vmatprep.subr.bf16.mxu0 0
        %3921 = vmatpush2.bf16.msra.mxu0 0
        %3922 = vmatprep.subr.bf16.mxu0 0
        %3923 = vmatpush2.bf16.msra.mxu0 0
        %3924 = vmatprep.subr.bf16.mxu0 0
        %3925 = vmatpush2.bf16.msra.mxu0 0
        %3926 = vmatprep.subr.bf16.mxu0 0
        %3927 = vmatpush2.bf16.msra.mxu0 0
        %3928 = vmatprep.subr.bf16.mxu0 0
        %3929 = vmatpush2.bf16.msra.mxu0 %v3867
        %3930 = vmatprep.subr.bf16.mxu0 0
        %3931 = vmatpush2.bf16.msra.mxu0 %v3866
        %3932 = vmatprep.subr.bf16.mxu0 0
        %3933 = vmatpush2.bf16.msra.mxu0 %v3865
        %3934 = vmatprep.subr.bf16.mxu0 0
        %3935 = vmatpush2.bf16.msra.mxu0 %v3864
        %3936 = vmatprep.mubr.bf16.mxu0 %v3881
        %3937 = vmatmul.mubr.bf16.gmra.mxu0 %v3784
        %v3938 = vpop.f32.mrf.mxu0
        %v3939 = vadd.f32 %v3674, %v3938
        %v3940 = vpop.f32.mrf.mxu0
        %v3941 = vpop.f32.mrf.mxu0
        %v3942 = vadd.f32 %v3677, %v3941
        %v3943 = vpop.f32.mrf.mxu0
        %3944 = vmatprep.mubr.bf16.mxu0 %v3884
        %3945 = vmatmul.mubr.bf16.gmra.mxu0 %v3786
        %v3946 = vpop.f32.mrf.mxu0
        %v3947 = vadd.f32 %v3682, %v3946
        %v3948 = vpop.f32.mrf.mxu0
        %v3949 = vpop.f32.mrf.mxu0
        %v3950 = vadd.f32 %v3685, %v3949
        %v3951 = vpop.f32.mrf.mxu0
        %3952 = vmatprep.mubr.bf16.mxu0 %v3887
        %3953 = vmatmul.mubr.bf16.gmra.mxu0 %v3788
        %v3954 = vpop.f32.mrf.mxu0
        %v3955 = vadd.f32 %v3690, %v3954
        %v3956 = vpop.f32.mrf.mxu0
        %v3957 = vpop.f32.mrf.mxu0
        %v3958 = vadd.f32 %v3693, %v3957
        %v3959 = vpop.f32.mrf.mxu0
        %3960 = vmatprep.mubr.bf16.mxu0 %v3890
        %3961 = vmatmul.mubr.bf16.gmra.mxu0 %v3790
        %v3962 = vpop.f32.mrf.mxu0
        %v3963 = vadd.f32 %v3698, %v3962
        %v3964 = vpop.f32.mrf.mxu0
        %v3965 = vpop.f32.mrf.mxu0
        %v3966 = vadd.f32 %v3701, %v3965
        %v3967 = vpop.f32.mrf.mxu0
        %3968 = vmatprep.mubr.bf16.mxu0 %v3893
        %3969 = vmatmul.mubr.bf16.gmra.mxu0 %v3792
        %v3970 = vpop.f32.mrf.mxu0
        %v3971 = vadd.f32 %v3706, %v3970
        %v3972 = vpop.f32.mrf.mxu0
        %v3973 = vpop.f32.mrf.mxu0
        %v3974 = vadd.f32 %v3709, %v3973
        %v3975 = vpop.f32.mrf.mxu0
        %3976 = vmatprep.mubr.bf16.mxu0 %v3896
        %3977 = vmatmul.mubr.bf16.gmra.mxu0 %v3794
        %v3978 = vpop.f32.mrf.mxu0
        %v3979 = vadd.f32 %v3714, %v3978
        %v3980 = vpop.f32.mrf.mxu0
        %v3981 = vpop.f32.mrf.mxu0
        %v3982 = vadd.f32 %v3717, %v3981
        %v3983 = vpop.f32.mrf.mxu0
        %3984 = vmatprep.mubr.bf16.mxu0 %v3899
        %3985 = vmatmul.mubr.bf16.gmra.mxu0 %v3796
        %v3986 = vpop.f32.mrf.mxu0
        %v3987 = vadd.f32 %v3722, %v3986
        %v3988 = vpop.f32.mrf.mxu0
        %v3989 = vpop.f32.mrf.mxu0
        %v3990 = vadd.f32 %v3725, %v3989
        %v3991 = vpop.f32.mrf.mxu0
        %3992 = vmatprep.mubr.bf16.mxu0 %v3902
        %3993 = vmatmul.mubr.bf16.gmra.mxu0 %v3798
        %v3994 = vpop.f32.mrf.mxu0
        %v3995 = vadd.f32 %v3730, %v3994
        %v3996 = vpop.f32.mrf.mxu0
        %v3997 = vpop.f32.mrf.mxu0
        %v3998 = vadd.f32 %v3733, %v3997
        %v3999 = vpop.f32.mrf.mxu0
        %4000 = vdwg.mxu0
        %s4001 = scalar_lea.vmem [#allocation2], 32
        %v4002 = vld [vmem:[%s4001] sm:$0xff]
        %v4003 = vld [vmem:[%s4001 + $0x8] sm:$0xff]
        %v4004 = vld [vmem:[%s4001 + $0x10] sm:$0xff]
        %v4005 = vld [vmem:[%s4001 + $0x18] sm:$0xff]
        %v4006 = vld [vmem:[%s4001 + $0x20] sm:$0xff]
        %v4007 = vld [vmem:[%s4001 + $0x28] sm:$0xff]
        %v4008 = vld [vmem:[%s4001 + $0x30] sm:$0xff]
        %v4009 = vld [vmem:[%s4001 + $0x38] sm:$0xff]
        %v4010 = vld [vmem:[%s4001 + $0x40] sm:$0xff]
        %v4011 = vld [vmem:[%s4001 + $0x48] sm:$0xff]
        %v4012 = vld [vmem:[%s4001 + $0x50] sm:$0xff]
        %v4013 = vld [vmem:[%s4001 + $0x58] sm:$0xff]
        %v4014 = vld [vmem:[%s4001 + $0x60] sm:$0xff]
        %v4015 = vld [vmem:[%s4001 + $0x68] sm:$0xff]
        %v4016 = vld [vmem:[%s4001 + $0x70] sm:$0xff]
        %v4017 = vld [vmem:[%s4001 + $0x78] sm:$0xff]
        %s4018 = scalar_lea.vmem %s2, 192
        %v4019 = vld [vmem:[%s4018] sm:$0xf]
        %v4020 = vld [vmem:[%s4018 + $0x4] sm:$0xf]
        %v4021 = vld [vmem:[%s4018 + $0x8] sm:$0xf]
        %v4022 = vld [vmem:[%s4018 + $0xc] sm:$0xf]
        %v4023 = vld [vmem:[%s4018 + $0x10] sm:$0xf]
        %v4024 = vld [vmem:[%s4018 + $0x14] sm:$0xf]
        %v4025 = vld [vmem:[%s4018 + $0x18] sm:$0xf]
        %v4026 = vld [vmem:[%s4018 + $0x1c] sm:$0xf]
        %v4027 = vld [vmem:[%s4018 + $0x20] sm:$0xf]
        %v4028 = vld [vmem:[%s4018 + $0x24] sm:$0xf]
        %v4029 = vld [vmem:[%s4018 + $0x28] sm:$0xf]
        %v4030 = vld [vmem:[%s4018 + $0x2c] sm:$0xf]
        %v4031 = vld [vmem:[%s4018 + $0x30] sm:$0xf]
        %v4032 = vld [vmem:[%s4018 + $0x34] sm:$0xf]
        %v4033 = vld [vmem:[%s4018 + $0x38] sm:$0xf]
        %v4034 = vld [vmem:[%s4018 + $0x3c] sm:$0xf]
        %v4035 = vld [vmem:[%s4018 + $0x40] sm:$0xf]
        %v4036 = vld [vmem:[%s4018 + $0x44] sm:$0xf]
        %v4037 = vld [vmem:[%s4018 + $0x48] sm:$0xf]
        %v4038 = vld [vmem:[%s4018 + $0x4c] sm:$0xf]
        %v4039 = vld [vmem:[%s4018 + $0x50] sm:$0xf]
        %v4040 = vld [vmem:[%s4018 + $0x54] sm:$0xf]
        %v4041 = vld [vmem:[%s4018 + $0x58] sm:$0xf]
        %v4042 = vld [vmem:[%s4018 + $0x5c] sm:$0xf]
        %v4059 = vunpack.c.l.b16 %v4002
        %v4060 = vunpack.c.h.b16 %v4002
        %v4061 = vunpack.c.l.b16 %v4003
        %v4062 = vunpack.c.h.b16 %v4003
        %v4063 = vunpack.c.l.b16 %v4004
        %v4064 = vunpack.c.h.b16 %v4004
        %v4065 = vunpack.c.l.b16 %v4005
        %v4066 = vunpack.c.h.b16 %v4005
        %v4067 = vunpack.c.l.b16 %v4006
        %v4068 = vunpack.c.h.b16 %v4006
        %v4069 = vunpack.c.l.b16 %v4007
        %v4070 = vunpack.c.h.b16 %v4007
        %v4071 = vunpack.c.l.b16 %v4008
        %v4072 = vunpack.c.h.b16 %v4008
        %v4073 = vunpack.c.l.b16 %v4009
        %v4074 = vunpack.c.h.b16 %v4009
        %v4075 = vunpack.c.l.b16 %v4010
        %v4076 = vunpack.c.h.b16 %v4010
        %v4077 = vunpack.c.l.b16 %v4011
        %v4078 = vunpack.c.h.b16 %v4011
        %v4079 = vunpack.c.l.b16 %v4012
        %v4080 = vunpack.c.h.b16 %v4012
        %v4081 = vunpack.c.l.b16 %v4013
        %v4082 = vunpack.c.h.b16 %v4013
        %v4083 = vunpack.c.l.b16 %v4014
        %v4084 = vunpack.c.h.b16 %v4014
        %v4085 = vunpack.c.l.b16 %v4015
        %v4086 = vunpack.c.h.b16 %v4015
        %v4087 = vunpack.c.l.b16 %v4016
        %v4088 = vunpack.c.h.b16 %v4016
        %v4089 = vunpack.c.l.b16 %v4017
        %v4090 = vunpack.c.h.b16 %v4017
        %v4091 = vpack.c.b16 %v4061, %v4059
        %v4092 = vpack.c.b16 %v4062, %v4060
        %v4093 = vpack.c.b16 %v4065, %v4063
        %v4094 = vpack.c.b16 %v4066, %v4064
        %v4095 = vpack.c.b16 %v4069, %v4067
        %v4096 = vpack.c.b16 %v4070, %v4068
        %v4097 = vpack.c.b16 %v4073, %v4071
        %v4098 = vpack.c.b16 %v4074, %v4072
        %v4099 = vpack.c.b16 %v4077, %v4075
        %v4100 = vpack.c.b16 %v4078, %v4076
        %v4101 = vpack.c.b16 %v4081, %v4079
        %v4102 = vpack.c.b16 %v4082, %v4080
        %v4103 = vpack.c.b16 %v4085, %v4083
        %v4104 = vpack.c.b16 %v4086, %v4084
        %v4105 = vpack.c.b16 %v4089, %v4087
        %v4106 = vpack.c.b16 %v4090, %v4088
        %v4139 = vunpack.c.l.b16 %v4019
        %v4140 = vunpack.c.l.b16 %v4020
        %v4141 = vunpack.c.l.b16 %v4021
        %v4142 = vunpack.c.l.b16 %v4022
        %v4143 = vunpack.c.l.b16 %v4023
        %v4144 = vunpack.c.l.b16 %v4024
        %v4145 = vunpack.c.l.b16 %v4025
        %v4146 = vunpack.c.l.b16 %v4026
        %v4147 = vunpack.c.l.b16 %v4027
        %v4148 = vunpack.c.l.b16 %v4028
        %v4149 = vunpack.c.l.b16 %v4029
        %v4150 = vunpack.c.l.b16 %v4030
        %v4151 = vunpack.c.l.b16 %v4031
        %v4152 = vunpack.c.l.b16 %v4032
        %v4153 = vunpack.c.l.b16 %v4033
        %v4154 = vunpack.c.l.b16 %v4034
        %v4155 = vunpack.c.l.b16 %v4035
        %v4156 = vunpack.c.l.b16 %v4036
        %v4157 = vunpack.c.l.b16 %v4037
        %v4158 = vunpack.c.l.b16 %v4038
        %v4159 = vunpack.c.l.b16 %v4039
        %v4160 = vunpack.c.l.b16 %v4040
        %v4161 = vunpack.c.l.b16 %v4041
        %v4162 = vunpack.c.l.b16 %v4042
        %v4163 = vpack.c.b16 %v4140, %v4139
        %v4164 = vpack.c.b16 %v4142, %v4141
        %v4165 = vpack.c.b16 %v4144, %v4143
        %v4166 = vpack.c.b16 %v4146, %v4145
        %v4167 = vpack.c.b16 %v4148, %v4147
        %v4168 = vpack.c.b16 %v4150, %v4149
        %v4169 = vpack.c.b16 %v4152, %v4151
        %v4170 = vpack.c.b16 %v4154, %v4153
        %v4171 = vpack.c.b16 %v4156, %v4155
        %v4172 = vpack.c.b16 %v4158, %v4157
        %v4173 = vpack.c.b16 %v4160, %v4159
        %v4174 = vpack.c.b16 %v4162, %v4161
        %v4188 = vsel %vm3225, %v4092, 0
        %v4191 = vsel %vm3225, %v4094, 0
        %v4194 = vsel %vm3225, %v4096, 0
        %v4197 = vsel %vm3225, %v4098, 0
        %v4200 = vsel %vm3225, %v4100, 0
        %v4203 = vsel %vm3225, %v4102, 0
        %v4206 = vsel %vm3225, %v4104, 0
        %v4209 = vsel %vm3225, %v4106, 0
        %4211 = vmatprep.subr.bf16.mxu0 0
        %4212 = vmatpush1.bf16.msra.mxu0 %v4170
        %4213 = vmatprep.subr.bf16.mxu0 0
        %4214 = vmatpush1.bf16.msra.mxu0 %v4169
        %4215 = vmatprep.subr.bf16.mxu0 0
        %4216 = vmatpush1.bf16.msra.mxu0 %v4168
        %4217 = vmatprep.subr.bf16.mxu0 0
        %4218 = vmatpush1.bf16.msra.mxu0 %v4167
        %4219 = vmatprep.subr.bf16.mxu0 0
        %4220 = vmatpush1.bf16.msra.mxu0 %v4166
        %4221 = vmatprep.subr.bf16.mxu0 0
        %4222 = vmatpush1.bf16.msra.mxu0 %v4165
        %4223 = vmatprep.subr.bf16.mxu0 0
        %4224 = vmatpush1.bf16.msra.mxu0 %v4164
        %4225 = vmatprep.subr.bf16.mxu0 0
        %4226 = vmatpush1.bf16.msra.mxu0 %v4163
        %4227 = vmatprep.subr.bf16.mxu0 0
        %4228 = vmatpush2.bf16.msra.mxu0 0
        %4229 = vmatprep.subr.bf16.mxu0 0
        %4230 = vmatpush2.bf16.msra.mxu0 0
        %4231 = vmatprep.subr.bf16.mxu0 0
        %4232 = vmatpush2.bf16.msra.mxu0 0
        %4233 = vmatprep.subr.bf16.mxu0 0
        %4234 = vmatpush2.bf16.msra.mxu0 0
        %4235 = vmatprep.subr.bf16.mxu0 0
        %4236 = vmatpush2.bf16.msra.mxu0 %v4174
        %4237 = vmatprep.subr.bf16.mxu0 0
        %4238 = vmatpush2.bf16.msra.mxu0 %v4173
        %4239 = vmatprep.subr.bf16.mxu0 0
        %4240 = vmatpush2.bf16.msra.mxu0 %v4172
        %4241 = vmatprep.subr.bf16.mxu0 0
        %4242 = vmatpush2.bf16.msra.mxu0 %v4171
        %4243 = vmatprep.mubr.bf16.mxu0 %v4188
        %4244 = vmatmul.mubr.bf16.gmra.mxu0 %v4091
        %v4245 = vpop.f32.mrf.mxu0
        %v4246 = vadd.f32 0.0, %v4245
        %v4247 = vpop.f32.mrf.mxu0
        %v4248 = vpop.f32.mrf.mxu0
        %v4249 = vadd.f32 0.0, %v4248
        %v4250 = vpop.f32.mrf.mxu0
        %4251 = vmatprep.mubr.bf16.mxu0 %v4191
        %4252 = vmatmul.mubr.bf16.gmra.mxu0 %v4093
        %v4253 = vpop.f32.mrf.mxu0
        %v4254 = vadd.f32 0.0, %v4253
        %v4255 = vpop.f32.mrf.mxu0
        %v4256 = vpop.f32.mrf.mxu0
        %v4257 = vadd.f32 0.0, %v4256
        %v4258 = vpop.f32.mrf.mxu0
        %4259 = vmatprep.mubr.bf16.mxu0 %v4194
        %4260 = vmatmul.mubr.bf16.gmra.mxu0 %v4095
        %v4261 = vpop.f32.mrf.mxu0
        %v4262 = vadd.f32 0.0, %v4261
        %v4263 = vpop.f32.mrf.mxu0
        %v4264 = vpop.f32.mrf.mxu0
        %v4265 = vadd.f32 0.0, %v4264
        %v4266 = vpop.f32.mrf.mxu0
        %4267 = vmatprep.mubr.bf16.mxu0 %v4197
        %4268 = vmatmul.mubr.bf16.gmra.mxu0 %v4097
        %v4269 = vpop.f32.mrf.mxu0
        %v4270 = vadd.f32 0.0, %v4269
        %v4271 = vpop.f32.mrf.mxu0
        %v4272 = vpop.f32.mrf.mxu0
        %v4273 = vadd.f32 0.0, %v4272
        %v4274 = vpop.f32.mrf.mxu0
        %4275 = vmatprep.mubr.bf16.mxu0 %v4200
        %4276 = vmatmul.mubr.bf16.gmra.mxu0 %v4099
        %v4277 = vpop.f32.mrf.mxu0
        %v4278 = vadd.f32 0.0, %v4277
        %v4279 = vpop.f32.mrf.mxu0
        %v4280 = vpop.f32.mrf.mxu0
        %v4281 = vadd.f32 0.0, %v4280
        %v4282 = vpop.f32.mrf.mxu0
        %4283 = vmatprep.mubr.bf16.mxu0 %v4203
        %4284 = vmatmul.mubr.bf16.gmra.mxu0 %v4101
        %v4285 = vpop.f32.mrf.mxu0
        %v4286 = vadd.f32 0.0, %v4285
        %v4287 = vpop.f32.mrf.mxu0
        %v4288 = vpop.f32.mrf.mxu0
        %v4289 = vadd.f32 0.0, %v4288
        %v4290 = vpop.f32.mrf.mxu0
        %4291 = vmatprep.mubr.bf16.mxu0 %v4206
        %4292 = vmatmul.mubr.bf16.gmra.mxu0 %v4103
        %v4293 = vpop.f32.mrf.mxu0
        %v4294 = vadd.f32 0.0, %v4293
        %v4295 = vpop.f32.mrf.mxu0
        %v4296 = vpop.f32.mrf.mxu0
        %v4297 = vadd.f32 0.0, %v4296
        %v4298 = vpop.f32.mrf.mxu0
        %4299 = vmatprep.mubr.bf16.mxu0 %v4209
        %4300 = vmatmul.mubr.bf16.gmra.mxu0 %v4105
        %v4301 = vpop.f32.mrf.mxu0
        %v4302 = vadd.f32 0.0, %v4301
        %v4303 = vpop.f32.mrf.mxu0
        %v4304 = vpop.f32.mrf.mxu0
        %v4305 = vadd.f32 0.0, %v4304
        %v4306 = vpop.f32.mrf.mxu0
        %4307 = vdwg.mxu0
        %v4308 = vadd.f32 %v3939, %v4246
        %v4309 = vadd.f32 %v3942, %v4249
        %v4310 = vadd.f32 %v3947, %v4254
        %v4311 = vadd.f32 %v3950, %v4257
        %v4312 = vadd.f32 %v3955, %v4262
        %v4313 = vadd.f32 %v3958, %v4265
        %v4314 = vadd.f32 %v3963, %v4270
        %v4315 = vadd.f32 %v3966, %v4273
        %v4316 = vadd.f32 %v3971, %v4278
        %v4317 = vadd.f32 %v3974, %v4281
        %v4318 = vadd.f32 %v3979, %v4286
        %v4319 = vadd.f32 %v3982, %v4289
        %v4320 = vadd.f32 %v3987, %v4294
        %v4321 = vadd.f32 %v3990, %v4297
        %v4322 = vadd.f32 %v3995, %v4302
        %v4323 = vadd.f32 %v3998, %v4305
        %v4324 = vlaneseq
        %v4325 = vshrl.u32 %v4324, 7
        %v4326 = vsub.s32 2, %v4325
        %v4327 = vrot.slane %v551, %v4326
        %v4328 = vmul.f32 %v4308, %v4327
        %v4329 = vmul.f32 %v4309, %v4327
        %v4330 = vmul.f32 %v4310, %v4327
        %v4331 = vmul.f32 %v4311, %v4327
        %v4332 = vmul.f32 %v4312, %v4327
        %v4333 = vmul.f32 %v4313, %v4327
        %v4334 = vmul.f32 %v4314, %v4327
        %v4335 = vmul.f32 %v4315, %v4327
        %v4336 = vmul.f32 %v4316, %v4327
        %v4337 = vmul.f32 %v4317, %v4327
        %v4338 = vmul.f32 %v4318, %v4327
        %v4339 = vmul.f32 %v4319, %v4327
        %v4340 = vmul.f32 %v4320, %v4327
        %v4341 = vmul.f32 %v4321, %v4327
        %v4342 = vmul.f32 %v4322, %v4327
        %v4343 = vmul.f32 %v4323, %v4327
        %v4344 = vlaneseq
        %v4345 = vshrl.u32 %v4344, 7
        %v4346 = vsub.s32 3, %v4345
        %v4347 = vrot.slane %v551, %v4346
        %v4348 = vadd.f32 %v4328, %v4347
        %v4349 = vadd.f32 %v4329, %v4347
        %v4350 = vadd.f32 %v4330, %v4347
        %v4351 = vadd.f32 %v4331, %v4347
        %v4352 = vadd.f32 %v4332, %v4347
        %v4353 = vadd.f32 %v4333, %v4347
        %v4354 = vadd.f32 %v4334, %v4347
        %v4355 = vadd.f32 %v4335, %v4347
        %v4356 = vadd.f32 %v4336, %v4347
        %v4357 = vadd.f32 %v4337, %v4347
        %v4358 = vadd.f32 %v4338, %v4347
        %v4359 = vadd.f32 %v4339, %v4347
        %v4360 = vadd.f32 %v4340, %v4347
        %v4361 = vadd.f32 %v4341, %v4347
        %v4362 = vadd.f32 %v4342, %v4347
        %v4363 = vadd.f32 %v4343, %v4347
        %v4364 = vmax.f32 %v4348, 0.0
        %v4365 = vmax.f32 %v4349, 0.0
        %v4366 = vmax.f32 %v4350, 0.0
        %v4367 = vmax.f32 %v4351, 0.0
        %v4368 = vmax.f32 %v4352, 0.0
        %v4369 = vmax.f32 %v4353, 0.0
        %v4370 = vmax.f32 %v4354, 0.0
        %v4371 = vmax.f32 %v4355, 0.0
        %v4372 = vmax.f32 %v4356, 0.0
        %v4373 = vmax.f32 %v4357, 0.0
        %v4374 = vmax.f32 %v4358, 0.0
        %v4375 = vmax.f32 %v4359, 0.0
        %v4376 = vmax.f32 %v4360, 0.0
        %v4377 = vmax.f32 %v4361, 0.0
        %v4378 = vmax.f32 %v4362, 0.0
        %v4379 = vmax.f32 %v4363, 0.0
        %s4380 = scalar_lea.vmem %s3, 4
        %v4381 = vld [vmem:[%s4380] sm:$0xf]
        %s4382 = scalar_lea.vmem %s415, 92 [#allocation3]
        %v4383 = vld [vmem:[%s4382] sm:$0xf]
        %v4384 = vld [vmem:[%s4382 + $0x4] sm:$0xf]
        %v4385 = vld [vmem:[%s4382 + $0x8] sm:$0xf]
        %v4386 = vld [vmem:[%s4382 + $0xc] sm:$0xf]
        %v4387 = vld [vmem:[%s4382 + $0x10] sm:$0xf]
        %v4388 = vld [vmem:[%s4382 + $0x14] sm:$0xf]
        %v4389 = vld [vmem:[%s4382 + $0x18] sm:$0xf]
        %v4390 = vld [vmem:[%s4382 + $0x1c] sm:$0xf]
        %v4391 = vld [vmem:[%s4382 + $0x20] sm:$0xf]
        %v4392 = vld [vmem:[%s4382 + $0x24] sm:$0xf]
        %v4393 = vld [vmem:[%s4382 + $0x28] sm:$0xf]
        %v4394 = vld [vmem:[%s4382 + $0x2c] sm:$0xf]
        %v4395 = vld [vmem:[%s4382 + $0x30] sm:$0xf]
        %v4396 = vld [vmem:[%s4382 + $0x34] sm:$0xf]
        %v4397 = vld [vmem:[%s4382 + $0x38] sm:$0xf]
        %v4398 = vld [vmem:[%s4382 + $0x3c] sm:$0xf]
        %v4399 = vld [vmem:[%s4382 + $0x40] sm:$0xf]
        %v4400 = vld [vmem:[%s4382 + $0x44] sm:$0xf]
        %v4401 = vld [vmem:[%s4382 + $0x48] sm:$0xf]
        %v4402 = vld [vmem:[%s4382 + $0x4c] sm:$0xf]
        %v4403 = vld [vmem:[%s4382 + $0x50] sm:$0xf]
        %v4404 = vld [vmem:[%s4382 + $0x54] sm:$0xf]
        %v4405 = vld [vmem:[%s4382 + $0x58] sm:$0x3]
        %s4406 = scalar_lea.vmem %s1, 20
        %v4407 = vld [vmem:[%s4406] sm:$0xf]
        %v4408 = vld [vmem:[%s4406 + $0x4] sm:$0xf]
        %v4409 = vld [vmem:[%s4406 + $0x8] sm:$0xf]
        %v4410 = vld [vmem:[%s4406 + $0xc] sm:$0xf]
        %v4411 = vld [vmem:[%s4406 + $0x10] sm:$0x3]
        %v4435 = vunpack.c.l.b16 %v4383
        %v4436 = vunpack.c.l.b16 %v4384
        %v4437 = vunpack.c.l.b16 %v4385
        %v4438 = vunpack.c.l.b16 %v4386
        %v4439 = vunpack.c.l.b16 %v4387
        %v4440 = vunpack.c.l.b16 %v4388
        %v4441 = vunpack.c.l.b16 %v4389
        %v4442 = vunpack.c.l.b16 %v4390
        %v4443 = vunpack.c.l.b16 %v4391
        %v4444 = vunpack.c.l.b16 %v4392
        %v4445 = vunpack.c.l.b16 %v4393
        %v4446 = vunpack.c.l.b16 %v4394
        %v4447 = vunpack.c.l.b16 %v4395
        %v4448 = vunpack.c.l.b16 %v4396
        %v4449 = vunpack.c.l.b16 %v4397
        %v4450 = vunpack.c.l.b16 %v4398
        %v4451 = vunpack.c.l.b16 %v4399
        %v4452 = vunpack.c.l.b16 %v4400
        %v4453 = vunpack.c.l.b16 %v4401
        %v4454 = vunpack.c.l.b16 %v4402
        %v4455 = vunpack.c.l.b16 %v4403
        %v4456 = vunpack.c.l.b16 %v4404
        %v4457 = vunpack.c.l.b16 %v4405
        %v4458 = vpack.c.b16 %v4436, %v4435
        %v4459 = vpack.c.b16 %v4438, %v4437
        %v4460 = vpack.c.b16 %v4440, %v4439
        %v4461 = vpack.c.b16 %v4442, %v4441
        %v4462 = vpack.c.b16 %v4444, %v4443
        %v4463 = vpack.c.b16 %v4446, %v4445
        %v4464 = vpack.c.b16 %v4448, %v4447
        %v4465 = vpack.c.b16 %v4450, %v4449
        %v4466 = vpack.c.b16 %v4452, %v4451
        %v4467 = vpack.c.b16 %v4454, %v4453
        %v4468 = vpack.c.b16 %v4456, %v4455
        %v4469 = vpack.c.b16 %v4457, %v4457
        %v4475 = vunpack.c.l.b16 %v4407
        %v4476 = vunpack.c.l.b16 %v4408
        %v4477 = vunpack.c.l.b16 %v4409
        %v4478 = vunpack.c.l.b16 %v4410
        %v4479 = vunpack.c.l.b16 %v4411
        %v4480 = vpack.c.b16 %v4476, %v4475
        %v4481 = vpack.c.b16 %v4478, %v4477
        %v4482 = vpack.c.b16 %v4479, %v4479
        %v4486 = vsel %vm653, %v4458, 0
        %v4489 = vsel %vm653, %v4459, 0
        %v4492 = vsel %vm653, %v4460, 0
        %v4495 = vsel %vm653, %v4461, 0
        %v4498 = vsel %vm653, %v4462, 0
        %v4501 = vsel %vm653, %v4463, 0
        %v4504 = vsel %vm653, %v4464, 0
        %v4507 = vsel %vm653, %v4465, 0
        %v4510 = vsel %vm653, %v4466, 0
        %v4513 = vsel %vm653, %v4467, 0
        %v4516 = vsel %vm653, %v4468, 0
        %v4519 = vsel %vm653, %v4469, 0
        %v4522 = vsel %vm690, %v4482, 0
        %4524 = vmatprep.subr.bf16.mxu0 0
        %4525 = vmatpush1.bf16.msra.mxu0 0
        %4526 = vmatprep.subr.bf16.mxu0 0
        %4527 = vmatpush1.bf16.msra.mxu0 0
        %4528 = vmatprep.subr.bf16.mxu0 0
        %4529 = vmatpush1.bf16.msra.mxu0 0
        %4530 = vmatprep.subr.bf16.mxu0 0
        %4531 = vmatpush1.bf16.msra.mxu0 0
        %4532 = vmatprep.subr.bf16.mxu0 0
        %4533 = vmatpush1.bf16.msra.mxu0 0
        %4534 = vmatprep.subr.bf16.mxu0 0
        %4535 = vmatpush1.bf16.msra.mxu0 %v4522
        %4536 = vmatprep.subr.bf16.mxu0 0
        %4537 = vmatpush1.bf16.msra.mxu0 %v4481
        %4538 = vmatprep.subr.bf16.mxu0 0
        %4539 = vmatpush1.bf16.msra.mxu0 %v4480
        %4540 = vmatprep.subr.bf16.mxu0 0
        %4541 = vmatpush2.bf16.msra.mxu0 0
        %4542 = vmatprep.subr.bf16.mxu0 0
        %4543 = vmatpush2.bf16.msra.mxu0 0
        %4544 = vmatprep.subr.bf16.mxu0 0
        %4545 = vmatpush2.bf16.msra.mxu0 0
        %4546 = vmatprep.subr.bf16.mxu0 0
        %4547 = vmatpush2.bf16.msra.mxu0 0
        %4548 = vmatprep.subr.bf16.mxu0 0
        %4549 = vmatpush2.bf16.msra.mxu0 0
        %4550 = vmatprep.subr.bf16.mxu0 0
        %4551 = vmatpush2.bf16.msra.mxu0 0
        %4552 = vmatprep.subr.bf16.mxu0 0
        %4553 = vmatpush2.bf16.msra.mxu0 0
        %4554 = vmatprep.subr.bf16.mxu0 0
        %4555 = vmatpush2.bf16.msra.mxu0 0
        %4556 = vmatprep.mubr.bf16.mxu0 0
        %4557 = vmatmul.mubr.bf16.gmra.mxu0 %v4486
        %v4558 = vpop.f32.mrf.mxu0
        %v4559 = vadd.f32 0.0, %v4558
        %v4560 = vpop.f32.mrf.mxu0
        %v4561 = vpop.f32.mrf.mxu0
        %v4562 = vadd.f32 0.0, %v4561
        %v4563 = vpop.f32.mrf.mxu0
        %4564 = vmatprep.mubr.bf16.mxu0 0
        %4565 = vmatmul.mubr.bf16.gmra.mxu0 %v4489
        %v4566 = vpop.f32.mrf.mxu0
        %v4567 = vadd.f32 0.0, %v4566
        %v4568 = vpop.f32.mrf.mxu0
        %v4569 = vpop.f32.mrf.mxu0
        %v4570 = vadd.f32 0.0, %v4569
        %v4571 = vpop.f32.mrf.mxu0
        %4572 = vmatprep.mubr.bf16.mxu0 0
        %4573 = vmatmul.mubr.bf16.gmra.mxu0 %v4492
        %v4574 = vpop.f32.mrf.mxu0
        %v4575 = vadd.f32 0.0, %v4574
        %v4576 = vpop.f32.mrf.mxu0
        %v4577 = vpop.f32.mrf.mxu0
        %v4578 = vadd.f32 0.0, %v4577
        %v4579 = vpop.f32.mrf.mxu0
        %4580 = vmatprep.mubr.bf16.mxu0 0
        %4581 = vmatmul.mubr.bf16.gmra.mxu0 %v4495
        %v4582 = vpop.f32.mrf.mxu0
        %v4583 = vadd.f32 0.0, %v4582
        %v4584 = vpop.f32.mrf.mxu0
        %v4585 = vpop.f32.mrf.mxu0
        %v4586 = vadd.f32 0.0, %v4585
        %v4587 = vpop.f32.mrf.mxu0
        %4588 = vmatprep.mubr.bf16.mxu0 0
        %4589 = vmatmul.mubr.bf16.gmra.mxu0 %v4498
        %v4590 = vpop.f32.mrf.mxu0
        %v4591 = vadd.f32 0.0, %v4590
        %v4592 = vpop.f32.mrf.mxu0
        %v4593 = vpop.f32.mrf.mxu0
        %v4594 = vadd.f32 0.0, %v4593
        %v4595 = vpop.f32.mrf.mxu0
        %4596 = vmatprep.mubr.bf16.mxu0 0
        %4597 = vmatmul.mubr.bf16.gmra.mxu0 %v4501
        %v4598 = vpop.f32.mrf.mxu0
        %v4599 = vadd.f32 0.0, %v4598
        %v4600 = vpop.f32.mrf.mxu0
        %v4601 = vpop.f32.mrf.mxu0
        %v4602 = vadd.f32 0.0, %v4601
        %v4603 = vpop.f32.mrf.mxu0
        %4604 = vmatprep.mubr.bf16.mxu0 0
        %4605 = vmatmul.mubr.bf16.gmra.mxu0 %v4504
        %v4606 = vpop.f32.mrf.mxu0
        %v4607 = vadd.f32 0.0, %v4606
        %v4608 = vpop.f32.mrf.mxu0
        %v4609 = vpop.f32.mrf.mxu0
        %v4610 = vadd.f32 0.0, %v4609
        %v4611 = vpop.f32.mrf.mxu0
        %4612 = vmatprep.mubr.bf16.mxu0 0
        %4613 = vmatmul.mubr.bf16.gmra.mxu0 %v4507
        %v4614 = vpop.f32.mrf.mxu0
        %v4615 = vadd.f32 0.0, %v4614
        %v4616 = vpop.f32.mrf.mxu0
        %v4617 = vpop.f32.mrf.mxu0
        %v4618 = vadd.f32 0.0, %v4617
        %v4619 = vpop.f32.mrf.mxu0
        %4620 = vmatprep.mubr.bf16.mxu0 0
        %4621 = vmatmul.mubr.bf16.gmra.mxu0 %v4510
        %v4622 = vpop.f32.mrf.mxu0
        %v4623 = vadd.f32 0.0, %v4622
        %v4624 = vpop.f32.mrf.mxu0
        %v4625 = vpop.f32.mrf.mxu0
        %v4626 = vadd.f32 0.0, %v4625
        %v4627 = vpop.f32.mrf.mxu0
        %4628 = vmatprep.mubr.bf16.mxu0 0
        %4629 = vmatmul.mubr.bf16.gmra.mxu0 %v4513
        %v4630 = vpop.f32.mrf.mxu0
        %v4631 = vadd.f32 0.0, %v4630
        %v4632 = vpop.f32.mrf.mxu0
        %v4633 = vpop.f32.mrf.mxu0
        %v4634 = vadd.f32 0.0, %v4633
        %v4635 = vpop.f32.mrf.mxu0
        %4636 = vmatprep.mubr.bf16.mxu0 0
        %4637 = vmatmul.mubr.bf16.gmra.mxu0 %v4516
        %v4638 = vpop.f32.mrf.mxu0
        %v4639 = vadd.f32 0.0, %v4638
        %v4640 = vpop.f32.mrf.mxu0
        %v4641 = vpop.f32.mrf.mxu0
        %v4642 = vadd.f32 0.0, %v4641
        %v4643 = vpop.f32.mrf.mxu0
        %4644 = vmatprep.mubr.bf16.mxu0 0
        %4645 = vmatmul.mubr.bf16.gmra.mxu0 %v4519
        %v4646 = vpop.f32.mrf.mxu0
        %v4647 = vadd.f32 0.0, %v4646
        %v4648 = vpop.f32.mrf.mxu0
        %v4649 = vpop.f32.mrf.mxu0
        %v4650 = vpop.f32.mrf.mxu0
        %4651 = vdwg.mxu0
        %v4652 = vlaneseq
        %v4653 = vshrl.u32 %v4652, 7
        %v4654 = vsub.s32 0, %v4653
        %v4655 = vrot.slane %v4381, %v4654
        %v4656 = vmul.f32 %v4559, %v4655
        %v4657 = vmul.f32 %v4562, %v4655
        %v4658 = vmul.f32 %v4567, %v4655
        %v4659 = vmul.f32 %v4570, %v4655
        %v4660 = vmul.f32 %v4575, %v4655
        %v4661 = vmul.f32 %v4578, %v4655
        %v4662 = vmul.f32 %v4583, %v4655
        %v4663 = vmul.f32 %v4586, %v4655
        %v4664 = vmul.f32 %v4591, %v4655
        %v4665 = vmul.f32 %v4594, %v4655
        %v4666 = vmul.f32 %v4599, %v4655
        %v4667 = vmul.f32 %v4602, %v4655
        %v4668 = vmul.f32 %v4607, %v4655
        %v4669 = vmul.f32 %v4610, %v4655
        %v4670 = vmul.f32 %v4615, %v4655
        %v4671 = vmul.f32 %v4618, %v4655
        %v4672 = vmul.f32 %v4623, %v4655
        %v4673 = vmul.f32 %v4626, %v4655
        %v4674 = vmul.f32 %v4631, %v4655
        %v4675 = vmul.f32 %v4634, %v4655
        %v4676 = vmul.f32 %v4639, %v4655
        %v4677 = vmul.f32 %v4642, %v4655
        %v4678 = vmul.f32 %v4647, %v4655
        %v4679 = vlaneseq
        %v4680 = vshrl.u32 %v4679, 7
        %v4681 = vsub.s32 1, %v4680
        %v4682 = vrot.slane %v4381, %v4681
        %v4683 = vadd.f32 %v4656, %v4682
        %v4684 = vadd.f32 %v4657, %v4682
        %v4685 = vadd.f32 %v4658, %v4682
        %v4686 = vadd.f32 %v4659, %v4682
        %v4687 = vadd.f32 %v4660, %v4682
        %v4688 = vadd.f32 %v4661, %v4682
        %v4689 = vadd.f32 %v4662, %v4682
        %v4690 = vadd.f32 %v4663, %v4682
        %v4691 = vadd.f32 %v4664, %v4682
        %v4692 = vadd.f32 %v4665, %v4682
        %v4693 = vadd.f32 %v4666, %v4682
        %v4694 = vadd.f32 %v4667, %v4682
        %v4695 = vadd.f32 %v4668, %v4682
        %v4696 = vadd.f32 %v4669, %v4682
        %v4697 = vadd.f32 %v4670, %v4682
        %v4698 = vadd.f32 %v4671, %v4682
        %v4699 = vadd.f32 %v4672, %v4682
        %v4700 = vadd.f32 %v4673, %v4682
        %v4701 = vadd.f32 %v4674, %v4682
        %v4702 = vadd.f32 %v4675, %v4682
        %v4703 = vadd.f32 %v4676, %v4682
        %v4704 = vadd.f32 %v4677, %v4682
        %v4705 = vadd.f32 %v4678, %v4682
        %v4706 = vmax.f32 %v4683, 0.0
        %v4707 = vmax.f32 %v4684, 0.0
        %v4708 = vmax.f32 %v4685, 0.0
        %v4709 = vmax.f32 %v4686, 0.0
        %v4710 = vmax.f32 %v4687, 0.0
        %v4711 = vmax.f32 %v4688, 0.0
        %v4712 = vmax.f32 %v4689, 0.0
        %v4713 = vmax.f32 %v4690, 0.0
        %v4714 = vmax.f32 %v4691, 0.0
        %v4715 = vmax.f32 %v4692, 0.0
        %v4716 = vmax.f32 %v4693, 0.0
        %v4717 = vmax.f32 %v4694, 0.0
        %v4718 = vmax.f32 %v4695, 0.0
        %v4719 = vmax.f32 %v4696, 0.0
        %v4720 = vmax.f32 %v4697, 0.0
        %v4721 = vmax.f32 %v4698, 0.0
        %v4722 = vmax.f32 %v4699, 0.0
        %v4723 = vmax.f32 %v4700, 0.0
        %v4724 = vmax.f32 %v4701, 0.0
        %v4725 = vmax.f32 %v4702, 0.0
        %v4726 = vmax.f32 %v4703, 0.0
        %v4727 = vmax.f32 %v4704, 0.0
        %v4728 = vmax.f32 %v4705, 0.0
        %v4752 = vcombine.high %v4706, %v4706
        %v4754 = vunpack.c.l.s4 1983009808
        %v4755 = vunpack.c.0.s8 %v4754
        %v4756 = vlaneseq
        %v4757 = vshrl.u32 %v4756, 7
        %v4758 = vsub.s32 %v4755, %v4757
        %v4759 = vrot.slane %v4706, %v4758
        %v4761 = vunpack.c.l.s4 1983009808
        %v4762 = vunpack.c.0.s8 %v4761
        %v4763 = vlaneseq
        %v4764 = vshrl.u32 %v4763, 7
        %v4765 = vsub.s32 %v4762, %v4764
        %v4766 = vrot.slane %v4752, %v4765
        %v4767 = vcombine.high %v4759, %v4759
        %v4768 = vcombine.high %v4766, %v4766
        %v4769 = vcombine.high %v4707, %v4707
        %v4771 = vunpack.c.l.s4 1983009808
        %v4772 = vunpack.c.0.s8 %v4771
        %v4773 = vlaneseq
        %v4774 = vshrl.u32 %v4773, 7
        %v4775 = vsub.s32 %v4772, %v4774
        %v4776 = vrot.slane %v4707, %v4775
        %v4778 = vunpack.c.l.s4 1983009808
        %v4779 = vunpack.c.0.s8 %v4778
        %v4780 = vlaneseq
        %v4781 = vshrl.u32 %v4780, 7
        %v4782 = vsub.s32 %v4779, %v4781
        %v4783 = vrot.slane %v4769, %v4782
        %v4784 = vcombine.high %v4776, %v4776
        %v4785 = vcombine.high %v4783, %v4783
        %v4786 = vcombine.high %v4708, %v4708
        %v4788 = vunpack.c.l.s4 1983009808
        %v4789 = vunpack.c.0.s8 %v4788
        %v4790 = vlaneseq
        %v4791 = vshrl.u32 %v4790, 7
        %v4792 = vsub.s32 %v4789, %v4791
        %v4793 = vrot.slane %v4708, %v4792
        %v4795 = vunpack.c.l.s4 1983009808
        %v4796 = vunpack.c.0.s8 %v4795
        %v4797 = vlaneseq
        %v4798 = vshrl.u32 %v4797, 7
        %v4799 = vsub.s32 %v4796, %v4798
        %v4800 = vrot.slane %v4786, %v4799
        %v4801 = vcombine.high %v4793, %v4793
        %v4802 = vcombine.high %v4800, %v4800
        %v4803 = vcombine.high %v4709, %v4709
        %v4805 = vunpack.c.l.s4 1983009808
        %v4806 = vunpack.c.0.s8 %v4805
        %v4807 = vlaneseq
        %v4808 = vshrl.u32 %v4807, 7
        %v4809 = vsub.s32 %v4806, %v4808
        %v4810 = vrot.slane %v4709, %v4809
        %v4812 = vunpack.c.l.s4 1983009808
        %v4813 = vunpack.c.0.s8 %v4812
        %v4814 = vlaneseq
        %v4815 = vshrl.u32 %v4814, 7
        %v4816 = vsub.s32 %v4813, %v4815
        %v4817 = vrot.slane %v4803, %v4816
        %v4818 = vcombine.high %v4810, %v4810
        %v4819 = vcombine.high %v4817, %v4817
        %v4820 = vcombine.high %v4710, %v4710
        %v4822 = vunpack.c.l.s4 1983009808
        %v4823 = vunpack.c.0.s8 %v4822
        %v4824 = vlaneseq
        %v4825 = vshrl.u32 %v4824, 7
        %v4826 = vsub.s32 %v4823, %v4825
        %v4827 = vrot.slane %v4710, %v4826
        %v4829 = vunpack.c.l.s4 1983009808
        %v4830 = vunpack.c.0.s8 %v4829
        %v4831 = vlaneseq
        %v4832 = vshrl.u32 %v4831, 7
        %v4833 = vsub.s32 %v4830, %v4832
        %v4834 = vrot.slane %v4820, %v4833
        %v4835 = vcombine.high %v4827, %v4827
        %v4836 = vcombine.high %v4834, %v4834
        %v4837 = vcombine.high %v4711, %v4711
        %v4839 = vunpack.c.l.s4 1983009808
        %v4840 = vunpack.c.0.s8 %v4839
        %v4841 = vlaneseq
        %v4842 = vshrl.u32 %v4841, 7
        %v4843 = vsub.s32 %v4840, %v4842
        %v4844 = vrot.slane %v4711, %v4843
        %v4846 = vunpack.c.l.s4 1983009808
        %v4847 = vunpack.c.0.s8 %v4846
        %v4848 = vlaneseq
        %v4849 = vshrl.u32 %v4848, 7
        %v4850 = vsub.s32 %v4847, %v4849
        %v4851 = vrot.slane %v4837, %v4850
        %v4852 = vcombine.high %v4844, %v4844
        %v4853 = vcombine.high %v4851, %v4851
        %v4854 = vcombine.high %v4712, %v4712
        %v4856 = vunpack.c.l.s4 1983009808
        %v4857 = vunpack.c.0.s8 %v4856
        %v4858 = vlaneseq
        %v4859 = vshrl.u32 %v4858, 7
        %v4860 = vsub.s32 %v4857, %v4859
        %v4861 = vrot.slane %v4712, %v4860
        %v4863 = vunpack.c.l.s4 1983009808
        %v4864 = vunpack.c.0.s8 %v4863
        %v4865 = vlaneseq
        %v4866 = vshrl.u32 %v4865, 7
        %v4867 = vsub.s32 %v4864, %v4866
        %v4868 = vrot.slane %v4854, %v4867
        %v4869 = vcombine.high %v4861, %v4861
        %v4870 = vcombine.high %v4868, %v4868
        %v4871 = vcombine.high %v4713, %v4713
        %v4873 = vunpack.c.l.s4 1983009808
        %v4874 = vunpack.c.0.s8 %v4873
        %v4875 = vlaneseq
        %v4876 = vshrl.u32 %v4875, 7
        %v4877 = vsub.s32 %v4874, %v4876
        %v4878 = vrot.slane %v4713, %v4877
        %v4880 = vunpack.c.l.s4 1983009808
        %v4881 = vunpack.c.0.s8 %v4880
        %v4882 = vlaneseq
        %v4883 = vshrl.u32 %v4882, 7
        %v4884 = vsub.s32 %v4881, %v4883
        %v4885 = vrot.slane %v4871, %v4884
        %v4886 = vcombine.high %v4878, %v4878
        %v4887 = vcombine.high %v4885, %v4885
        %v4888 = vcombine.high %v4714, %v4714
        %v4890 = vunpack.c.l.s4 1983009808
        %v4891 = vunpack.c.0.s8 %v4890
        %v4892 = vlaneseq
        %v4893 = vshrl.u32 %v4892, 7
        %v4894 = vsub.s32 %v4891, %v4893
        %v4895 = vrot.slane %v4714, %v4894
        %v4897 = vunpack.c.l.s4 1983009808
        %v4898 = vunpack.c.0.s8 %v4897
        %v4899 = vlaneseq
        %v4900 = vshrl.u32 %v4899, 7
        %v4901 = vsub.s32 %v4898, %v4900
        %v4902 = vrot.slane %v4888, %v4901
        %v4903 = vcombine.high %v4895, %v4895
        %v4904 = vcombine.high %v4902, %v4902
        %v4905 = vcombine.high %v4715, %v4715
        %v4907 = vunpack.c.l.s4 1983009808
        %v4908 = vunpack.c.0.s8 %v4907
        %v4909 = vlaneseq
        %v4910 = vshrl.u32 %v4909, 7
        %v4911 = vsub.s32 %v4908, %v4910
        %v4912 = vrot.slane %v4715, %v4911
        %v4914 = vunpack.c.l.s4 1983009808
        %v4915 = vunpack.c.0.s8 %v4914
        %v4916 = vlaneseq
        %v4917 = vshrl.u32 %v4916, 7
        %v4918 = vsub.s32 %v4915, %v4917
        %v4919 = vrot.slane %v4905, %v4918
        %v4920 = vcombine.high %v4912, %v4912
        %v4921 = vcombine.high %v4919, %v4919
        %v4922 = vcombine.high %v4716, %v4716
        %v4924 = vunpack.c.l.s4 1983009808
        %v4925 = vunpack.c.0.s8 %v4924
        %v4926 = vlaneseq
        %v4927 = vshrl.u32 %v4926, 7
        %v4928 = vsub.s32 %v4925, %v4927
        %v4929 = vrot.slane %v4716, %v4928
        %v4931 = vunpack.c.l.s4 1983009808
        %v4932 = vunpack.c.0.s8 %v4931
        %v4933 = vlaneseq
        %v4934 = vshrl.u32 %v4933, 7
        %v4935 = vsub.s32 %v4932, %v4934
        %v4936 = vrot.slane %v4922, %v4935
        %v4937 = vcombine.high %v4929, %v4929
        %v4938 = vcombine.high %v4936, %v4936
        %v4939 = vcombine.high %v4717, %v4717
        %v4941 = vunpack.c.l.s4 1983009808
        %v4942 = vunpack.c.0.s8 %v4941
        %v4943 = vlaneseq
        %v4944 = vshrl.u32 %v4943, 7
        %v4945 = vsub.s32 %v4942, %v4944
        %v4946 = vrot.slane %v4717, %v4945
        %v4948 = vunpack.c.l.s4 1983009808
        %v4949 = vunpack.c.0.s8 %v4948
        %v4950 = vlaneseq
        %v4951 = vshrl.u32 %v4950, 7
        %v4952 = vsub.s32 %v4949, %v4951
        %v4953 = vrot.slane %v4939, %v4952
        %v4954 = vcombine.high %v4946, %v4946
        %v4955 = vcombine.high %v4953, %v4953
        %v4956 = vcombine.high %v4718, %v4718
        %v4958 = vunpack.c.l.s4 1983009808
        %v4959 = vunpack.c.0.s8 %v4958
        %v4960 = vlaneseq
        %v4961 = vshrl.u32 %v4960, 7
        %v4962 = vsub.s32 %v4959, %v4961
        %v4963 = vrot.slane %v4718, %v4962
        %v4965 = vunpack.c.l.s4 1983009808
        %v4966 = vunpack.c.0.s8 %v4965
        %v4967 = vlaneseq
        %v4968 = vshrl.u32 %v4967, 7
        %v4969 = vsub.s32 %v4966, %v4968
        %v4970 = vrot.slane %v4956, %v4969
        %v4971 = vcombine.high %v4963, %v4963
        %v4972 = vcombine.high %v4970, %v4970
        %v4973 = vcombine.high %v4719, %v4719
        %v4975 = vunpack.c.l.s4 1983009808
        %v4976 = vunpack.c.0.s8 %v4975
        %v4977 = vlaneseq
        %v4978 = vshrl.u32 %v4977, 7
        %v4979 = vsub.s32 %v4976, %v4978
        %v4980 = vrot.slane %v4719, %v4979
        %v4982 = vunpack.c.l.s4 1983009808
        %v4983 = vunpack.c.0.s8 %v4982
        %v4984 = vlaneseq
        %v4985 = vshrl.u32 %v4984, 7
        %v4986 = vsub.s32 %v4983, %v4985
        %v4987 = vrot.slane %v4973, %v4986
        %v4988 = vcombine.high %v4980, %v4980
        %v4989 = vcombine.high %v4987, %v4987
        %v4990 = vcombine.high %v4720, %v4720
        %v4992 = vunpack.c.l.s4 1983009808
        %v4993 = vunpack.c.0.s8 %v4992
        %v4994 = vlaneseq
        %v4995 = vshrl.u32 %v4994, 7
        %v4996 = vsub.s32 %v4993, %v4995
        %v4997 = vrot.slane %v4720, %v4996
        %v4999 = vunpack.c.l.s4 1983009808
        %v5000 = vunpack.c.0.s8 %v4999
        %v5001 = vlaneseq
        %v5002 = vshrl.u32 %v5001, 7
        %v5003 = vsub.s32 %v5000, %v5002
        %v5004 = vrot.slane %v4990, %v5003
        %v5005 = vcombine.high %v4997, %v4997
        %v5006 = vcombine.high %v5004, %v5004
        %v5007 = vcombine.high %v4721, %v4721
        %v5009 = vunpack.c.l.s4 1983009808
        %v5010 = vunpack.c.0.s8 %v5009
        %v5011 = vlaneseq
        %v5012 = vshrl.u32 %v5011, 7
        %v5013 = vsub.s32 %v5010, %v5012
        %v5014 = vrot.slane %v4721, %v5013
        %v5016 = vunpack.c.l.s4 1983009808
        %v5017 = vunpack.c.0.s8 %v5016
        %v5018 = vlaneseq
        %v5019 = vshrl.u32 %v5018, 7
        %v5020 = vsub.s32 %v5017, %v5019
        %v5021 = vrot.slane %v5007, %v5020
        %v5022 = vcombine.high %v5014, %v5014
        %v5023 = vcombine.high %v5021, %v5021
        %v5024 = vcombine.high %v4722, %v4722
        %v5026 = vunpack.c.l.s4 1983009808
        %v5027 = vunpack.c.0.s8 %v5026
        %v5028 = vlaneseq
        %v5029 = vshrl.u32 %v5028, 7
        %v5030 = vsub.s32 %v5027, %v5029
        %v5031 = vrot.slane %v4722, %v5030
        %v5033 = vunpack.c.l.s4 1983009808
        %v5034 = vunpack.c.0.s8 %v5033
        %v5035 = vlaneseq
        %v5036 = vshrl.u32 %v5035, 7
        %v5037 = vsub.s32 %v5034, %v5036
        %v5038 = vrot.slane %v5024, %v5037
        %v5039 = vcombine.high %v5031, %v5031
        %v5040 = vcombine.high %v5038, %v5038
        %v5041 = vcombine.high %v4723, %v4723
        %v5043 = vunpack.c.l.s4 1983009808
        %v5044 = vunpack.c.0.s8 %v5043
        %v5045 = vlaneseq
        %v5046 = vshrl.u32 %v5045, 7
        %v5047 = vsub.s32 %v5044, %v5046
        %v5048 = vrot.slane %v4723, %v5047
        %v5050 = vunpack.c.l.s4 1983009808
        %v5051 = vunpack.c.0.s8 %v5050
        %v5052 = vlaneseq
        %v5053 = vshrl.u32 %v5052, 7
        %v5054 = vsub.s32 %v5051, %v5053
        %v5055 = vrot.slane %v5041, %v5054
        %v5056 = vcombine.high %v5048, %v5048
        %v5057 = vcombine.high %v5055, %v5055
        %v5058 = vcombine.high %v4724, %v4724
        %v5060 = vunpack.c.l.s4 1983009808
        %v5061 = vunpack.c.0.s8 %v5060
        %v5062 = vlaneseq
        %v5063 = vshrl.u32 %v5062, 7
        %v5064 = vsub.s32 %v5061, %v5063
        %v5065 = vrot.slane %v4724, %v5064
        %v5067 = vunpack.c.l.s4 1983009808
        %v5068 = vunpack.c.0.s8 %v5067
        %v5069 = vlaneseq
        %v5070 = vshrl.u32 %v5069, 7
        %v5071 = vsub.s32 %v5068, %v5070
        %v5072 = vrot.slane %v5058, %v5071
        %v5073 = vcombine.high %v5065, %v5065
        %v5074 = vcombine.high %v5072, %v5072
        %v5075 = vcombine.high %v4725, %v4725
        %v5077 = vunpack.c.l.s4 1983009808
        %v5078 = vunpack.c.0.s8 %v5077
        %v5079 = vlaneseq
        %v5080 = vshrl.u32 %v5079, 7
        %v5081 = vsub.s32 %v5078, %v5080
        %v5082 = vrot.slane %v4725, %v5081
        %v5084 = vunpack.c.l.s4 1983009808
        %v5085 = vunpack.c.0.s8 %v5084
        %v5086 = vlaneseq
        %v5087 = vshrl.u32 %v5086, 7
        %v5088 = vsub.s32 %v5085, %v5087
        %v5089 = vrot.slane %v5075, %v5088
        %v5090 = vcombine.high %v5082, %v5082
        %v5091 = vcombine.high %v5089, %v5089
        %v5092 = vcombine.high %v4726, %v4726
        %v5094 = vunpack.c.l.s4 1983009808
        %v5095 = vunpack.c.0.s8 %v5094
        %v5096 = vlaneseq
        %v5097 = vshrl.u32 %v5096, 7
        %v5098 = vsub.s32 %v5095, %v5097
        %v5099 = vrot.slane %v4726, %v5098
        %v5101 = vunpack.c.l.s4 1983009808
        %v5102 = vunpack.c.0.s8 %v5101
        %v5103 = vlaneseq
        %v5104 = vshrl.u32 %v5103, 7
        %v5105 = vsub.s32 %v5102, %v5104
        %v5106 = vrot.slane %v5092, %v5105
        %v5107 = vcombine.high %v5099, %v5099
        %v5108 = vcombine.high %v5106, %v5106
        %v5109 = vcombine.high %v4727, %v4727
        %v5111 = vunpack.c.l.s4 1983009808
        %v5112 = vunpack.c.0.s8 %v5111
        %v5113 = vlaneseq
        %v5114 = vshrl.u32 %v5113, 7
        %v5115 = vsub.s32 %v5112, %v5114
        %v5116 = vrot.slane %v4727, %v5115
        %v5118 = vunpack.c.l.s4 1983009808
        %v5119 = vunpack.c.0.s8 %v5118
        %v5120 = vlaneseq
        %v5121 = vshrl.u32 %v5120, 7
        %v5122 = vsub.s32 %v5119, %v5121
        %v5123 = vrot.slane %v5109, %v5122
        %v5124 = vcombine.high %v5116, %v5116
        %v5125 = vcombine.high %v5123, %v5123
        %v5127 = vunpack.c.l.s4 1983009808
        %v5128 = vunpack.c.0.s8 %v5127
        %v5129 = vlaneseq
        %v5130 = vshrl.u32 %v5129, 7
        %v5131 = vsub.s32 %v5128, %v5130
        %v5132 = vrot.slane %v4728, %v5131
        %v5133 = vcombine.high %v5132, %v5132
        %v5224 = vmul.f32 %v4759, %v1430
        %v5225 = vmul.f32 %v4767, %v1437
        %v5226 = vmul.f32 %v4766, %v1444
        %v5227 = vmul.f32 %v4768, %v1451
        %v5228 = vmul.f32 %v4776, %v1458
        %v5229 = vmul.f32 %v4784, %v1465
        %v5230 = vmul.f32 %v4783, %v1472
        %v5231 = vmul.f32 %v4785, %v1479
        %v5232 = vmul.f32 %v4793, %v1486
        %v5233 = vmul.f32 %v4801, %v1493
        %v5234 = vmul.f32 %v4800, %v1500
        %v5235 = vmul.f32 %v4802, %v1507
        %v5236 = vmul.f32 %v4810, %v1514
        %v5237 = vmul.f32 %v4818, %v1521
        %v5238 = vmul.f32 %v4817, %v1528
        %v5239 = vmul.f32 %v4819, %v1535
        %v5240 = vmul.f32 %v4827, %v1542
        %v5241 = vmul.f32 %v4835, %v1549
        %v5242 = vmul.f32 %v4834, %v1556
        %v5243 = vmul.f32 %v4836, %v1563
        %v5244 = vmul.f32 %v4844, %v1570
        %v5245 = vmul.f32 %v4852, %v1577
        %v5246 = vmul.f32 %v4851, %v1584
        %v5247 = vmul.f32 %v4853, %v1591
        %v5248 = vmul.f32 %v4861, %v1598
        %v5249 = vmul.f32 %v4869, %v1605
        %v5250 = vmul.f32 %v4868, %v1612
        %v5251 = vmul.f32 %v4870, %v1619
        %v5252 = vmul.f32 %v4878, %v1626
        %v5253 = vmul.f32 %v4886, %v1633
        %v5254 = vmul.f32 %v4885, %v1640
        %v5255 = vmul.f32 %v4887, %v1647
        %v5256 = vmul.f32 %v4895, %v1654
        %v5257 = vmul.f32 %v4903, %v1661
        %v5258 = vmul.f32 %v4902, %v1668
        %v5259 = vmul.f32 %v4904, %v1675
        %v5260 = vmul.f32 %v4912, %v1682
        %v5261 = vmul.f32 %v4920, %v1689
        %v5262 = vmul.f32 %v4919, %v1696
        %v5263 = vmul.f32 %v4921, %v1703
        %v5264 = vmul.f32 %v4929, %v1710
        %v5265 = vmul.f32 %v4937, %v1717
        %v5266 = vmul.f32 %v4936, %v1724
        %v5267 = vmul.f32 %v4938, %v1731
        %v5268 = vmul.f32 %v4946, %v1738
        %v5269 = vmul.f32 %v4954, %v1745
        %v5270 = vmul.f32 %v4953, %v1752
        %v5271 = vmul.f32 %v4955, %v1759
        %v5272 = vmul.f32 %v4963, %v1766
        %v5273 = vmul.f32 %v4971, %v1773
        %v5274 = vmul.f32 %v4970, %v1780
        %v5275 = vmul.f32 %v4972, %v1787
        %v5276 = vmul.f32 %v4980, %v1794
        %v5277 = vmul.f32 %v4988, %v1801
        %v5278 = vmul.f32 %v4987, %v1808
        %v5279 = vmul.f32 %v4989, %v1815
        %v5280 = vmul.f32 %v4997, %v1822
        %v5281 = vmul.f32 %v5005, %v1829
        %v5282 = vmul.f32 %v5004, %v1836
        %v5283 = vmul.f32 %v5006, %v1843
        %v5284 = vmul.f32 %v5014, %v1850
        %v5285 = vmul.f32 %v5022, %v1857
        %v5286 = vmul.f32 %v5021, %v1864
        %v5287 = vmul.f32 %v5023, %v1871
        %v5288 = vmul.f32 %v5031, %v1878
        %v5289 = vmul.f32 %v5039, %v1885
        %v5290 = vmul.f32 %v5038, %v1892
        %v5291 = vmul.f32 %v5040, %v1899
        %v5292 = vmul.f32 %v5048, %v1906
        %v5293 = vmul.f32 %v5056, %v1913
        %v5294 = vmul.f32 %v5055, %v1920
        %v5295 = vmul.f32 %v5057, %v1927
        %v5296 = vmul.f32 %v5065, %v1934
        %v5297 = vmul.f32 %v5073, %v1941
        %v5298 = vmul.f32 %v5072, %v1948
        %v5299 = vmul.f32 %v5074, %v1955
        %v5300 = vmul.f32 %v5082, %v1962
        %v5301 = vmul.f32 %v5090, %v1969
        %v5302 = vmul.f32 %v5089, %v1976
        %v5303 = vmul.f32 %v5091, %v1983
        %v5304 = vmul.f32 %v5099, %v1990
        %v5305 = vmul.f32 %v5107, %v1997
        %v5306 = vmul.f32 %v5106, %v2004
        %v5307 = vmul.f32 %v5108, %v2011
        %v5308 = vmul.f32 %v5116, %v2018
        %v5309 = vmul.f32 %v5124, %v2025
        %v5310 = vmul.f32 %v5123, %v2032
        %v5311 = vmul.f32 %v5125, %v2039
        %v5312 = vmul.f32 %v5132, %v2046
        %v5313 = vmul.f32 %v5133, %v2053
        %v5394 = vcombine.low %v5224, %v5225
        %v5395 = vcombine.low %v5226, %v5227
        %v5397 = vunpack.c.l.s4 1983009808
        %v5398 = vunpack.c.0.s8 %v5397
        %v5399 = vlaneseq
        %v5400 = vshrl.u32 %v5399, 7
        %v5401 = vsub.s32 %v5398, %v5400
        %v5402 = vrot.slane %v5394, %v5401
        %v5404 = vunpack.c.l.s4 1983009808
        %v5405 = vunpack.c.0.s8 %v5404
        %v5406 = vlaneseq
        %v5407 = vshrl.u32 %v5406, 7
        %v5408 = vsub.s32 %v5405, %v5407
        %v5409 = vrot.slane %v5395, %v5408
        %v5410 = vcombine.low %v5402, %v5409
        %v5411 = vcombine.low %v5228, %v5229
        %v5412 = vcombine.low %v5230, %v5231
        %v5414 = vunpack.c.l.s4 1983009808
        %v5415 = vunpack.c.0.s8 %v5414
        %v5416 = vlaneseq
        %v5417 = vshrl.u32 %v5416, 7
        %v5418 = vsub.s32 %v5415, %v5417
        %v5419 = vrot.slane %v5411, %v5418
        %v5421 = vunpack.c.l.s4 1983009808
        %v5422 = vunpack.c.0.s8 %v5421
        %v5423 = vlaneseq
        %v5424 = vshrl.u32 %v5423, 7
        %v5425 = vsub.s32 %v5422, %v5424
        %v5426 = vrot.slane %v5412, %v5425
        %v5427 = vcombine.low %v5419, %v5426
        %v5428 = vcombine.low %v5233, %v5234
        %v5429 = vcombine.low %v5235, %v5236
        %v5431 = vunpack.c.l.s4 1983009808
        %v5432 = vunpack.c.0.s8 %v5431
        %v5433 = vlaneseq
        %v5434 = vshrl.u32 %v5433, 7
        %v5435 = vsub.s32 %v5432, %v5434
        %v5436 = vrot.slane %v5428, %v5435
        %v5438 = vunpack.c.l.s4 1983009808
        %v5439 = vunpack.c.0.s8 %v5438
        %v5440 = vlaneseq
        %v5441 = vshrl.u32 %v5440, 7
        %v5442 = vsub.s32 %v5439, %v5441
        %v5443 = vrot.slane %v5429, %v5442
        %v5444 = vcombine.low %v5436, %v5443
        %v5445 = vcombine.low %v5237, %v5238
        %v5446 = vcombine.low %v5239, %v5240
        %v5448 = vunpack.c.l.s4 1983009808
        %v5449 = vunpack.c.0.s8 %v5448
        %v5450 = vlaneseq
        %v5451 = vshrl.u32 %v5450, 7
        %v5452 = vsub.s32 %v5449, %v5451
        %v5453 = vrot.slane %v5445, %v5452
        %v5455 = vunpack.c.l.s4 1983009808
        %v5456 = vunpack.c.0.s8 %v5455
        %v5457 = vlaneseq
        %v5458 = vshrl.u32 %v5457, 7
        %v5459 = vsub.s32 %v5456, %v5458
        %v5460 = vrot.slane %v5446, %v5459
        %v5461 = vcombine.low %v5453, %v5460
        %v5462 = vcombine.low %v5242, %v5243
        %v5463 = vcombine.low %v5244, %v5245
        %v5465 = vunpack.c.l.s4 1983009808
        %v5466 = vunpack.c.0.s8 %v5465
        %v5467 = vlaneseq
        %v5468 = vshrl.u32 %v5467, 7
        %v5469 = vsub.s32 %v5466, %v5468
        %v5470 = vrot.slane %v5462, %v5469
        %v5472 = vunpack.c.l.s4 1983009808
        %v5473 = vunpack.c.0.s8 %v5472
        %v5474 = vlaneseq
        %v5475 = vshrl.u32 %v5474, 7
        %v5476 = vsub.s32 %v5473, %v5475
        %v5477 = vrot.slane %v5463, %v5476
        %v5478 = vcombine.low %v5470, %v5477
        %v5479 = vcombine.low %v5246, %v5247
        %v5480 = vcombine.low %v5248, %v5249
        %v5482 = vunpack.c.l.s4 1983009808
        %v5483 = vunpack.c.0.s8 %v5482
        %v5484 = vlaneseq
        %v5485 = vshrl.u32 %v5484, 7
        %v5486 = vsub.s32 %v5483, %v5485
        %v5487 = vrot.slane %v5479, %v5486
        %v5489 = vunpack.c.l.s4 1983009808
        %v5490 = vunpack.c.0.s8 %v5489
        %v5491 = vlaneseq
        %v5492 = vshrl.u32 %v5491, 7
        %v5493 = vsub.s32 %v5490, %v5492
        %v5494 = vrot.slane %v5480, %v5493
        %v5495 = vcombine.low %v5487, %v5494
        %v5496 = vcombine.low %v5251, %v5252
        %v5497 = vcombine.low %v5253, %v5254
        %v5499 = vunpack.c.l.s4 1983009808
        %v5500 = vunpack.c.0.s8 %v5499
        %v5501 = vlaneseq
        %v5502 = vshrl.u32 %v5501, 7
        %v5503 = vsub.s32 %v5500, %v5502
        %v5504 = vrot.slane %v5496, %v5503
        %v5506 = vunpack.c.l.s4 1983009808
        %v5507 = vunpack.c.0.s8 %v5506
        %v5508 = vlaneseq
        %v5509 = vshrl.u32 %v5508, 7
        %v5510 = vsub.s32 %v5507, %v5509
        %v5511 = vrot.slane %v5497, %v5510
        %v5512 = vcombine.low %v5504, %v5511
        %v5513 = vcombine.low %v5255, %v5256
        %v5514 = vcombine.low %v5257, %v5258
        %v5516 = vunpack.c.l.s4 1983009808
        %v5517 = vunpack.c.0.s8 %v5516
        %v5518 = vlaneseq
        %v5519 = vshrl.u32 %v5518, 7
        %v5520 = vsub.s32 %v5517, %v5519
        %v5521 = vrot.slane %v5513, %v5520
        %v5523 = vunpack.c.l.s4 1983009808
        %v5524 = vunpack.c.0.s8 %v5523
        %v5525 = vlaneseq
        %v5526 = vshrl.u32 %v5525, 7
        %v5527 = vsub.s32 %v5524, %v5526
        %v5528 = vrot.slane %v5514, %v5527
        %v5529 = vcombine.low %v5521, %v5528
        %v5530 = vcombine.low %v5260, %v5261
        %v5531 = vcombine.low %v5262, %v5263
        %v5533 = vunpack.c.l.s4 1983009808
        %v5534 = vunpack.c.0.s8 %v5533
        %v5535 = vlaneseq
        %v5536 = vshrl.u32 %v5535, 7
        %v5537 = vsub.s32 %v5534, %v5536
        %v5538 = vrot.slane %v5530, %v5537
        %v5540 = vunpack.c.l.s4 1983009808
        %v5541 = vunpack.c.0.s8 %v5540
        %v5542 = vlaneseq
        %v5543 = vshrl.u32 %v5542, 7
        %v5544 = vsub.s32 %v5541, %v5543
        %v5545 = vrot.slane %v5531, %v5544
        %v5546 = vcombine.low %v5538, %v5545
        %v5547 = vcombine.low %v5264, %v5265
        %v5548 = vcombine.low %v5266, %v5267
        %v5550 = vunpack.c.l.s4 1983009808
        %v5551 = vunpack.c.0.s8 %v5550
        %v5552 = vlaneseq
        %v5553 = vshrl.u32 %v5552, 7
        %v5554 = vsub.s32 %v5551, %v5553
        %v5555 = vrot.slane %v5547, %v5554
        %v5557 = vunpack.c.l.s4 1983009808
        %v5558 = vunpack.c.0.s8 %v5557
        %v5559 = vlaneseq
        %v5560 = vshrl.u32 %v5559, 7
        %v5561 = vsub.s32 %v5558, %v5560
        %v5562 = vrot.slane %v5548, %v5561
        %v5563 = vcombine.low %v5555, %v5562
        %v5564 = vcombine.low %v5269, %v5270
        %v5565 = vcombine.low %v5271, %v5272
        %v5567 = vunpack.c.l.s4 1983009808
        %v5568 = vunpack.c.0.s8 %v5567
        %v5569 = vlaneseq
        %v5570 = vshrl.u32 %v5569, 7
        %v5571 = vsub.s32 %v5568, %v5570
        %v5572 = vrot.slane %v5564, %v5571
        %v5574 = vunpack.c.l.s4 1983009808
        %v5575 = vunpack.c.0.s8 %v5574
        %v5576 = vlaneseq
        %v5577 = vshrl.u32 %v5576, 7
        %v5578 = vsub.s32 %v5575, %v5577
        %v5579 = vrot.slane %v5565, %v5578
        %v5580 = vcombine.low %v5572, %v5579
        %v5581 = vcombine.low %v5273, %v5274
        %v5582 = vcombine.low %v5275, %v5276
        %v5584 = vunpack.c.l.s4 1983009808
        %v5585 = vunpack.c.0.s8 %v5584
        %v5586 = vlaneseq
        %v5587 = vshrl.u32 %v5586, 7
        %v5588 = vsub.s32 %v5585, %v5587
        %v5589 = vrot.slane %v5581, %v5588
        %v5591 = vunpack.c.l.s4 1983009808
        %v5592 = vunpack.c.0.s8 %v5591
        %v5593 = vlaneseq
        %v5594 = vshrl.u32 %v5593, 7
        %v5595 = vsub.s32 %v5592, %v5594
        %v5596 = vrot.slane %v5582, %v5595
        %v5597 = vcombine.low %v5589, %v5596
        %v5598 = vcombine.low %v5278, %v5279
        %v5599 = vcombine.low %v5280, %v5281
        %v5601 = vunpack.c.l.s4 1983009808
        %v5602 = vunpack.c.0.s8 %v5601
        %v5603 = vlaneseq
        %v5604 = vshrl.u32 %v5603, 7
        %v5605 = vsub.s32 %v5602, %v5604
        %v5606 = vrot.slane %v5598, %v5605
        %v5608 = vunpack.c.l.s4 1983009808
        %v5609 = vunpack.c.0.s8 %v5608
        %v5610 = vlaneseq
        %v5611 = vshrl.u32 %v5610, 7
        %v5612 = vsub.s32 %v5609, %v5611
        %v5613 = vrot.slane %v5599, %v5612
        %v5614 = vcombine.low %v5606, %v5613
        %v5615 = vcombine.low %v5282, %v5283
        %v5616 = vcombine.low %v5284, %v5285
        %v5618 = vunpack.c.l.s4 1983009808
        %v5619 = vunpack.c.0.s8 %v5618
        %v5620 = vlaneseq
        %v5621 = vshrl.u32 %v5620, 7
        %v5622 = vsub.s32 %v5619, %v5621
        %v5623 = vrot.slane %v5615, %v5622
        %v5625 = vunpack.c.l.s4 1983009808
        %v5626 = vunpack.c.0.s8 %v5625
        %v5627 = vlaneseq
        %v5628 = vshrl.u32 %v5627, 7
        %v5629 = vsub.s32 %v5626, %v5628
        %v5630 = vrot.slane %v5616, %v5629
        %v5631 = vcombine.low %v5623, %v5630
        %v5632 = vcombine.low %v5287, %v5288
        %v5633 = vcombine.low %v5289, %v5290
        %v5635 = vunpack.c.l.s4 1983009808
        %v5636 = vunpack.c.0.s8 %v5635
        %v5637 = vlaneseq
        %v5638 = vshrl.u32 %v5637, 7
        %v5639 = vsub.s32 %v5636, %v5638
        %v5640 = vrot.slane %v5632, %v5639
        %v5642 = vunpack.c.l.s4 1983009808
        %v5643 = vunpack.c.0.s8 %v5642
        %v5644 = vlaneseq
        %v5645 = vshrl.u32 %v5644, 7
        %v5646 = vsub.s32 %v5643, %v5645
        %v5647 = vrot.slane %v5633, %v5646
        %v5648 = vcombine.low %v5640, %v5647
        %v5649 = vcombine.low %v5291, %v5292
        %v5650 = vcombine.low %v5293, %v5294
        %v5652 = vunpack.c.l.s4 1983009808
        %v5653 = vunpack.c.0.s8 %v5652
        %v5654 = vlaneseq
        %v5655 = vshrl.u32 %v5654, 7
        %v5656 = vsub.s32 %v5653, %v5655
        %v5657 = vrot.slane %v5649, %v5656
        %v5659 = vunpack.c.l.s4 1983009808
        %v5660 = vunpack.c.0.s8 %v5659
        %v5661 = vlaneseq
        %v5662 = vshrl.u32 %v5661, 7
        %v5663 = vsub.s32 %v5660, %v5662
        %v5664 = vrot.slane %v5650, %v5663
        %v5665 = vcombine.low %v5657, %v5664
        %v5666 = vcombine.low %v5296, %v5297
        %v5667 = vcombine.low %v5298, %v5299
        %v5669 = vunpack.c.l.s4 1983009808
        %v5670 = vunpack.c.0.s8 %v5669
        %v5671 = vlaneseq
        %v5672 = vshrl.u32 %v5671, 7
        %v5673 = vsub.s32 %v5670, %v5672
        %v5674 = vrot.slane %v5666, %v5673
        %v5676 = vunpack.c.l.s4 1983009808
        %v5677 = vunpack.c.0.s8 %v5676
        %v5678 = vlaneseq
        %v5679 = vshrl.u32 %v5678, 7
        %v5680 = vsub.s32 %v5677, %v5679
        %v5681 = vrot.slane %v5667, %v5680
        %v5682 = vcombine.low %v5674, %v5681
        %v5683 = vcombine.low %v5300, %v5301
        %v5684 = vcombine.low %v5302, %v5303
        %v5686 = vunpack.c.l.s4 1983009808
        %v5687 = vunpack.c.0.s8 %v5686
        %v5688 = vlaneseq
        %v5689 = vshrl.u32 %v5688, 7
        %v5690 = vsub.s32 %v5687, %v5689
        %v5691 = vrot.slane %v5683, %v5690
        %v5693 = vunpack.c.l.s4 1983009808
        %v5694 = vunpack.c.0.s8 %v5693
        %v5695 = vlaneseq
        %v5696 = vshrl.u32 %v5695, 7
        %v5697 = vsub.s32 %v5694, %v5696
        %v5698 = vrot.slane %v5684, %v5697
        %v5699 = vcombine.low %v5691, %v5698
        %v5700 = vcombine.low %v5305, %v5306
        %v5701 = vcombine.low %v5307, %v5308
        %v5703 = vunpack.c.l.s4 1983009808
        %v5704 = vunpack.c.0.s8 %v5703
        %v5705 = vlaneseq
        %v5706 = vshrl.u32 %v5705, 7
        %v5707 = vsub.s32 %v5704, %v5706
        %v5708 = vrot.slane %v5700, %v5707
        %v5710 = vunpack.c.l.s4 1983009808
        %v5711 = vunpack.c.0.s8 %v5710
        %v5712 = vlaneseq
        %v5713 = vshrl.u32 %v5712, 7
        %v5714 = vsub.s32 %v5711, %v5713
        %v5715 = vrot.slane %v5701, %v5714
        %v5716 = vcombine.low %v5708, %v5715
        %v5717 = vcombine.low %v5309, %v5310
        %v5718 = vcombine.low %v5311, %v5312
        %v5720 = vunpack.c.l.s4 1983009808
        %v5721 = vunpack.c.0.s8 %v5720
        %v5722 = vlaneseq
        %v5723 = vshrl.u32 %v5722, 7
        %v5724 = vsub.s32 %v5721, %v5723
        %v5725 = vrot.slane %v5717, %v5724
        %v5727 = vunpack.c.l.s4 1983009808
        %v5728 = vunpack.c.0.s8 %v5727
        %v5729 = vlaneseq
        %v5730 = vshrl.u32 %v5729, 7
        %v5731 = vsub.s32 %v5728, %v5730
        %v5732 = vrot.slane %v5718, %v5731
        %v5733 = vcombine.low %v5725, %v5732
        %v5765 = vunpack.c.l.s4 1983009808
        %v5766 = vunpack.c.0.s8 %v5765
        %v5767 = vlaneseq
        %v5768 = vshrl.u32 %v5767, 7
        %v5769 = vsub.s32 %v5766, %v5768
        %v5770 = vrot.slane %v5232, %v5769
        %v5772 = vunpack.c.l.s4 1983009808
        %v5773 = vunpack.c.0.s8 %v5772
        %v5774 = vlaneseq
        %v5775 = vshrl.u32 %v5774, 7
        %v5776 = vsub.s32 %v5773, %v5775
        %v5777 = vrot.slane %v5241, %v5776
        %v5779 = vunpack.c.l.s4 1983009808
        %v5780 = vunpack.c.0.s8 %v5779
        %v5781 = vlaneseq
        %v5782 = vshrl.u32 %v5781, 7
        %v5783 = vsub.s32 %v5780, %v5782
        %v5784 = vrot.slane %v5250, %v5783
        %v5786 = vunpack.c.l.s4 1983009808
        %v5787 = vunpack.c.0.s8 %v5786
        %v5788 = vlaneseq
        %v5789 = vshrl.u32 %v5788, 7
        %v5790 = vsub.s32 %v5787, %v5789
        %v5791 = vrot.slane %v5259, %v5790
        %v5793 = vunpack.c.l.s4 1983009808
        %v5794 = vunpack.c.0.s8 %v5793
        %v5795 = vlaneseq
        %v5796 = vshrl.u32 %v5795, 7
        %v5797 = vsub.s32 %v5794, %v5796
        %v5798 = vrot.slane %v5268, %v5797
        %v5800 = vunpack.c.l.s4 1983009808
        %v5801 = vunpack.c.0.s8 %v5800
        %v5802 = vlaneseq
        %v5803 = vshrl.u32 %v5802, 7
        %v5804 = vsub.s32 %v5801, %v5803
        %v5805 = vrot.slane %v5277, %v5804
        %v5807 = vunpack.c.l.s4 1983009808
        %v5808 = vunpack.c.0.s8 %v5807
        %v5809 = vlaneseq
        %v5810 = vshrl.u32 %v5809, 7
        %v5811 = vsub.s32 %v5808, %v5810
        %v5812 = vrot.slane %v5286, %v5811
        %v5814 = vunpack.c.l.s4 1983009808
        %v5815 = vunpack.c.0.s8 %v5814
        %v5816 = vlaneseq
        %v5817 = vshrl.u32 %v5816, 7
        %v5818 = vsub.s32 %v5815, %v5817
        %v5819 = vrot.slane %v5295, %v5818
        %v5821 = vunpack.c.l.s4 1983009808
        %v5822 = vunpack.c.0.s8 %v5821
        %v5823 = vlaneseq
        %v5824 = vshrl.u32 %v5823, 7
        %v5825 = vsub.s32 %v5822, %v5824
        %v5826 = vrot.slane %v5304, %v5825
        %v5828 = vunpack.c.l.s4 1983009808
        %v5829 = vunpack.c.0.s8 %v5828
        %v5830 = vlaneseq
        %v5831 = vshrl.u32 %v5830, 7
        %v5832 = vsub.s32 %v5829, %v5831
        %v5833 = vrot.slane %v5313, %v5832
        %v5834 = vrot.slane %v5410, 1
        %v5835 = vrot.slane %v5427, 1
        %v5836 = vsel %vm2754, %v5834, %v5835
        %v5837 = vrot.slane %v5770, 1
        %v5838 = vsel %vm2754, %v5835, %v5837
        %v5839 = vrot.slane %v5444, 1
        %v5840 = vrot.slane %v5461, 1
        %v5841 = vsel %vm2754, %v5839, %v5840
        %v5842 = vrot.slane %v5777, 1
        %v5843 = vsel %vm2754, %v5840, %v5842
        %v5844 = vrot.slane %v5478, 1
        %v5845 = vrot.slane %v5495, 1
        %v5846 = vsel %vm2754, %v5844, %v5845
        %v5847 = vrot.slane %v5784, 1
        %v5848 = vsel %vm2754, %v5845, %v5847
        %v5849 = vrot.slane %v5512, 1
        %v5850 = vrot.slane %v5529, 1
        %v5851 = vsel %vm2754, %v5849, %v5850
        %v5852 = vrot.slane %v5791, 1
        %v5853 = vsel %vm2754, %v5850, %v5852
        %v5854 = vrot.slane %v5546, 1
        %v5855 = vrot.slane %v5563, 1
        %v5856 = vsel %vm2754, %v5854, %v5855
        %v5857 = vrot.slane %v5798, 1
        %v5858 = vsel %vm2754, %v5855, %v5857
        %v5859 = vrot.slane %v5580, 1
        %v5860 = vrot.slane %v5597, 1
        %v5861 = vsel %vm2754, %v5859, %v5860
        %v5862 = vrot.slane %v5805, 1
        %v5863 = vsel %vm2754, %v5860, %v5862
        %v5864 = vrot.slane %v5614, 1
        %v5865 = vrot.slane %v5631, 1
        %v5866 = vsel %vm2754, %v5864, %v5865
        %v5867 = vrot.slane %v5812, 1
        %v5868 = vsel %vm2754, %v5865, %v5867
        %v5869 = vrot.slane %v5648, 1
        %v5870 = vrot.slane %v5665, 1
        %v5871 = vsel %vm2754, %v5869, %v5870
        %v5872 = vrot.slane %v5819, 1
        %v5873 = vsel %vm2754, %v5870, %v5872
        %v5874 = vrot.slane %v5682, 1
        %v5875 = vrot.slane %v5699, 1
        %v5876 = vsel %vm2754, %v5874, %v5875
        %v5877 = vrot.slane %v5826, 1
        %v5878 = vsel %vm2754, %v5875, %v5877
        %v5879 = vrot.slane %v5716, 1
        %v5880 = vrot.slane %v5733, 1
        %v5881 = vsel %vm2754, %v5879, %v5880
        %v5882 = vrot.slane %v5833, 1
        %v5883 = vsel %vm2754, %v5880, %v5882
        %5884 = vrot.lane.b32.xlu0 %v5836, 64
        %v5885 = vpop.permute.xlu0 %5884
        %5886 = vrot.lane.b32.xlu0 %v5838, 64
        %v5887 = vpop.permute.xlu0 %5886
        %5888 = vrot.lane.b32.xlu0 %v5841, 64
        %v5889 = vpop.permute.xlu0 %5888
        %5890 = vrot.lane.b32.xlu0 %v5843, 64
        %v5891 = vpop.permute.xlu0 %5890
        %5892 = vrot.lane.b32.xlu0 %v5846, 64
        %v5893 = vpop.permute.xlu0 %5892
        %5894 = vrot.lane.b32.xlu0 %v5848, 64
        %v5895 = vpop.permute.xlu0 %5894
        %5896 = vrot.lane.b32.xlu0 %v5851, 64
        %v5897 = vpop.permute.xlu0 %5896
        %5898 = vrot.lane.b32.xlu0 %v5853, 64
        %v5899 = vpop.permute.xlu0 %5898
        %5900 = vrot.lane.b32.xlu0 %v5856, 64
        %v5901 = vpop.permute.xlu0 %5900
        %5902 = vrot.lane.b32.xlu0 %v5858, 64
        %v5903 = vpop.permute.xlu0 %5902
        %5904 = vrot.lane.b32.xlu0 %v5861, 64
        %v5905 = vpop.permute.xlu0 %5904
        %5906 = vrot.lane.b32.xlu0 %v5863, 64
        %v5907 = vpop.permute.xlu0 %5906
        %5908 = vrot.lane.b32.xlu0 %v5866, 64
        %v5909 = vpop.permute.xlu0 %5908
        %5910 = vrot.lane.b32.xlu0 %v5868, 64
        %v5911 = vpop.permute.xlu0 %5910
        %5912 = vrot.lane.b32.xlu0 %v5871, 64
        %v5913 = vpop.permute.xlu0 %5912
        %5914 = vrot.lane.b32.xlu0 %v5873, 64
        %v5915 = vpop.permute.xlu0 %5914
        %5916 = vrot.lane.b32.xlu0 %v5876, 64
        %v5917 = vpop.permute.xlu0 %5916
        %5918 = vrot.lane.b32.xlu0 %v5878, 64
        %v5919 = vpop.permute.xlu0 %5918
        %5920 = vrot.lane.b32.xlu0 %v5881, 64
        %v5921 = vpop.permute.xlu0 %5920
        %5922 = vrot.lane.b32.xlu0 %v5883, 64
        %v5923 = vpop.permute.xlu0 %5922
        %v5944 = vcombine.low %v5225, %v5226
        %v5945 = vcombine.low %v5227, %v5228
        %v5947 = vunpack.c.l.s4 1983009808
        %v5948 = vunpack.c.0.s8 %v5947
        %v5949 = vlaneseq
        %v5950 = vshrl.u32 %v5949, 7
        %v5951 = vsub.s32 %v5948, %v5950
        %v5952 = vrot.slane %v5944, %v5951
        %v5954 = vunpack.c.l.s4 1983009808
        %v5955 = vunpack.c.0.s8 %v5954
        %v5956 = vlaneseq
        %v5957 = vshrl.u32 %v5956, 7
        %v5958 = vsub.s32 %v5955, %v5957
        %v5959 = vrot.slane %v5945, %v5958
        %v5960 = vcombine.low %v5952, %v5959
        %v5961 = vcombine.low %v5229, %v5230
        %v5962 = vcombine.low %v5231, %v5232
        %v5964 = vunpack.c.l.s4 1983009808
        %v5965 = vunpack.c.0.s8 %v5964
        %v5966 = vlaneseq
        %v5967 = vshrl.u32 %v5966, 7
        %v5968 = vsub.s32 %v5965, %v5967
        %v5969 = vrot.slane %v5961, %v5968
        %v5971 = vunpack.c.l.s4 1983009808
        %v5972 = vunpack.c.0.s8 %v5971
        %v5973 = vlaneseq
        %v5974 = vshrl.u32 %v5973, 7
        %v5975 = vsub.s32 %v5972, %v5974
        %v5976 = vrot.slane %v5962, %v5975
        %v5977 = vcombine.low %v5969, %v5976
        %v5978 = vcombine.low %v5234, %v5235
        %v5979 = vcombine.low %v5236, %v5237
        %v5981 = vunpack.c.l.s4 1983009808
        %v5982 = vunpack.c.0.s8 %v5981
        %v5983 = vlaneseq
        %v5984 = vshrl.u32 %v5983, 7
        %v5985 = vsub.s32 %v5982, %v5984
        %v5986 = vrot.slane %v5978, %v5985
        %v5988 = vunpack.c.l.s4 1983009808
        %v5989 = vunpack.c.0.s8 %v5988
        %v5990 = vlaneseq
        %v5991 = vshrl.u32 %v5990, 7
        %v5992 = vsub.s32 %v5989, %v5991
        %v5993 = vrot.slane %v5979, %v5992
        %v5994 = vcombine.low %v5986, %v5993
        %v5995 = vcombine.low %v5238, %v5239
        %v5996 = vcombine.low %v5240, %v5241
        %v5998 = vunpack.c.l.s4 1983009808
        %v5999 = vunpack.c.0.s8 %v5998
        %v6000 = vlaneseq
        %v6001 = vshrl.u32 %v6000, 7
        %v6002 = vsub.s32 %v5999, %v6001
        %v6003 = vrot.slane %v5995, %v6002
        %v6005 = vunpack.c.l.s4 1983009808
        %v6006 = vunpack.c.0.s8 %v6005
        %v6007 = vlaneseq
        %v6008 = vshrl.u32 %v6007, 7
        %v6009 = vsub.s32 %v6006, %v6008
        %v6010 = vrot.slane %v5996, %v6009
        %v6011 = vcombine.low %v6003, %v6010
        %v6012 = vcombine.low %v5243, %v5244
        %v6013 = vcombine.low %v5245, %v5246
        %v6015 = vunpack.c.l.s4 1983009808
        %v6016 = vunpack.c.0.s8 %v6015
        %v6017 = vlaneseq
        %v6018 = vshrl.u32 %v6017, 7
        %v6019 = vsub.s32 %v6016, %v6018
        %v6020 = vrot.slane %v6012, %v6019
        %v6022 = vunpack.c.l.s4 1983009808
        %v6023 = vunpack.c.0.s8 %v6022
        %v6024 = vlaneseq
        %v6025 = vshrl.u32 %v6024, 7
        %v6026 = vsub.s32 %v6023, %v6025
        %v6027 = vrot.slane %v6013, %v6026
        %v6028 = vcombine.low %v6020, %v6027
        %v6029 = vcombine.low %v5247, %v5248
        %v6030 = vcombine.low %v5249, %v5250
        %v6032 = vunpack.c.l.s4 1983009808
        %v6033 = vunpack.c.0.s8 %v6032
        %v6034 = vlaneseq
        %v6035 = vshrl.u32 %v6034, 7
        %v6036 = vsub.s32 %v6033, %v6035
        %v6037 = vrot.slane %v6029, %v6036
        %v6039 = vunpack.c.l.s4 1983009808
        %v6040 = vunpack.c.0.s8 %v6039
        %v6041 = vlaneseq
        %v6042 = vshrl.u32 %v6041, 7
        %v6043 = vsub.s32 %v6040, %v6042
        %v6044 = vrot.slane %v6030, %v6043
        %v6045 = vcombine.low %v6037, %v6044
        %v6046 = vcombine.low %v5252, %v5253
        %v6047 = vcombine.low %v5254, %v5255
        %v6049 = vunpack.c.l.s4 1983009808
        %v6050 = vunpack.c.0.s8 %v6049
        %v6051 = vlaneseq
        %v6052 = vshrl.u32 %v6051, 7
        %v6053 = vsub.s32 %v6050, %v6052
        %v6054 = vrot.slane %v6046, %v6053
        %v6056 = vunpack.c.l.s4 1983009808
        %v6057 = vunpack.c.0.s8 %v6056
        %v6058 = vlaneseq
        %v6059 = vshrl.u32 %v6058, 7
        %v6060 = vsub.s32 %v6057, %v6059
        %v6061 = vrot.slane %v6047, %v6060
        %v6062 = vcombine.low %v6054, %v6061
        %v6063 = vcombine.low %v5256, %v5257
        %v6064 = vcombine.low %v5258, %v5259
        %v6066 = vunpack.c.l.s4 1983009808
        %v6067 = vunpack.c.0.s8 %v6066
        %v6068 = vlaneseq
        %v6069 = vshrl.u32 %v6068, 7
        %v6070 = vsub.s32 %v6067, %v6069
        %v6071 = vrot.slane %v6063, %v6070
        %v6073 = vunpack.c.l.s4 1983009808
        %v6074 = vunpack.c.0.s8 %v6073
        %v6075 = vlaneseq
        %v6076 = vshrl.u32 %v6075, 7
        %v6077 = vsub.s32 %v6074, %v6076
        %v6078 = vrot.slane %v6064, %v6077
        %v6079 = vcombine.low %v6071, %v6078
        %v6080 = vcombine.low %v5261, %v5262
        %v6081 = vcombine.low %v5263, %v5264
        %v6083 = vunpack.c.l.s4 1983009808
        %v6084 = vunpack.c.0.s8 %v6083
        %v6085 = vlaneseq
        %v6086 = vshrl.u32 %v6085, 7
        %v6087 = vsub.s32 %v6084, %v6086
        %v6088 = vrot.slane %v6080, %v6087
        %v6090 = vunpack.c.l.s4 1983009808
        %v6091 = vunpack.c.0.s8 %v6090
        %v6092 = vlaneseq
        %v6093 = vshrl.u32 %v6092, 7
        %v6094 = vsub.s32 %v6091, %v6093
        %v6095 = vrot.slane %v6081, %v6094
        %v6096 = vcombine.low %v6088, %v6095
        %v6097 = vcombine.low %v5265, %v5266
        %v6098 = vcombine.low %v5267, %v5268
        %v6100 = vunpack.c.l.s4 1983009808
        %v6101 = vunpack.c.0.s8 %v6100
        %v6102 = vlaneseq
        %v6103 = vshrl.u32 %v6102, 7
        %v6104 = vsub.s32 %v6101, %v6103
        %v6105 = vrot.slane %v6097, %v6104
        %v6107 = vunpack.c.l.s4 1983009808
        %v6108 = vunpack.c.0.s8 %v6107
        %v6109 = vlaneseq
        %v6110 = vshrl.u32 %v6109, 7
        %v6111 = vsub.s32 %v6108, %v6110
        %v6112 = vrot.slane %v6098, %v6111
        %v6113 = vcombine.low %v6105, %v6112
        %v6114 = vcombine.low %v5270, %v5271
        %v6115 = vcombine.low %v5272, %v5273
        %v6117 = vunpack.c.l.s4 1983009808
        %v6118 = vunpack.c.0.s8 %v6117
        %v6119 = vlaneseq
        %v6120 = vshrl.u32 %v6119, 7
        %v6121 = vsub.s32 %v6118, %v6120
        %v6122 = vrot.slane %v6114, %v6121
        %v6124 = vunpack.c.l.s4 1983009808
        %v6125 = vunpack.c.0.s8 %v6124
        %v6126 = vlaneseq
        %v6127 = vshrl.u32 %v6126, 7
        %v6128 = vsub.s32 %v6125, %v6127
        %v6129 = vrot.slane %v6115, %v6128
        %v6130 = vcombine.low %v6122, %v6129
        %v6131 = vcombine.low %v5274, %v5275
        %v6132 = vcombine.low %v5276, %v5277
        %v6134 = vunpack.c.l.s4 1983009808
        %v6135 = vunpack.c.0.s8 %v6134
        %v6136 = vlaneseq
        %v6137 = vshrl.u32 %v6136, 7
        %v6138 = vsub.s32 %v6135, %v6137
        %v6139 = vrot.slane %v6131, %v6138
        %v6141 = vunpack.c.l.s4 1983009808
        %v6142 = vunpack.c.0.s8 %v6141
        %v6143 = vlaneseq
        %v6144 = vshrl.u32 %v6143, 7
        %v6145 = vsub.s32 %v6142, %v6144
        %v6146 = vrot.slane %v6132, %v6145
        %v6147 = vcombine.low %v6139, %v6146
        %v6148 = vcombine.low %v5279, %v5280
        %v6149 = vcombine.low %v5281, %v5282
        %v6151 = vunpack.c.l.s4 1983009808
        %v6152 = vunpack.c.0.s8 %v6151
        %v6153 = vlaneseq
        %v6154 = vshrl.u32 %v6153, 7
        %v6155 = vsub.s32 %v6152, %v6154
        %v6156 = vrot.slane %v6148, %v6155
        %v6158 = vunpack.c.l.s4 1983009808
        %v6159 = vunpack.c.0.s8 %v6158
        %v6160 = vlaneseq
        %v6161 = vshrl.u32 %v6160, 7
        %v6162 = vsub.s32 %v6159, %v6161
        %v6163 = vrot.slane %v6149, %v6162
        %v6164 = vcombine.low %v6156, %v6163
        %v6165 = vcombine.low %v5283, %v5284
        %v6166 = vcombine.low %v5285, %v5286
        %v6168 = vunpack.c.l.s4 1983009808
        %v6169 = vunpack.c.0.s8 %v6168
        %v6170 = vlaneseq
        %v6171 = vshrl.u32 %v6170, 7
        %v6172 = vsub.s32 %v6169, %v6171
        %v6173 = vrot.slane %v6165, %v6172
        %v6175 = vunpack.c.l.s4 1983009808
        %v6176 = vunpack.c.0.s8 %v6175
        %v6177 = vlaneseq
        %v6178 = vshrl.u32 %v6177, 7
        %v6179 = vsub.s32 %v6176, %v6178
        %v6180 = vrot.slane %v6166, %v6179
        %v6181 = vcombine.low %v6173, %v6180
        %v6182 = vcombine.low %v5288, %v5289
        %v6183 = vcombine.low %v5290, %v5291
        %v6185 = vunpack.c.l.s4 1983009808
        %v6186 = vunpack.c.0.s8 %v6185
        %v6187 = vlaneseq
        %v6188 = vshrl.u32 %v6187, 7
        %v6189 = vsub.s32 %v6186, %v6188
        %v6190 = vrot.slane %v6182, %v6189
        %v6192 = vunpack.c.l.s4 1983009808
        %v6193 = vunpack.c.0.s8 %v6192
        %v6194 = vlaneseq
        %v6195 = vshrl.u32 %v6194, 7
        %v6196 = vsub.s32 %v6193, %v6195
        %v6197 = vrot.slane %v6183, %v6196
        %v6198 = vcombine.low %v6190, %v6197
        %v6199 = vcombine.low %v5292, %v5293
        %v6200 = vcombine.low %v5294, %v5295
        %v6202 = vunpack.c.l.s4 1983009808
        %v6203 = vunpack.c.0.s8 %v6202
        %v6204 = vlaneseq
        %v6205 = vshrl.u32 %v6204, 7
        %v6206 = vsub.s32 %v6203, %v6205
        %v6207 = vrot.slane %v6199, %v6206
        %v6209 = vunpack.c.l.s4 1983009808
        %v6210 = vunpack.c.0.s8 %v6209
        %v6211 = vlaneseq
        %v6212 = vshrl.u32 %v6211, 7
        %v6213 = vsub.s32 %v6210, %v6212
        %v6214 = vrot.slane %v6200, %v6213
        %v6215 = vcombine.low %v6207, %v6214
        %v6216 = vcombine.low %v5297, %v5298
        %v6217 = vcombine.low %v5299, %v5300
        %v6219 = vunpack.c.l.s4 1983009808
        %v6220 = vunpack.c.0.s8 %v6219
        %v6221 = vlaneseq
        %v6222 = vshrl.u32 %v6221, 7
        %v6223 = vsub.s32 %v6220, %v6222
        %v6224 = vrot.slane %v6216, %v6223
        %v6226 = vunpack.c.l.s4 1983009808
        %v6227 = vunpack.c.0.s8 %v6226
        %v6228 = vlaneseq
        %v6229 = vshrl.u32 %v6228, 7
        %v6230 = vsub.s32 %v6227, %v6229
        %v6231 = vrot.slane %v6217, %v6230
        %v6232 = vcombine.low %v6224, %v6231
        %v6233 = vcombine.low %v5301, %v5302
        %v6234 = vcombine.low %v5303, %v5304
        %v6236 = vunpack.c.l.s4 1983009808
        %v6237 = vunpack.c.0.s8 %v6236
        %v6238 = vlaneseq
        %v6239 = vshrl.u32 %v6238, 7
        %v6240 = vsub.s32 %v6237, %v6239
        %v6241 = vrot.slane %v6233, %v6240
        %v6243 = vunpack.c.l.s4 1983009808
        %v6244 = vunpack.c.0.s8 %v6243
        %v6245 = vlaneseq
        %v6246 = vshrl.u32 %v6245, 7
        %v6247 = vsub.s32 %v6244, %v6246
        %v6248 = vrot.slane %v6234, %v6247
        %v6249 = vcombine.low %v6241, %v6248
        %v6250 = vcombine.low %v5306, %v5307
        %v6251 = vcombine.low %v5308, %v5309
        %v6253 = vunpack.c.l.s4 1983009808
        %v6254 = vunpack.c.0.s8 %v6253
        %v6255 = vlaneseq
        %v6256 = vshrl.u32 %v6255, 7
        %v6257 = vsub.s32 %v6254, %v6256
        %v6258 = vrot.slane %v6250, %v6257
        %v6260 = vunpack.c.l.s4 1983009808
        %v6261 = vunpack.c.0.s8 %v6260
        %v6262 = vlaneseq
        %v6263 = vshrl.u32 %v6262, 7
        %v6264 = vsub.s32 %v6261, %v6263
        %v6265 = vrot.slane %v6251, %v6264
        %v6266 = vcombine.low %v6258, %v6265
        %v6267 = vcombine.low %v5310, %v5311
        %v6268 = vcombine.low %v5312, %v5313
        %v6270 = vunpack.c.l.s4 1983009808
        %v6271 = vunpack.c.0.s8 %v6270
        %v6272 = vlaneseq
        %v6273 = vshrl.u32 %v6272, 7
        %v6274 = vsub.s32 %v6271, %v6273
        %v6275 = vrot.slane %v6267, %v6274
        %v6277 = vunpack.c.l.s4 1983009808
        %v6278 = vunpack.c.0.s8 %v6277
        %v6279 = vlaneseq
        %v6280 = vshrl.u32 %v6279, 7
        %v6281 = vsub.s32 %v6278, %v6280
        %v6282 = vrot.slane %v6268, %v6281
        %v6283 = vcombine.low %v6275, %v6282
        %v6304 = vsel %vm3225, %v5410, %v5885
        %v6305 = vsel %vm3225, %v5427, %v5887
        %v6306 = vsel %vm3225, %v5444, %v5889
        %v6307 = vsel %vm3225, %v5461, %v5891
        %v6308 = vsel %vm3225, %v5478, %v5893
        %v6309 = vsel %vm3225, %v5495, %v5895
        %v6310 = vsel %vm3225, %v5512, %v5897
        %v6311 = vsel %vm3225, %v5529, %v5899
        %v6312 = vsel %vm3225, %v5546, %v5901
        %v6313 = vsel %vm3225, %v5563, %v5903
        %v6314 = vsel %vm3225, %v5580, %v5905
        %v6315 = vsel %vm3225, %v5597, %v5907
        %v6316 = vsel %vm3225, %v5614, %v5909
        %v6317 = vsel %vm3225, %v5631, %v5911
        %v6318 = vsel %vm3225, %v5648, %v5913
        %v6319 = vsel %vm3225, %v5665, %v5915
        %v6320 = vsel %vm3225, %v5682, %v5917
        %v6321 = vsel %vm3225, %v5699, %v5919
        %v6322 = vsel %vm3225, %v5716, %v5921
        %v6323 = vsel %vm3225, %v5733, %v5923
        %v6324 = vpack.c.bf16 %v6305, %v6304
        %v6325 = vpack.c.bf16 %v5977, %v5960
        %v6326 = vpack.c.bf16 %v6307, %v6306
        %v6327 = vpack.c.bf16 %v6011, %v5994
        %v6328 = vpack.c.bf16 %v6309, %v6308
        %v6329 = vpack.c.bf16 %v6045, %v6028
        %v6330 = vpack.c.bf16 %v6311, %v6310
        %v6331 = vpack.c.bf16 %v6079, %v6062
        %v6332 = vpack.c.bf16 %v6313, %v6312
        %v6333 = vpack.c.bf16 %v6113, %v6096
        %v6334 = vpack.c.bf16 %v6315, %v6314
        %v6335 = vpack.c.bf16 %v6147, %v6130
        %v6336 = vpack.c.bf16 %v6317, %v6316
        %v6337 = vpack.c.bf16 %v6181, %v6164
        %v6338 = vpack.c.bf16 %v6319, %v6318
        %v6339 = vpack.c.bf16 %v6215, %v6198
        %v6340 = vpack.c.bf16 %v6321, %v6320
        %v6341 = vpack.c.bf16 %v6249, %v6232
        %v6342 = vpack.c.bf16 %v6323, %v6322
        %v6343 = vpack.c.bf16 %v6283, %v6266
        %v6364 = vunpack.c.l.b16 %v6324
        %v6365 = vunpack.c.l.b16 %v6325
        %v6366 = vunpack.c.h.b16 %v6324
        %v6367 = vunpack.c.h.b16 %v6325
        %v6368 = vunpack.c.l.b16 %v6326
        %v6369 = vunpack.c.l.b16 %v6327
        %v6370 = vunpack.c.h.b16 %v6326
        %v6371 = vunpack.c.h.b16 %v6327
        %v6372 = vunpack.c.l.b16 %v6328
        %v6373 = vunpack.c.l.b16 %v6329
        %v6374 = vunpack.c.h.b16 %v6328
        %v6375 = vunpack.c.h.b16 %v6329
        %v6376 = vunpack.c.l.b16 %v6330
        %v6377 = vunpack.c.l.b16 %v6331
        %v6378 = vunpack.c.h.b16 %v6330
        %v6379 = vunpack.c.h.b16 %v6331
        %v6380 = vunpack.c.l.b16 %v6332
        %v6381 = vunpack.c.l.b16 %v6333
        %v6382 = vunpack.c.h.b16 %v6332
        %v6383 = vunpack.c.h.b16 %v6333
        %v6384 = vunpack.c.l.b16 %v6334
        %v6385 = vunpack.c.l.b16 %v6335
        %v6386 = vunpack.c.h.b16 %v6334
        %v6387 = vunpack.c.h.b16 %v6335
        %v6388 = vunpack.c.l.b16 %v6336
        %v6389 = vunpack.c.l.b16 %v6337
        %v6390 = vunpack.c.h.b16 %v6336
        %v6391 = vunpack.c.h.b16 %v6337
        %v6392 = vunpack.c.l.b16 %v6338
        %v6393 = vunpack.c.l.b16 %v6339
        %v6394 = vunpack.c.h.b16 %v6338
        %v6395 = vunpack.c.h.b16 %v6339
        %v6396 = vunpack.c.l.b16 %v6340
        %v6397 = vunpack.c.l.b16 %v6341
        %v6398 = vunpack.c.h.b16 %v6340
        %v6399 = vunpack.c.h.b16 %v6341
        %v6400 = vunpack.c.l.b16 %v6342
        %v6401 = vunpack.c.l.b16 %v6343
        %v6402 = vunpack.c.h.b16 %v6342
        %v6403 = vunpack.c.h.b16 %v6343
        %v6404 = vpack.c.b16 %v6365, %v6364
        %v6405 = vpack.c.b16 %v6367, %v6366
        %v6406 = vpack.c.b16 %v6369, %v6368
        %v6407 = vpack.c.b16 %v6371, %v6370
        %v6408 = vpack.c.b16 %v6373, %v6372
        %v6409 = vpack.c.b16 %v6375, %v6374
        %v6410 = vpack.c.b16 %v6377, %v6376
        %v6411 = vpack.c.b16 %v6379, %v6378
        %v6412 = vpack.c.b16 %v6381, %v6380
        %v6413 = vpack.c.b16 %v6383, %v6382
        %v6414 = vpack.c.b16 %v6385, %v6384
        %v6415 = vpack.c.b16 %v6387, %v6386
        %v6416 = vpack.c.b16 %v6389, %v6388
        %v6417 = vpack.c.b16 %v6391, %v6390
        %v6418 = vpack.c.b16 %v6393, %v6392
        %v6419 = vpack.c.b16 %v6395, %v6394
        %v6420 = vpack.c.b16 %v6397, %v6396
        %v6421 = vpack.c.b16 %v6399, %v6398
        %v6422 = vpack.c.b16 %v6401, %v6400
        %v6423 = vpack.c.b16 %v6403, %v6402
        %6444 = vst.msk [vmem:[#allocation2] sm:$0xff] %vm3368, %v6404
        %6445 = vst.msk [vmem:[#allocation2 + $0x8] sm:$0xff] %vm3368, %v6405
        %6446 = vst.msk [vmem:[#allocation2 + $0x10] sm:$0xff] %vm3368, %v6406
        %6447 = vst.msk [vmem:[#allocation2 + $0x18] sm:$0xff] %vm3368, %v6407
        %6448 = vst.msk [vmem:[#allocation2 + $0x20] sm:$0xff] %vm3368, %v6408
        %6449 = vst.msk [vmem:[#allocation2 + $0x28] sm:$0xff] %vm3368, %v6409
        %6450 = vst.msk [vmem:[#allocation2 + $0x30] sm:$0xff] %vm3368, %v6410
        %6451 = vst.msk [vmem:[#allocation2 + $0x38] sm:$0xff] %vm3368, %v6411
        %6452 = vst.msk [vmem:[#allocation2 + $0x40] sm:$0xff] %vm3368, %v6412
        %6453 = vst.msk [vmem:[#allocation2 + $0x48] sm:$0xff] %vm3368, %v6413
        %6454 = vst.msk [vmem:[#allocation2 + $0x50] sm:$0xff] %vm3368, %v6414
        %6455 = vst.msk [vmem:[#allocation2 + $0x58] sm:$0xff] %vm3368, %v6415
        %6456 = vst.msk [vmem:[#allocation2 + $0x60] sm:$0xff] %vm3368, %v6416
        %6457 = vst.msk [vmem:[#allocation2 + $0x68] sm:$0xff] %vm3368, %v6417
        %6458 = vst.msk [vmem:[#allocation2 + $0x70] sm:$0xff] %vm3368, %v6418
        %6459 = vst.msk [vmem:[#allocation2 + $0x78] sm:$0xff] %vm3368, %v6419
        %6460 = vst.msk [vmem:[#allocation2 + $0x80] sm:$0xff] %vm3368, %v6420
        %6461 = vst.msk [vmem:[#allocation2 + $0x88] sm:$0xff] %vm3368, %v6421
        %6462 = vst.msk [vmem:[#allocation2 + $0x90] sm:$0xff] %vm3368, %v6422
        %6463 = vst.msk [vmem:[#allocation2 + $0x98] sm:$0xff] %vm3368, %v6423
        %v6464 = vld [vmem:[#allocation2] sm:$0xff]
        %v6465 = vld [vmem:[#allocation2 + $0x8] sm:$0xff]
        %v6466 = vld [vmem:[#allocation2 + $0x10] sm:$0xff]
        %v6467 = vld [vmem:[#allocation2 + $0x18] sm:$0xff]
        %v6468 = vld [vmem:[#allocation2 + $0x20] sm:$0xff]
        %v6469 = vld [vmem:[#allocation2 + $0x28] sm:$0xff]
        %v6470 = vld [vmem:[#allocation2 + $0x30] sm:$0xff]
        %v6471 = vld [vmem:[#allocation2 + $0x38] sm:$0xff]
        %v6472 = vld [vmem:[#allocation2 + $0x40] sm:$0xff]
        %v6473 = vld [vmem:[#allocation2 + $0x48] sm:$0xff]
        %v6474 = vld [vmem:[#allocation2 + $0x50] sm:$0xff]
        %v6475 = vld [vmem:[#allocation2 + $0x58] sm:$0xff]
        %v6476 = vld [vmem:[#allocation2 + $0x60] sm:$0xff]
        %v6477 = vld [vmem:[#allocation2 + $0x68] sm:$0xff]
        %v6478 = vld [vmem:[#allocation2 + $0x70] sm:$0xff]
        %v6479 = vld [vmem:[#allocation2 + $0x78] sm:$0xff]
        %s6480 = scalar_lea.vmem %s2, 288
        %v6481 = vld [vmem:[%s6480] sm:$0xf]
        %v6482 = vld [vmem:[%s6480 + $0x4] sm:$0xf]
        %v6483 = vld [vmem:[%s6480 + $0x8] sm:$0xf]
        %v6484 = vld [vmem:[%s6480 + $0xc] sm:$0xf]
        %v6485 = vld [vmem:[%s6480 + $0x10] sm:$0xf]
        %v6486 = vld [vmem:[%s6480 + $0x14] sm:$0xf]
        %v6487 = vld [vmem:[%s6480 + $0x18] sm:$0xf]
        %v6488 = vld [vmem:[%s6480 + $0x1c] sm:$0xf]
        %v6489 = vld [vmem:[%s6480 + $0x20] sm:$0xf]
        %v6490 = vld [vmem:[%s6480 + $0x24] sm:$0xf]
        %v6491 = vld [vmem:[%s6480 + $0x28] sm:$0xf]
        %v6492 = vld [vmem:[%s6480 + $0x2c] sm:$0xf]
        %v6493 = vld [vmem:[%s6480 + $0x30] sm:$0xf]
        %v6494 = vld [vmem:[%s6480 + $0x34] sm:$0xf]
        %v6495 = vld [vmem:[%s6480 + $0x38] sm:$0xf]
        %v6496 = vld [vmem:[%s6480 + $0x3c] sm:$0xf]
        %v6497 = vld [vmem:[%s6480 + $0x40] sm:$0xf]
        %v6498 = vld [vmem:[%s6480 + $0x44] sm:$0xf]
        %v6499 = vld [vmem:[%s6480 + $0x48] sm:$0xf]
        %v6500 = vld [vmem:[%s6480 + $0x4c] sm:$0xf]
        %v6501 = vld [vmem:[%s6480 + $0x50] sm:$0xf]
        %v6502 = vld [vmem:[%s6480 + $0x54] sm:$0xf]
        %v6503 = vld [vmem:[%s6480 + $0x58] sm:$0xf]
        %v6504 = vld [vmem:[%s6480 + $0x5c] sm:$0xf]
        %v6505 = vld [vmem:[%s3429] sm:$0xff]
        %v6506 = vld [vmem:[%s3429 + $0x8] sm:$0xff]
        %v6507 = vld [vmem:[%s3429 + $0x10] sm:$0xff]
        %v6508 = vld [vmem:[%s3429 + $0x18] sm:$0xff]
        %v6509 = vld [vmem:[%s3429 + $0x20] sm:$0xff]
        %v6510 = vld [vmem:[%s3429 + $0x28] sm:$0xff]
        %v6511 = vld [vmem:[%s3429 + $0x30] sm:$0xff]
        %v6512 = vld [vmem:[%s3429 + $0x38] sm:$0xff]
        %v6513 = vld [vmem:[%s3429 + $0x40] sm:$0xff]
        %v6514 = vld [vmem:[%s3429 + $0x48] sm:$0xff]
        %v6515 = vld [vmem:[%s3429 + $0x50] sm:$0xff]
        %v6516 = vld [vmem:[%s3429 + $0x58] sm:$0xff]
        %v6517 = vld [vmem:[%s3429 + $0x60] sm:$0xff]
        %v6518 = vld [vmem:[%s3429 + $0x68] sm:$0xff]
        %v6519 = vld [vmem:[%s3429 + $0x70] sm:$0xff]
        %v6520 = vld [vmem:[%s3429 + $0x78] sm:$0xff]
        %s6521 = scalar_lea.vmem %s2, 384
        %v6522 = vld [vmem:[%s6521] sm:$0xf]
        %v6523 = vld [vmem:[%s6521 + $0x4] sm:$0xf]
        %v6524 = vld [vmem:[%s6521 + $0x8] sm:$0xf]
        %v6525 = vld [vmem:[%s6521 + $0xc] sm:$0xf]
        %v6526 = vld [vmem:[%s6521 + $0x10] sm:$0xf]
        %v6527 = vld [vmem:[%s6521 + $0x14] sm:$0xf]
        %v6528 = vld [vmem:[%s6521 + $0x18] sm:$0xf]
        %v6529 = vld [vmem:[%s6521 + $0x1c] sm:$0xf]
        %v6530 = vld [vmem:[%s6521 + $0x20] sm:$0xf]
        %v6531 = vld [vmem:[%s6521 + $0x24] sm:$0xf]
        %v6532 = vld [vmem:[%s6521 + $0x28] sm:$0xf]
        %v6533 = vld [vmem:[%s6521 + $0x2c] sm:$0xf]
        %v6534 = vld [vmem:[%s6521 + $0x30] sm:$0xf]
        %v6535 = vld [vmem:[%s6521 + $0x34] sm:$0xf]
        %v6536 = vld [vmem:[%s6521 + $0x38] sm:$0xf]
        %v6537 = vld [vmem:[%s6521 + $0x3c] sm:$0xf]
        %v6538 = vld [vmem:[%s6521 + $0x40] sm:$0xf]
        %v6539 = vld [vmem:[%s6521 + $0x44] sm:$0xf]
        %v6540 = vld [vmem:[%s6521 + $0x48] sm:$0xf]
        %v6541 = vld [vmem:[%s6521 + $0x4c] sm:$0xf]
        %v6542 = vld [vmem:[%s6521 + $0x50] sm:$0xf]
        %v6543 = vld [vmem:[%s6521 + $0x54] sm:$0xf]
        %v6544 = vld [vmem:[%s6521 + $0x58] sm:$0xf]
        %v6545 = vld [vmem:[%s6521 + $0x5c] sm:$0xf]
        %v6562 = vunpack.c.l.b16 %v6505
        %v6563 = vunpack.c.h.b16 %v6505
        %v6564 = vunpack.c.l.b16 %v6506
        %v6565 = vunpack.c.h.b16 %v6506
        %v6566 = vunpack.c.l.b16 %v6507
        %v6567 = vunpack.c.h.b16 %v6507
        %v6568 = vunpack.c.l.b16 %v6508
        %v6569 = vunpack.c.h.b16 %v6508
        %v6570 = vunpack.c.l.b16 %v6509
        %v6571 = vunpack.c.h.b16 %v6509
        %v6572 = vunpack.c.l.b16 %v6510
        %v6573 = vunpack.c.h.b16 %v6510
        %v6574 = vunpack.c.l.b16 %v6511
        %v6575 = vunpack.c.h.b16 %v6511
        %v6576 = vunpack.c.l.b16 %v6512
        %v6577 = vunpack.c.h.b16 %v6512
        %v6578 = vunpack.c.l.b16 %v6513
        %v6579 = vunpack.c.h.b16 %v6513
        %v6580 = vunpack.c.l.b16 %v6514
        %v6581 = vunpack.c.h.b16 %v6514
        %v6582 = vunpack.c.l.b16 %v6515
        %v6583 = vunpack.c.h.b16 %v6515
        %v6584 = vunpack.c.l.b16 %v6516
        %v6585 = vunpack.c.h.b16 %v6516
        %v6586 = vunpack.c.l.b16 %v6517
        %v6587 = vunpack.c.h.b16 %v6517
        %v6588 = vunpack.c.l.b16 %v6518
        %v6589 = vunpack.c.h.b16 %v6518
        %v6590 = vunpack.c.l.b16 %v6519
        %v6591 = vunpack.c.h.b16 %v6519
        %v6592 = vunpack.c.l.b16 %v6520
        %v6593 = vunpack.c.h.b16 %v6520
        %v6594 = vpack.c.b16 %v6564, %v6562
        %v6595 = vpack.c.b16 %v6565, %v6563
        %v6596 = vpack.c.b16 %v6568, %v6566
        %v6597 = vpack.c.b16 %v6569, %v6567
        %v6598 = vpack.c.b16 %v6572, %v6570
        %v6599 = vpack.c.b16 %v6573, %v6571
        %v6600 = vpack.c.b16 %v6576, %v6574
        %v6601 = vpack.c.b16 %v6577, %v6575
        %v6602 = vpack.c.b16 %v6580, %v6578
        %v6603 = vpack.c.b16 %v6581, %v6579
        %v6604 = vpack.c.b16 %v6584, %v6582
        %v6605 = vpack.c.b16 %v6585, %v6583
        %v6606 = vpack.c.b16 %v6588, %v6586
        %v6607 = vpack.c.b16 %v6589, %v6587
        %v6608 = vpack.c.b16 %v6592, %v6590
        %v6609 = vpack.c.b16 %v6593, %v6591
        %v6642 = vunpack.c.l.b16 %v6522
        %v6643 = vunpack.c.l.b16 %v6523
        %v6644 = vunpack.c.l.b16 %v6524
        %v6645 = vunpack.c.l.b16 %v6525
        %v6646 = vunpack.c.l.b16 %v6526
        %v6647 = vunpack.c.l.b16 %v6527
        %v6648 = vunpack.c.l.b16 %v6528
        %v6649 = vunpack.c.l.b16 %v6529
        %v6650 = vunpack.c.l.b16 %v6530
        %v6651 = vunpack.c.l.b16 %v6531
        %v6652 = vunpack.c.l.b16 %v6532
        %v6653 = vunpack.c.l.b16 %v6533
        %v6654 = vunpack.c.l.b16 %v6534
        %v6655 = vunpack.c.l.b16 %v6535
        %v6656 = vunpack.c.l.b16 %v6536
        %v6657 = vunpack.c.l.b16 %v6537
        %v6658 = vunpack.c.l.b16 %v6538
        %v6659 = vunpack.c.l.b16 %v6539
        %v6660 = vunpack.c.l.b16 %v6540
        %v6661 = vunpack.c.l.b16 %v6541
        %v6662 = vunpack.c.l.b16 %v6542
        %v6663 = vunpack.c.l.b16 %v6543
        %v6664 = vunpack.c.l.b16 %v6544
        %v6665 = vunpack.c.l.b16 %v6545
        %v6666 = vpack.c.b16 %v6643, %v6642
        %v6667 = vpack.c.b16 %v6645, %v6644
        %v6668 = vpack.c.b16 %v6647, %v6646
        %v6669 = vpack.c.b16 %v6649, %v6648
        %v6670 = vpack.c.b16 %v6651, %v6650
        %v6671 = vpack.c.b16 %v6653, %v6652
        %v6672 = vpack.c.b16 %v6655, %v6654
        %v6673 = vpack.c.b16 %v6657, %v6656
        %v6674 = vpack.c.b16 %v6659, %v6658
        %v6675 = vpack.c.b16 %v6661, %v6660
        %v6676 = vpack.c.b16 %v6663, %v6662
        %v6677 = vpack.c.b16 %v6665, %v6664
        %v6691 = vsel %vm3225, %v6595, 0
        %v6694 = vsel %vm3225, %v6597, 0
        %v6697 = vsel %vm3225, %v6599, 0
        %v6700 = vsel %vm3225, %v6601, 0
        %v6703 = vsel %vm3225, %v6603, 0
        %v6706 = vsel %vm3225, %v6605, 0
        %v6709 = vsel %vm3225, %v6607, 0
        %v6712 = vsel %vm3225, %v6609, 0
        %6714 = vmatprep.subr.bf16.mxu0 0
        %6715 = vmatpush1.bf16.msra.mxu0 %v6673
        %6716 = vmatprep.subr.bf16.mxu0 0
        %6717 = vmatpush1.bf16.msra.mxu0 %v6672
        %6718 = vmatprep.subr.bf16.mxu0 0
        %6719 = vmatpush1.bf16.msra.mxu0 %v6671
        %6720 = vmatprep.subr.bf16.mxu0 0
        %6721 = vmatpush1.bf16.msra.mxu0 %v6670
        %6722 = vmatprep.subr.bf16.mxu0 0
        %6723 = vmatpush1.bf16.msra.mxu0 %v6669
        %6724 = vmatprep.subr.bf16.mxu0 0
        %6725 = vmatpush1.bf16.msra.mxu0 %v6668
        %6726 = vmatprep.subr.bf16.mxu0 0
        %6727 = vmatpush1.bf16.msra.mxu0 %v6667
        %6728 = vmatprep.subr.bf16.mxu0 0
        %6729 = vmatpush1.bf16.msra.mxu0 %v6666
        %6730 = vmatprep.subr.bf16.mxu0 0
        %6731 = vmatpush2.bf16.msra.mxu0 0
        %6732 = vmatprep.subr.bf16.mxu0 0
        %6733 = vmatpush2.bf16.msra.mxu0 0
        %6734 = vmatprep.subr.bf16.mxu0 0
        %6735 = vmatpush2.bf16.msra.mxu0 0
        %6736 = vmatprep.subr.bf16.mxu0 0
        %6737 = vmatpush2.bf16.msra.mxu0 0
        %6738 = vmatprep.subr.bf16.mxu0 0
        %6739 = vmatpush2.bf16.msra.mxu0 %v6677
        %6740 = vmatprep.subr.bf16.mxu0 0
        %6741 = vmatpush2.bf16.msra.mxu0 %v6676
        %6742 = vmatprep.subr.bf16.mxu0 0
        %6743 = vmatpush2.bf16.msra.mxu0 %v6675
        %6744 = vmatprep.subr.bf16.mxu0 0
        %6745 = vmatpush2.bf16.msra.mxu0 %v6674
        %6746 = vmatprep.mubr.bf16.mxu0 %v6691
        %6747 = vmatmul.mubr.bf16.gmra.mxu0 %v6594
        %v6748 = vpop.f32.mrf.mxu0
        %v6749 = vadd.f32 0.0, %v6748
        %v6750 = vpop.f32.mrf.mxu0
        %v6751 = vpop.f32.mrf.mxu0
        %v6752 = vadd.f32 0.0, %v6751
        %v6753 = vpop.f32.mrf.mxu0
        %6754 = vmatprep.mubr.bf16.mxu0 %v6694
        %6755 = vmatmul.mubr.bf16.gmra.mxu0 %v6596
        %v6756 = vpop.f32.mrf.mxu0
        %v6757 = vadd.f32 0.0, %v6756
        %v6758 = vpop.f32.mrf.mxu0
        %v6759 = vpop.f32.mrf.mxu0
        %v6760 = vadd.f32 0.0, %v6759
        %v6761 = vpop.f32.mrf.mxu0
        %6762 = vmatprep.mubr.bf16.mxu0 %v6697
        %6763 = vmatmul.mubr.bf16.gmra.mxu0 %v6598
        %v6764 = vpop.f32.mrf.mxu0
        %v6765 = vadd.f32 0.0, %v6764
        %v6766 = vpop.f32.mrf.mxu0
        %v6767 = vpop.f32.mrf.mxu0
        %v6768 = vadd.f32 0.0, %v6767
        %v6769 = vpop.f32.mrf.mxu0
        %6770 = vmatprep.mubr.bf16.mxu0 %v6700
        %6771 = vmatmul.mubr.bf16.gmra.mxu0 %v6600
        %v6772 = vpop.f32.mrf.mxu0
        %v6773 = vadd.f32 0.0, %v6772
        %v6774 = vpop.f32.mrf.mxu0
        %v6775 = vpop.f32.mrf.mxu0
        %v6776 = vadd.f32 0.0, %v6775
        %v6777 = vpop.f32.mrf.mxu0
        %6778 = vmatprep.mubr.bf16.mxu0 %v6703
        %6779 = vmatmul.mubr.bf16.gmra.mxu0 %v6602
        %v6780 = vpop.f32.mrf.mxu0
        %v6781 = vadd.f32 0.0, %v6780
        %v6782 = vpop.f32.mrf.mxu0
        %v6783 = vpop.f32.mrf.mxu0
        %v6784 = vadd.f32 0.0, %v6783
        %v6785 = vpop.f32.mrf.mxu0
        %6786 = vmatprep.mubr.bf16.mxu0 %v6706
        %6787 = vmatmul.mubr.bf16.gmra.mxu0 %v6604
        %v6788 = vpop.f32.mrf.mxu0
        %v6789 = vadd.f32 0.0, %v6788
        %v6790 = vpop.f32.mrf.mxu0
        %v6791 = vpop.f32.mrf.mxu0
        %v6792 = vadd.f32 0.0, %v6791
        %v6793 = vpop.f32.mrf.mxu0
        %6794 = vmatprep.mubr.bf16.mxu0 %v6709
        %6795 = vmatmul.mubr.bf16.gmra.mxu0 %v6606
        %v6796 = vpop.f32.mrf.mxu0
        %v6797 = vadd.f32 0.0, %v6796
        %v6798 = vpop.f32.mrf.mxu0
        %v6799 = vpop.f32.mrf.mxu0
        %v6800 = vadd.f32 0.0, %v6799
        %v6801 = vpop.f32.mrf.mxu0
        %6802 = vmatprep.mubr.bf16.mxu0 %v6712
        %6803 = vmatmul.mubr.bf16.gmra.mxu0 %v6608
        %v6804 = vpop.f32.mrf.mxu0
        %v6805 = vadd.f32 0.0, %v6804
        %v6806 = vpop.f32.mrf.mxu0
        %v6807 = vpop.f32.mrf.mxu0
        %v6808 = vadd.f32 0.0, %v6807
        %v6809 = vpop.f32.mrf.mxu0
        %6810 = vdwg.mxu0
        %v6827 = vunpack.c.l.b16 %v6464
        %v6828 = vunpack.c.h.b16 %v6464
        %v6829 = vunpack.c.l.b16 %v6465
        %v6830 = vunpack.c.h.b16 %v6465
        %v6831 = vunpack.c.l.b16 %v6466
        %v6832 = vunpack.c.h.b16 %v6466
        %v6833 = vunpack.c.l.b16 %v6467
        %v6834 = vunpack.c.h.b16 %v6467
        %v6835 = vunpack.c.l.b16 %v6468
        %v6836 = vunpack.c.h.b16 %v6468
        %v6837 = vunpack.c.l.b16 %v6469
        %v6838 = vunpack.c.h.b16 %v6469
        %v6839 = vunpack.c.l.b16 %v6470
        %v6840 = vunpack.c.h.b16 %v6470
        %v6841 = vunpack.c.l.b16 %v6471
        %v6842 = vunpack.c.h.b16 %v6471
        %v6843 = vunpack.c.l.b16 %v6472
        %v6844 = vunpack.c.h.b16 %v6472
        %v6845 = vunpack.c.l.b16 %v6473
        %v6846 = vunpack.c.h.b16 %v6473
        %v6847 = vunpack.c.l.b16 %v6474
        %v6848 = vunpack.c.h.b16 %v6474
        %v6849 = vunpack.c.l.b16 %v6475
        %v6850 = vunpack.c.h.b16 %v6475
        %v6851 = vunpack.c.l.b16 %v6476
        %v6852 = vunpack.c.h.b16 %v6476
        %v6853 = vunpack.c.l.b16 %v6477
        %v6854 = vunpack.c.h.b16 %v6477
        %v6855 = vunpack.c.l.b16 %v6478
        %v6856 = vunpack.c.h.b16 %v6478
        %v6857 = vunpack.c.l.b16 %v6479
        %v6858 = vunpack.c.h.b16 %v6479
        %v6859 = vpack.c.b16 %v6829, %v6827
        %v6860 = vpack.c.b16 %v6830, %v6828
        %v6861 = vpack.c.b16 %v6833, %v6831
        %v6862 = vpack.c.b16 %v6834, %v6832
        %v6863 = vpack.c.b16 %v6837, %v6835
        %v6864 = vpack.c.b16 %v6838, %v6836
        %v6865 = vpack.c.b16 %v6841, %v6839
        %v6866 = vpack.c.b16 %v6842, %v6840
        %v6867 = vpack.c.b16 %v6845, %v6843
        %v6868 = vpack.c.b16 %v6846, %v6844
        %v6869 = vpack.c.b16 %v6849, %v6847
        %v6870 = vpack.c.b16 %v6850, %v6848
        %v6871 = vpack.c.b16 %v6853, %v6851
        %v6872 = vpack.c.b16 %v6854, %v6852
        %v6873 = vpack.c.b16 %v6857, %v6855
        %v6874 = vpack.c.b16 %v6858, %v6856
        %v6907 = vunpack.c.l.b16 %v6481
        %v6908 = vunpack.c.l.b16 %v6482
        %v6909 = vunpack.c.l.b16 %v6483
        %v6910 = vunpack.c.l.b16 %v6484
        %v6911 = vunpack.c.l.b16 %v6485
        %v6912 = vunpack.c.l.b16 %v6486
        %v6913 = vunpack.c.l.b16 %v6487
        %v6914 = vunpack.c.l.b16 %v6488
        %v6915 = vunpack.c.l.b16 %v6489
        %v6916 = vunpack.c.l.b16 %v6490
        %v6917 = vunpack.c.l.b16 %v6491
        %v6918 = vunpack.c.l.b16 %v6492
        %v6919 = vunpack.c.l.b16 %v6493
        %v6920 = vunpack.c.l.b16 %v6494
        %v6921 = vunpack.c.l.b16 %v6495
        %v6922 = vunpack.c.l.b16 %v6496
        %v6923 = vunpack.c.l.b16 %v6497
        %v6924 = vunpack.c.l.b16 %v6498
        %v6925 = vunpack.c.l.b16 %v6499
        %v6926 = vunpack.c.l.b16 %v6500
        %v6927 = vunpack.c.l.b16 %v6501
        %v6928 = vunpack.c.l.b16 %v6502
        %v6929 = vunpack.c.l.b16 %v6503
        %v6930 = vunpack.c.l.b16 %v6504
        %v6931 = vpack.c.b16 %v6908, %v6907
        %v6932 = vpack.c.b16 %v6910, %v6909
        %v6933 = vpack.c.b16 %v6912, %v6911
        %v6934 = vpack.c.b16 %v6914, %v6913
        %v6935 = vpack.c.b16 %v6916, %v6915
        %v6936 = vpack.c.b16 %v6918, %v6917
        %v6937 = vpack.c.b16 %v6920, %v6919
        %v6938 = vpack.c.b16 %v6922, %v6921
        %v6939 = vpack.c.b16 %v6924, %v6923
        %v6940 = vpack.c.b16 %v6926, %v6925
        %v6941 = vpack.c.b16 %v6928, %v6927
        %v6942 = vpack.c.b16 %v6930, %v6929
        %v6956 = vsel %vm3225, %v6860, 0
        %v6959 = vsel %vm3225, %v6862, 0
        %v6962 = vsel %vm3225, %v6864, 0
        %v6965 = vsel %vm3225, %v6866, 0
        %v6968 = vsel %vm3225, %v6868, 0
        %v6971 = vsel %vm3225, %v6870, 0
        %v6974 = vsel %vm3225, %v6872, 0
        %v6977 = vsel %vm3225, %v6874, 0
        %6979 = vmatprep.subr.bf16.mxu0 0
        %6980 = vmatpush1.bf16.msra.mxu0 %v6938
        %6981 = vmatprep.subr.bf16.mxu0 0
        %6982 = vmatpush1.bf16.msra.mxu0 %v6937
        %6983 = vmatprep.subr.bf16.mxu0 0
        %6984 = vmatpush1.bf16.msra.mxu0 %v6936
        %6985 = vmatprep.subr.bf16.mxu0 0
        %6986 = vmatpush1.bf16.msra.mxu0 %v6935
        %6987 = vmatprep.subr.bf16.mxu0 0
        %6988 = vmatpush1.bf16.msra.mxu0 %v6934
        %6989 = vmatprep.subr.bf16.mxu0 0
        %6990 = vmatpush1.bf16.msra.mxu0 %v6933
        %6991 = vmatprep.subr.bf16.mxu0 0
        %6992 = vmatpush1.bf16.msra.mxu0 %v6932
        %6993 = vmatprep.subr.bf16.mxu0 0
        %6994 = vmatpush1.bf16.msra.mxu0 %v6931
        %6995 = vmatprep.subr.bf16.mxu0 0
        %6996 = vmatpush2.bf16.msra.mxu0 0
        %6997 = vmatprep.subr.bf16.mxu0 0
        %6998 = vmatpush2.bf16.msra.mxu0 0
        %6999 = vmatprep.subr.bf16.mxu0 0
        %7000 = vmatpush2.bf16.msra.mxu0 0
        %7001 = vmatprep.subr.bf16.mxu0 0
        %7002 = vmatpush2.bf16.msra.mxu0 0
        %7003 = vmatprep.subr.bf16.mxu0 0
        %7004 = vmatpush2.bf16.msra.mxu0 %v6942
        %7005 = vmatprep.subr.bf16.mxu0 0
        %7006 = vmatpush2.bf16.msra.mxu0 %v6941
        %7007 = vmatprep.subr.bf16.mxu0 0
        %7008 = vmatpush2.bf16.msra.mxu0 %v6940
        %7009 = vmatprep.subr.bf16.mxu0 0
        %7010 = vmatpush2.bf16.msra.mxu0 %v6939
        %7011 = vmatprep.mubr.bf16.mxu0 %v6956
        %7012 = vmatmul.mubr.bf16.gmra.mxu0 %v6859
        %v7013 = vpop.f32.mrf.mxu0
        %v7014 = vadd.f32 %v6749, %v7013
        %v7015 = vpop.f32.mrf.mxu0
        %v7016 = vpop.f32.mrf.mxu0
        %v7017 = vadd.f32 %v6752, %v7016
        %v7018 = vpop.f32.mrf.mxu0
        %7019 = vmatprep.mubr.bf16.mxu0 %v6959
        %7020 = vmatmul.mubr.bf16.gmra.mxu0 %v6861
        %v7021 = vpop.f32.mrf.mxu0
        %v7022 = vadd.f32 %v6757, %v7021
        %v7023 = vpop.f32.mrf.mxu0
        %v7024 = vpop.f32.mrf.mxu0
        %v7025 = vadd.f32 %v6760, %v7024
        %v7026 = vpop.f32.mrf.mxu0
        %7027 = vmatprep.mubr.bf16.mxu0 %v6962
        %7028 = vmatmul.mubr.bf16.gmra.mxu0 %v6863
        %v7029 = vpop.f32.mrf.mxu0
        %v7030 = vadd.f32 %v6765, %v7029
        %v7031 = vpop.f32.mrf.mxu0
        %v7032 = vpop.f32.mrf.mxu0
        %v7033 = vadd.f32 %v6768, %v7032
        %v7034 = vpop.f32.mrf.mxu0
        %7035 = vmatprep.mubr.bf16.mxu0 %v6965
        %7036 = vmatmul.mubr.bf16.gmra.mxu0 %v6865
        %v7037 = vpop.f32.mrf.mxu0
        %v7038 = vadd.f32 %v6773, %v7037
        %v7039 = vpop.f32.mrf.mxu0
        %v7040 = vpop.f32.mrf.mxu0
        %v7041 = vadd.f32 %v6776, %v7040
        %v7042 = vpop.f32.mrf.mxu0
        %7043 = vmatprep.mubr.bf16.mxu0 %v6968
        %7044 = vmatmul.mubr.bf16.gmra.mxu0 %v6867
        %v7045 = vpop.f32.mrf.mxu0
        %v7046 = vadd.f32 %v6781, %v7045
        %v7047 = vpop.f32.mrf.mxu0
        %v7048 = vpop.f32.mrf.mxu0
        %v7049 = vadd.f32 %v6784, %v7048
        %v7050 = vpop.f32.mrf.mxu0
        %7051 = vmatprep.mubr.bf16.mxu0 %v6971
        %7052 = vmatmul.mubr.bf16.gmra.mxu0 %v6869
        %v7053 = vpop.f32.mrf.mxu0
        %v7054 = vadd.f32 %v6789, %v7053
        %v7055 = vpop.f32.mrf.mxu0
        %v7056 = vpop.f32.mrf.mxu0
        %v7057 = vadd.f32 %v6792, %v7056
        %v7058 = vpop.f32.mrf.mxu0
        %7059 = vmatprep.mubr.bf16.mxu0 %v6974
        %7060 = vmatmul.mubr.bf16.gmra.mxu0 %v6871
        %v7061 = vpop.f32.mrf.mxu0
        %v7062 = vadd.f32 %v6797, %v7061
        %v7063 = vpop.f32.mrf.mxu0
        %v7064 = vpop.f32.mrf.mxu0
        %v7065 = vadd.f32 %v6800, %v7064
        %v7066 = vpop.f32.mrf.mxu0
        %7067 = vmatprep.mubr.bf16.mxu0 %v6977
        %7068 = vmatmul.mubr.bf16.gmra.mxu0 %v6873
        %v7069 = vpop.f32.mrf.mxu0
        %v7070 = vadd.f32 %v6805, %v7069
        %v7071 = vpop.f32.mrf.mxu0
        %v7072 = vpop.f32.mrf.mxu0
        %v7073 = vadd.f32 %v6808, %v7072
        %v7074 = vpop.f32.mrf.mxu0
        %7075 = vdwg.mxu0
        %v7076 = vld [vmem:[%s4001] sm:$0xff]
        %v7077 = vld [vmem:[%s4001 + $0x8] sm:$0xff]
        %v7078 = vld [vmem:[%s4001 + $0x10] sm:$0xff]
        %v7079 = vld [vmem:[%s4001 + $0x18] sm:$0xff]
        %v7080 = vld [vmem:[%s4001 + $0x20] sm:$0xff]
        %v7081 = vld [vmem:[%s4001 + $0x28] sm:$0xff]
        %v7082 = vld [vmem:[%s4001 + $0x30] sm:$0xff]
        %v7083 = vld [vmem:[%s4001 + $0x38] sm:$0xff]
        %v7084 = vld [vmem:[%s4001 + $0x40] sm:$0xff]
        %v7085 = vld [vmem:[%s4001 + $0x48] sm:$0xff]
        %v7086 = vld [vmem:[%s4001 + $0x50] sm:$0xff]
        %v7087 = vld [vmem:[%s4001 + $0x58] sm:$0xff]
        %v7088 = vld [vmem:[%s4001 + $0x60] sm:$0xff]
        %v7089 = vld [vmem:[%s4001 + $0x68] sm:$0xff]
        %v7090 = vld [vmem:[%s4001 + $0x70] sm:$0xff]
        %v7091 = vld [vmem:[%s4001 + $0x78] sm:$0xff]
        %s7092 = scalar_lea.vmem %s2, 480
        %v7093 = vld [vmem:[%s7092] sm:$0xf]
        %v7094 = vld [vmem:[%s7092 + $0x4] sm:$0xf]
        %v7095 = vld [vmem:[%s7092 + $0x8] sm:$0xf]
        %v7096 = vld [vmem:[%s7092 + $0xc] sm:$0xf]
        %v7097 = vld [vmem:[%s7092 + $0x10] sm:$0xf]
        %v7098 = vld [vmem:[%s7092 + $0x14] sm:$0xf]
        %v7099 = vld [vmem:[%s7092 + $0x18] sm:$0xf]
        %v7100 = vld [vmem:[%s7092 + $0x1c] sm:$0xf]
        %v7101 = vld [vmem:[%s7092 + $0x20] sm:$0xf]
        %v7102 = vld [vmem:[%s7092 + $0x24] sm:$0xf]
        %v7103 = vld [vmem:[%s7092 + $0x28] sm:$0xf]
        %v7104 = vld [vmem:[%s7092 + $0x2c] sm:$0xf]
        %v7105 = vld [vmem:[%s7092 + $0x30] sm:$0xf]
        %v7106 = vld [vmem:[%s7092 + $0x34] sm:$0xf]
        %v7107 = vld [vmem:[%s7092 + $0x38] sm:$0xf]
        %v7108 = vld [vmem:[%s7092 + $0x3c] sm:$0xf]
        %v7109 = vld [vmem:[%s7092 + $0x40] sm:$0xf]
        %v7110 = vld [vmem:[%s7092 + $0x44] sm:$0xf]
        %v7111 = vld [vmem:[%s7092 + $0x48] sm:$0xf]
        %v7112 = vld [vmem:[%s7092 + $0x4c] sm:$0xf]
        %v7113 = vld [vmem:[%s7092 + $0x50] sm:$0xf]
        %v7114 = vld [vmem:[%s7092 + $0x54] sm:$0xf]
        %v7115 = vld [vmem:[%s7092 + $0x58] sm:$0xf]
        %v7116 = vld [vmem:[%s7092 + $0x5c] sm:$0xf]
        %v7133 = vunpack.c.l.b16 %v7076
        %v7134 = vunpack.c.h.b16 %v7076
        %v7135 = vunpack.c.l.b16 %v7077
        %v7136 = vunpack.c.h.b16 %v7077
        %v7137 = vunpack.c.l.b16 %v7078
        %v7138 = vunpack.c.h.b16 %v7078
        %v7139 = vunpack.c.l.b16 %v7079
        %v7140 = vunpack.c.h.b16 %v7079
        %v7141 = vunpack.c.l.b16 %v7080
        %v7142 = vunpack.c.h.b16 %v7080
        %v7143 = vunpack.c.l.b16 %v7081
        %v7144 = vunpack.c.h.b16 %v7081
        %v7145 = vunpack.c.l.b16 %v7082
        %v7146 = vunpack.c.h.b16 %v7082
        %v7147 = vunpack.c.l.b16 %v7083
        %v7148 = vunpack.c.h.b16 %v7083
        %v7149 = vunpack.c.l.b16 %v7084
        %v7150 = vunpack.c.h.b16 %v7084
        %v7151 = vunpack.c.l.b16 %v7085
        %v7152 = vunpack.c.h.b16 %v7085
        %v7153 = vunpack.c.l.b16 %v7086
        %v7154 = vunpack.c.h.b16 %v7086
        %v7155 = vunpack.c.l.b16 %v7087
        %v7156 = vunpack.c.h.b16 %v7087
        %v7157 = vunpack.c.l.b16 %v7088
        %v7158 = vunpack.c.h.b16 %v7088
        %v7159 = vunpack.c.l.b16 %v7089
        %v7160 = vunpack.c.h.b16 %v7089
        %v7161 = vunpack.c.l.b16 %v7090
        %v7162 = vunpack.c.h.b16 %v7090
        %v7163 = vunpack.c.l.b16 %v7091
        %v7164 = vunpack.c.h.b16 %v7091
        %v7165 = vpack.c.b16 %v7135, %v7133
        %v7166 = vpack.c.b16 %v7136, %v7134
        %v7167 = vpack.c.b16 %v7139, %v7137
        %v7168 = vpack.c.b16 %v7140, %v7138
        %v7169 = vpack.c.b16 %v7143, %v7141
        %v7170 = vpack.c.b16 %v7144, %v7142
        %v7171 = vpack.c.b16 %v7147, %v7145
        %v7172 = vpack.c.b16 %v7148, %v7146
        %v7173 = vpack.c.b16 %v7151, %v7149
        %v7174 = vpack.c.b16 %v7152, %v7150
        %v7175 = vpack.c.b16 %v7155, %v7153
        %v7176 = vpack.c.b16 %v7156, %v7154
        %v7177 = vpack.c.b16 %v7159, %v7157
        %v7178 = vpack.c.b16 %v7160, %v7158
        %v7179 = vpack.c.b16 %v7163, %v7161
        %v7180 = vpack.c.b16 %v7164, %v7162
        %v7213 = vunpack.c.l.b16 %v7093
        %v7214 = vunpack.c.l.b16 %v7094
        %v7215 = vunpack.c.l.b16 %v7095
        %v7216 = vunpack.c.l.b16 %v7096
        %v7217 = vunpack.c.l.b16 %v7097
        %v7218 = vunpack.c.l.b16 %v7098
        %v7219 = vunpack.c.l.b16 %v7099
        %v7220 = vunpack.c.l.b16 %v7100
        %v7221 = vunpack.c.l.b16 %v7101
        %v7222 = vunpack.c.l.b16 %v7102
        %v7223 = vunpack.c.l.b16 %v7103
        %v7224 = vunpack.c.l.b16 %v7104
        %v7225 = vunpack.c.l.b16 %v7105
        %v7226 = vunpack.c.l.b16 %v7106
        %v7227 = vunpack.c.l.b16 %v7107
        %v7228 = vunpack.c.l.b16 %v7108
        %v7229 = vunpack.c.l.b16 %v7109
        %v7230 = vunpack.c.l.b16 %v7110
        %v7231 = vunpack.c.l.b16 %v7111
        %v7232 = vunpack.c.l.b16 %v7112
        %v7233 = vunpack.c.l.b16 %v7113
        %v7234 = vunpack.c.l.b16 %v7114
        %v7235 = vunpack.c.l.b16 %v7115
        %v7236 = vunpack.c.l.b16 %v7116
        %v7237 = vpack.c.b16 %v7214, %v7213
        %v7238 = vpack.c.b16 %v7216, %v7215
        %v7239 = vpack.c.b16 %v7218, %v7217
        %v7240 = vpack.c.b16 %v7220, %v7219
        %v7241 = vpack.c.b16 %v7222, %v7221
        %v7242 = vpack.c.b16 %v7224, %v7223
        %v7243 = vpack.c.b16 %v7226, %v7225
        %v7244 = vpack.c.b16 %v7228, %v7227
        %v7245 = vpack.c.b16 %v7230, %v7229
        %v7246 = vpack.c.b16 %v7232, %v7231
        %v7247 = vpack.c.b16 %v7234, %v7233
        %v7248 = vpack.c.b16 %v7236, %v7235
        %v7262 = vsel %vm3225, %v7166, 0
        %v7265 = vsel %vm3225, %v7168, 0
        %v7268 = vsel %vm3225, %v7170, 0
        %v7271 = vsel %vm3225, %v7172, 0
        %v7274 = vsel %vm3225, %v7174, 0
        %v7277 = vsel %vm3225, %v7176, 0
        %v7280 = vsel %vm3225, %v7178, 0
        %v7283 = vsel %vm3225, %v7180, 0
        %7285 = vmatprep.subr.bf16.mxu0 0
        %7286 = vmatpush1.bf16.msra.mxu0 %v7244
        %7287 = vmatprep.subr.bf16.mxu0 0
        %7288 = vmatpush1.bf16.msra.mxu0 %v7243
        %7289 = vmatprep.subr.bf16.mxu0 0
        %7290 = vmatpush1.bf16.msra.mxu0 %v7242
        %7291 = vmatprep.subr.bf16.mxu0 0
        %7292 = vmatpush1.bf16.msra.mxu0 %v7241
        %7293 = vmatprep.subr.bf16.mxu0 0
        %7294 = vmatpush1.bf16.msra.mxu0 %v7240
        %7295 = vmatprep.subr.bf16.mxu0 0
        %7296 = vmatpush1.bf16.msra.mxu0 %v7239
        %7297 = vmatprep.subr.bf16.mxu0 0
        %7298 = vmatpush1.bf16.msra.mxu0 %v7238
        %7299 = vmatprep.subr.bf16.mxu0 0
        %7300 = vmatpush1.bf16.msra.mxu0 %v7237
        %7301 = vmatprep.subr.bf16.mxu0 0
        %7302 = vmatpush2.bf16.msra.mxu0 0
        %7303 = vmatprep.subr.bf16.mxu0 0
        %7304 = vmatpush2.bf16.msra.mxu0 0
        %7305 = vmatprep.subr.bf16.mxu0 0
        %7306 = vmatpush2.bf16.msra.mxu0 0
        %7307 = vmatprep.subr.bf16.mxu0 0
        %7308 = vmatpush2.bf16.msra.mxu0 0
        %7309 = vmatprep.subr.bf16.mxu0 0
        %7310 = vmatpush2.bf16.msra.mxu0 %v7248
        %7311 = vmatprep.subr.bf16.mxu0 0
        %7312 = vmatpush2.bf16.msra.mxu0 %v7247
        %7313 = vmatprep.subr.bf16.mxu0 0
        %7314 = vmatpush2.bf16.msra.mxu0 %v7246
        %7315 = vmatprep.subr.bf16.mxu0 0
        %7316 = vmatpush2.bf16.msra.mxu0 %v7245
        %7317 = vmatprep.mubr.bf16.mxu0 %v7262
        %7318 = vmatmul.mubr.bf16.gmra.mxu0 %v7165
        %v7319 = vpop.f32.mrf.mxu0
        %v7320 = vadd.f32 0.0, %v7319
        %v7321 = vpop.f32.mrf.mxu0
        %v7322 = vpop.f32.mrf.mxu0
        %v7323 = vadd.f32 0.0, %v7322
        %v7324 = vpop.f32.mrf.mxu0
        %7325 = vmatprep.mubr.bf16.mxu0 %v7265
        %7326 = vmatmul.mubr.bf16.gmra.mxu0 %v7167
        %v7327 = vpop.f32.mrf.mxu0
        %v7328 = vadd.f32 0.0, %v7327
        %v7329 = vpop.f32.mrf.mxu0
        %v7330 = vpop.f32.mrf.mxu0
        %v7331 = vadd.f32 0.0, %v7330
        %v7332 = vpop.f32.mrf.mxu0
        %7333 = vmatprep.mubr.bf16.mxu0 %v7268
        %7334 = vmatmul.mubr.bf16.gmra.mxu0 %v7169
        %v7335 = vpop.f32.mrf.mxu0
        %v7336 = vadd.f32 0.0, %v7335
        %v7337 = vpop.f32.mrf.mxu0
        %v7338 = vpop.f32.mrf.mxu0
        %v7339 = vadd.f32 0.0, %v7338
        %v7340 = vpop.f32.mrf.mxu0
        %7341 = vmatprep.mubr.bf16.mxu0 %v7271
        %7342 = vmatmul.mubr.bf16.gmra.mxu0 %v7171
        %v7343 = vpop.f32.mrf.mxu0
        %v7344 = vadd.f32 0.0, %v7343
        %v7345 = vpop.f32.mrf.mxu0
        %v7346 = vpop.f32.mrf.mxu0
        %v7347 = vadd.f32 0.0, %v7346
        %v7348 = vpop.f32.mrf.mxu0
        %7349 = vmatprep.mubr.bf16.mxu0 %v7274
        %7350 = vmatmul.mubr.bf16.gmra.mxu0 %v7173
        %v7351 = vpop.f32.mrf.mxu0
        %v7352 = vadd.f32 0.0, %v7351
        %v7353 = vpop.f32.mrf.mxu0
        %v7354 = vpop.f32.mrf.mxu0
        %v7355 = vadd.f32 0.0, %v7354
        %v7356 = vpop.f32.mrf.mxu0
        %7357 = vmatprep.mubr.bf16.mxu0 %v7277
        %7358 = vmatmul.mubr.bf16.gmra.mxu0 %v7175
        %v7359 = vpop.f32.mrf.mxu0
        %v7360 = vadd.f32 0.0, %v7359
        %v7361 = vpop.f32.mrf.mxu0
        %v7362 = vpop.f32.mrf.mxu0
        %v7363 = vadd.f32 0.0, %v7362
        %v7364 = vpop.f32.mrf.mxu0
        %7365 = vmatprep.mubr.bf16.mxu0 %v7280
        %7366 = vmatmul.mubr.bf16.gmra.mxu0 %v7177
        %v7367 = vpop.f32.mrf.mxu0
        %v7368 = vadd.f32 0.0, %v7367
        %v7369 = vpop.f32.mrf.mxu0
        %v7370 = vpop.f32.mrf.mxu0
        %v7371 = vadd.f32 0.0, %v7370
        %v7372 = vpop.f32.mrf.mxu0
        %7373 = vmatprep.mubr.bf16.mxu0 %v7283
        %7374 = vmatmul.mubr.bf16.gmra.mxu0 %v7179
        %v7375 = vpop.f32.mrf.mxu0
        %v7376 = vadd.f32 0.0, %v7375
        %v7377 = vpop.f32.mrf.mxu0
        %v7378 = vpop.f32.mrf.mxu0
        %v7379 = vadd.f32 0.0, %v7378
        %v7380 = vpop.f32.mrf.mxu0
        %7381 = vdwg.mxu0
        %v7382 = vadd.f32 %v7014, %v7320
        %v7383 = vadd.f32 %v7017, %v7323
        %v7384 = vadd.f32 %v7022, %v7328
        %v7385 = vadd.f32 %v7025, %v7331
        %v7386 = vadd.f32 %v7030, %v7336
        %v7387 = vadd.f32 %v7033, %v7339
        %v7388 = vadd.f32 %v7038, %v7344
        %v7389 = vadd.f32 %v7041, %v7347
        %v7390 = vadd.f32 %v7046, %v7352
        %v7391 = vadd.f32 %v7049, %v7355
        %v7392 = vadd.f32 %v7054, %v7360
        %v7393 = vadd.f32 %v7057, %v7363
        %v7394 = vadd.f32 %v7062, %v7368
        %v7395 = vadd.f32 %v7065, %v7371
        %v7396 = vadd.f32 %v7070, %v7376
        %v7397 = vadd.f32 %v7073, %v7379
        %v7398 = vlaneseq
        %v7399 = vshrl.u32 %v7398, 7
        %v7400 = vsub.s32 2, %v7399
        %v7401 = vrot.slane %v4381, %v7400
        %v7402 = vmul.f32 %v7382, %v7401
        %v7403 = vmul.f32 %v7383, %v7401
        %v7404 = vmul.f32 %v7384, %v7401
        %v7405 = vmul.f32 %v7385, %v7401
        %v7406 = vmul.f32 %v7386, %v7401
        %v7407 = vmul.f32 %v7387, %v7401
        %v7408 = vmul.f32 %v7388, %v7401
        %v7409 = vmul.f32 %v7389, %v7401
        %v7410 = vmul.f32 %v7390, %v7401
        %v7411 = vmul.f32 %v7391, %v7401
        %v7412 = vmul.f32 %v7392, %v7401
        %v7413 = vmul.f32 %v7393, %v7401
        %v7414 = vmul.f32 %v7394, %v7401
        %v7415 = vmul.f32 %v7395, %v7401
        %v7416 = vmul.f32 %v7396, %v7401
        %v7417 = vmul.f32 %v7397, %v7401
        %v7418 = vlaneseq
        %v7419 = vshrl.u32 %v7418, 7
        %v7420 = vsub.s32 3, %v7419
        %v7421 = vrot.slane %v4381, %v7420
        %v7422 = vadd.f32 %v7402, %v7421
        %v7423 = vadd.f32 %v7403, %v7421
        %v7424 = vadd.f32 %v7404, %v7421
        %v7425 = vadd.f32 %v7405, %v7421
        %v7426 = vadd.f32 %v7406, %v7421
        %v7427 = vadd.f32 %v7407, %v7421
        %v7428 = vadd.f32 %v7408, %v7421
        %v7429 = vadd.f32 %v7409, %v7421
        %v7430 = vadd.f32 %v7410, %v7421
        %v7431 = vadd.f32 %v7411, %v7421
        %v7432 = vadd.f32 %v7412, %v7421
        %v7433 = vadd.f32 %v7413, %v7421
        %v7434 = vadd.f32 %v7414, %v7421
        %v7435 = vadd.f32 %v7415, %v7421
        %v7436 = vadd.f32 %v7416, %v7421
        %v7437 = vadd.f32 %v7417, %v7421
        %v7438 = vmax.f32 %v7422, 0.0
        %v7439 = vmax.f32 %v7423, 0.0
        %v7440 = vmax.f32 %v7424, 0.0
        %v7441 = vmax.f32 %v7425, 0.0
        %v7442 = vmax.f32 %v7426, 0.0
        %v7443 = vmax.f32 %v7427, 0.0
        %v7444 = vmax.f32 %v7428, 0.0
        %v7445 = vmax.f32 %v7429, 0.0
        %v7446 = vmax.f32 %v7430, 0.0
        %v7447 = vmax.f32 %v7431, 0.0
        %v7448 = vmax.f32 %v7432, 0.0
        %v7449 = vmax.f32 %v7433, 0.0
        %v7450 = vmax.f32 %v7434, 0.0
        %v7451 = vmax.f32 %v7435, 0.0
        %v7452 = vmax.f32 %v7436, 0.0
        %v7453 = vmax.f32 %v7437, 0.0
        %7470 = vrot.lane.b32.xlu0 %v7438, 64
        %v7471 = vpop.permute.xlu0 %7470
        %7472 = vrot.lane.b32.xlu0 %v7439, 64
        %v7473 = vpop.permute.xlu0 %7472
        %7474 = vrot.lane.b32.xlu0 %v7440, 64
        %v7475 = vpop.permute.xlu0 %7474
        %7476 = vrot.lane.b32.xlu0 %v7441, 64
        %v7477 = vpop.permute.xlu0 %7476
        %7478 = vrot.lane.b32.xlu0 %v7442, 64
        %v7479 = vpop.permute.xlu0 %7478
        %7480 = vrot.lane.b32.xlu0 %v7443, 64
        %v7481 = vpop.permute.xlu0 %7480
        %7482 = vrot.lane.b32.xlu0 %v7444, 64
        %v7483 = vpop.permute.xlu0 %7482
        %7484 = vrot.lane.b32.xlu0 %v7445, 64
        %v7485 = vpop.permute.xlu0 %7484
        %7486 = vrot.lane.b32.xlu0 %v7446, 64
        %v7487 = vpop.permute.xlu0 %7486
        %7488 = vrot.lane.b32.xlu0 %v7447, 64
        %v7489 = vpop.permute.xlu0 %7488
        %7490 = vrot.lane.b32.xlu0 %v7448, 64
        %v7491 = vpop.permute.xlu0 %7490
        %7492 = vrot.lane.b32.xlu0 %v7449, 64
        %v7493 = vpop.permute.xlu0 %7492
        %7494 = vrot.lane.b32.xlu0 %v7450, 64
        %v7495 = vpop.permute.xlu0 %7494
        %7496 = vrot.lane.b32.xlu0 %v7451, 64
        %v7497 = vpop.permute.xlu0 %7496
        %7498 = vrot.lane.b32.xlu0 %v7452, 64
        %v7499 = vpop.permute.xlu0 %7498
        %7500 = vrot.lane.b32.xlu0 %v7453, 64
        %v7501 = vpop.permute.xlu0 %7500
        %v7518 = vsel %vm3225, %v4364, %v7471
        %v7519 = vsel %vm3225, %v4365, %v7473
        %v7520 = vsel %vm3225, %v4366, %v7475
        %v7521 = vsel %vm3225, %v4367, %v7477
        %v7522 = vsel %vm3225, %v4368, %v7479
        %v7523 = vsel %vm3225, %v4369, %v7481
        %v7524 = vsel %vm3225, %v4370, %v7483
        %v7525 = vsel %vm3225, %v4371, %v7485
        %v7526 = vsel %vm3225, %v4372, %v7487
        %v7527 = vsel %vm3225, %v4373, %v7489
        %v7528 = vsel %vm3225, %v4374, %v7491
        %v7529 = vsel %vm3225, %v4375, %v7493
        %v7530 = vsel %vm3225, %v4376, %v7495
        %v7531 = vsel %vm3225, %v4377, %v7497
        %v7532 = vsel %vm3225, %v4378, %v7499
        %v7533 = vsel %vm3225, %v4379, %v7501
        %7534 = vst [vmem:[%s437] sm:$0xff] %v7518
        %7535 = vst [vmem:[%s437 + $0x8] sm:$0xff] %v7519
        %7536 = vst [vmem:[%s437 + $0x10] sm:$0xff] %v7520
        %7537 = vst [vmem:[%s437 + $0x18] sm:$0xff] %v7521
        %7538 = vst [vmem:[%s437 + $0x20] sm:$0xff] %v7522
        %7539 = vst [vmem:[%s437 + $0x28] sm:$0xff] %v7523
        %7540 = vst [vmem:[%s437 + $0x30] sm:$0xff] %v7524
        %7541 = vst [vmem:[%s437 + $0x38] sm:$0xff] %v7525
        %7542 = vst [vmem:[%s437 + $0x40] sm:$0xff] %v7526
        %7543 = vst [vmem:[%s437 + $0x48] sm:$0xff] %v7527
        %7544 = vst [vmem:[%s437 + $0x50] sm:$0xff] %v7528
        %7545 = vst [vmem:[%s437 + $0x58] sm:$0xff] %v7529
        %7546 = vst [vmem:[%s437 + $0x60] sm:$0xff] %v7530
        %7547 = vst [vmem:[%s437 + $0x68] sm:$0xff] %v7531
        %7548 = vst [vmem:[%s437 + $0x70] sm:$0xff] %v7532
        %7549 = vst [vmem:[%s437 + $0x78] sm:$0xff] %v7533
        %s7550 = sand.u32 %s131, 1
        %s7551 = scalar_lea.sflag [#allocation5], %s7550
        %s7552 = sand.u32 %s131, 1
        %s7553 = smul.addr %s7552, 128
        %s7554 = scalar_lea.vmem [#allocation4], %s7553
        // Predicated region
        $region78: #{ccunet_forward.1} parent=72 // pred_check
          %p7555 = pneg %p141
        $region79: #{ccunet_forward.1} parent=72 // pred_check_branch
          %7557 = sbr.rel (%p7555) target = $region81
        $region80: #{ccunet_forward.1} parent=72 // pred_region
          %s7558 = smul.u32 8, %s23
          %s7560 = ssub.s32 2048, 2048
          %7561 = vsyncadd %s7551, %s7560
          %s7562 = smul.addr %s7558, 2
          %s7563 = smul.addr %s22, 32
          %s7564 = sadd.s32 %s7562, %s7563
          %s7565 = smul.addr %s7564, 128
          %s7566 = scalar_lea.hbm %s4, %s7565
          %s7567 = sshll.u32 %s7554, 4
          %s7568 = int_to_ptr.vmem [resolvable:$true] %s7567
          %7573 = dma.vmem_to_hbm [thread:$0]  %s7568, 2048, %s7566, %s7551, 128, 128, 8
        $region81: #{ccunet_forward.1} parent=72 // pred_fallthru
          _
      $region73: #{ccunet_forward.1} parent=5 // pred_fallthru
        _
      %p7574 = scmp.le.s32.totalorder 2, %s13
      // Predicated region
      $region82: #{ccunet_forward.1} parent=5 // pred_check
        %p7575 = pneg %p7574
      $region83: #{ccunet_forward.1} parent=5 // pred_check_branch
        %7577 = sbr.rel (%p7575) target = $region85
      $region84: #{ccunet_forward.1} parent=5 // pred_region
        %s7578 = ssub.s32 %s13, 2
        // Predicated region
        $region86: #{ccunet_forward.1} parent=84 // pred_check
          %p7579 = pneg %p147
        $region87: #{ccunet_forward.1} parent=84 // pred_check_branch
          %7581 = sbr.rel (%p7579) target = $region89
        $region88: #{ccunet_forward.1} parent=84 // pred_region
          %s7582 = sand.u32 %s132, 1
          %s7583 = scalar_lea.sflag [#allocation5], %s7582
          %s7584 = sand.u32 %s132, 1
          %s7585 = smul.addr %s7584, 128
          %s7586 = scalar_lea.vmem [#allocation4], %s7585
          %7587 = dma.done %s7583, 2048
        $region89: #{ccunet_forward.1} parent=84 // pred_fallthru
          _
      $region85: #{ccunet_forward.1} parent=5 // pred_fallthru
        _
    $region6: #{ccunet_forward.1} parent=1 // loop_footer
      %s17 = sadd.s32 1, %s13
    $region7: #{ccunet_forward.1} parent=1 // loop_footer_branch
      %12 = sbr.rel target = $region3
    $region8: #{ccunet_forward.1} parent=1 // loop_exit
      _
    %7588 = vsyncpa [#allocation5], 1
    %s7589 = scalar_lea.sflag [#allocation5], 1
    %7590 = vsyncpa %s7589, 1

</llo_original>
